<compile_context>
chip_gen: v7x
topology: tpu7x:2x2x1
jax: 0.10.0
libtpu: 0.0.40
codegen_flags: <defaults>
</compile_context>

<pallas_src>
import functools
import math

import jax
import jax.numpy as jnp
from jax import lax
from jax.experimental import pallas as pl
from jax.experimental.pallas import tpu as pltpu

KERNEL_MUL = 2.0
KERNEL_NUM = 5

# ----------------------------------------------------------------------------
# Model configuration (small synthetic AlexNet-style backbone stand-in).
# ----------------------------------------------------------------------------
CIN, KSIZE, HIN = 4, 3, 16
CONV_OUT = 8
HIDDEN = 64
FC8_DIM = 1000
BOTTLENECK_DIM = 32
N_LABELS = 8

HO = HIN - KSIZE + 1                     # 14
P_REAL = HO * HO                         # 196 spatial positions per sample
FEAT_DIM = P_REAL * CONV_OUT             # 1568 (flattened conv features)
K_CONV = KSIZE * KSIZE * CIN             # 36

LANE = 128


def _rup(x, m=LANE):
    return ((x + m - 1) // m) * m


K_CONV_PAD = _rup(K_CONV)                # 36   -> 128
P_PAD = _rup(P_REAL)                     # 196  -> 256
HIDDEN_PAD = _rup(HIDDEN)                # 64   -> 128
FC8_PAD = _rup(FC8_DIM)                  # 1000 -> 1024
BOTTLENECK_PAD = _rup(BOTTLENECK_DIM)    # 32   -> 128
N_LABELS_PAD = _rup(N_LABELS)            # 8    -> 128


# ---------------------------------------------------------------------------
# Fused Pallas kernel: conv + fc6 + fc7 + fc8 + bottleneck + classifier + MK-MMD
# ---------------------------------------------------------------------------
def _dan_fused_kernel(pt_ref, cwt_ref, cb_ref,
                      w6_ref, b6_ref, w7_ref, b7_ref, w8_ref, b8_ref,
                      wb_ref, bb_ref, wc_ref, bc_ref,
                      cls_ref, mmd_ref, *,
                      n2, batch, conv_out, kernel_mul, kernel_num):
    """pt_ref : (n2, K_CONV_PAD, P_PAD) bf16  — per-sample patch matrices (K x positions)
       cls_ref: (n2, N_LABELS_PAD) f32        — classifier output (padded cols are zero)
       mmd_ref: (1, LANE) f32                 — broadcast MK-MMD loss (read [0, 0] in glue)
    """
    f32 = jnp.float32
    bf16 = jnp.bfloat16

    def lin(x, w_ref, b_ref, relu):
        # bf16 MXU operands, f32 accumulation; bias / ReLU stay f32 on the VPU.
        y = jnp.dot(x.astype(bf16), w_ref[...], preferred_element_type=f32)
        y = y + b_ref[...]
        return jnp.maximum(y, 0.0) if relu else y

    # ---- conv (channel-major) fused with fc6: no flatten / reshape anywhere ----
    cwt = cwt_ref[...]                       # (Cout, K_CONV_PAD) bf16
    cb = cb_ref[...]                         # (Cout, 1)          f32
    b6 = b6_ref[...]                         # (1, HIDDEN_PAD)    f32
    h6_rows = []
    for b in range(n2):                      # static unroll, n2 = 2*batch
        a = jnp.dot(cwt, pt_ref[b], preferred_element_type=f32)        # (Cout, P_PAD)
        a = jnp.maximum(a + cb, 0.0)                                   # conv + ReLU
        hb = b6
        for c in range(conv_out):            # fc6 = sum_c act_c @ W6[c]
            hb = hb + jnp.dot(a[c:c + 1, :].astype(bf16), w6_ref[c],
                              preferred_element_type=f32)              # (1, HIDDEN_PAD)
        h6_rows.append(jnp.maximum(hb, 0.0))                           # fc6 + ReLU
    h6 = jnp.concatenate(h6_rows, axis=0)                              # (n2, HIDDEN_PAD)

    h7 = lin(h6, w7_ref, b7_ref, True)       # fc7 + ReLU
    fc8 = lin(h7, w8_ref, b8_ref, False)     # fc8 (backbone output, 1000 real cols)
    bneck = lin(fc8, wb_ref, bb_ref, True)   # bottleneck Linear + ReLU
    cls = lin(bneck, wc_ref, bc_ref, False)  # last_classifier Linear
    cls_ref[...] = cls.astype(cls_ref.dtype)

    # ---- MK-MMD (3 terms), all math in f32 ------------------------------------
    n = n2
    s_row = jnp.where(lax.broadcasted_iota(jnp.int32, (n, 1), 0) < batch,
                      1.0, -1.0).astype(f32)
    s_col = jnp.where(lax.broadcasted_iota(jnp.int32, (1, n), 1) < batch,
                      1.0, -1.0).astype(f32)
    inv_pairs = 1.0 / float(n * n - n)
    inv_b2 = 1.0 / float(batch * batch)

    def mk_mmd(total):
        d = total.shape[1]
        # Gram matrix + row squared-norms (no eye mask, no (n, n, D) temp).
        gram = lax.dot_general(total, total, (((1,), (1,)), ((), ())),
                               preferred_element_type=f32)             # (n, n)
        tt = total * total
        sq_col = jnp.sum(tt, axis=1, keepdims=True)                    # (n, 1)
        sq_row = lax.dot_general(jnp.ones((1, d), f32), tt,
                                 (((1,), (1,)), ((), ())),
                                 preferred_element_type=f32)           # (1, n)
        l2 = jnp.maximum(sq_col + sq_row - 2.0 * gram, 0.0)
        # DAN bandwidth heuristic, with a floor so a degenerate batch can't NaN.
        bw = jnp.sum(l2, axis=(0, 1), keepdims=True) * inv_pairs       # (1, 1)
        bw = jnp.maximum(bw, 1e-12)
        bw = bw * (1.0 / (kernel_mul ** (kernel_num // 2)))
        inv_bw = pl.reciprocal(bw * (kernel_mul ** (kernel_num - 1)), approx=True)
        if kernel_mul == 2.0:
            # One EUP transcendental + repeated squaring on the VALU.
            e = jnp.exp(-l2 * inv_bw)
            acc, cur = e, e
            for _ in range(kernel_num - 1):
                cur = cur * cur
                acc = acc + cur
        else:
            acc = jnp.zeros_like(l2)
            for i in range(kernel_num):
                acc = acc + jnp.exp(-l2 * inv_bw * (kernel_mul ** (kernel_num - 1 - i)))
        # sum(sign_i * sign_j * K_ij) via factored (+1/-1) vectors: lane reduce,
        # then sublane reduce — no materialized (n, n) sign matrix.
        per_row = jnp.sum(acc * s_col, axis=1, keepdims=True)          # (n, 1)
        return jnp.sum(per_row * s_row, axis=(0, 1), keepdims=True) * inv_b2

    mmd = mk_mmd(fc8) + mk_mmd(bneck) + mk_mmd(cls)
    mmd_ref[...] = jnp.broadcast_to(mmd, mmd_ref.shape)


def dan_fused(pt, params, *, batch):
    n2 = pt.shape[0]
    kernel = functools.partial(_dan_fused_kernel, n2=n2, batch=batch,
                               conv_out=CONV_OUT, kernel_mul=KERNEL_MUL,
                               kernel_num=KERNEL_NUM)
    return pl.pallas_call(
        kernel,
        out_shape=(jax.ShapeDtypeStruct((n2, N_LABELS_PAD), jnp.float32),
                   jax.ShapeDtypeStruct((1, LANE), jnp.float32)),
        in_specs=[pl.BlockSpec(memory_space=pltpu.MemorySpace.VMEM)] * 13,
        out_specs=(pl.BlockSpec(memory_space=pltpu.MemorySpace.VMEM),
                   pl.BlockSpec(memory_space=pltpu.MemorySpace.VMEM)),
    )(pt,
      params["conv_wT"], params["conv_b"],
      params["fc6_w"], params["fc6_b"],
      params["fc7_w"], params["fc7_b"],
      params["fc8_w"], params["fc8_b"],
      params["bneck_w"], params["bneck_b"],
      params["cls_w"], params["cls_b"])


# ---------------------------------------------------------------------------
# Glue: per-sample patch-matrix extraction (cheap XLA slicing), full forward
# ---------------------------------------------------------------------------
def dan_forward(source_data, target_data, params):
    """Mirrors DANModel.forward(sourceData, targetData, mkmmd_loss)."""
    bsz = source_data.shape[0]
    # Batch source + target through the shared backbone in one pass (2B rows).
    x = jnp.concatenate([source_data, target_data], axis=0).astype(jnp.float32)
    n2 = x.shape[0]                                                 # (2B, C, H, W)
    # pt[b, k, p] = x[b, cin, i+ki, j+kj] with k=(ki,kj,cin), p=(i,j)
    cols = [x[:, :, i:i + HO, j:j + HO] for i in range(KSIZE) for j in range(KSIZE)]
    pt = jnp.concatenate(cols, axis=1).reshape(n2, K_CONV, P_REAL)
    pt = jnp.pad(pt, ((0, 0), (0, K_CONV_PAD - K_CONV), (0, P_PAD - P_REAL)))
    pt = pt.astype(jnp.bfloat16)

    cls_pad, mmd = dan_fused(pt, params, batch=bsz)
    source_out = cls_pad[:bsz, :N_LABELS]                           # real label columns
    return source_out, mmd[0, 0]


# ---------------------------------------------------------------------------
# Deterministic parameter init (synthetic; zero-padded lane-dense, weights bf16)
# ---------------------------------------------------------------------------
def init_params(key):
    ks = jax.random.split(key, 6)
    params = {}

    def dense(k, din, dout, pad_in, pad_out):
        wk, bk = jax.random.split(k)
        s = 1.0 / math.sqrt(din)
        w = jax.random.normal(wk, (din, dout), jnp.float32) * s
        b = jax.random.normal(bk, (1, dout), jnp.float32) * s
        w = jnp.pad(w, ((0, pad_in - din), (0, pad_out - dout))).astype(jnp.bfloat16)
        b = jnp.pad(b, ((0, 0), (0, pad_out - dout)))
        return w, b

    # conv weight stored transposed (Cout, K) for the channel-major conv matmul.
    wk, bk = jax.random.split(ks[0])
    s = 1.0 / math.sqrt(K_CONV)
    cw = jax.random.normal(wk, (CONV_OUT, K_CONV), jnp.float32) * s
    params["conv_wT"] = jnp.pad(cw, ((0, 0), (0, K_CONV_PAD - K_CONV))).astype(jnp.bfloat16)
    params["conv_b"] = jax.random.normal(bk, (CONV_OUT, 1), jnp.float32) * s

    # fc6 weight in (Cout, position, HIDDEN) layout; zero rows at padded positions
    # make the padded conv activations (incl. relu(bias) at pad positions) inert.
    wk, bk = jax.random.split(ks[1])
    s = 1.0 / math.sqrt(FEAT_DIM)
    w6 = jax.random.normal(wk, (CONV_OUT, P_REAL, HIDDEN), jnp.float32) * s
    params["fc6_w"] = jnp.pad(
        w6, ((0, 0), (0, P_PAD - P_REAL), (0, HIDDEN_PAD - HIDDEN))).astype(jnp.bfloat16)
    b6 = jax.random.normal(bk, (1, HIDDEN), jnp.float32) * s
    params["fc6_b"] = jnp.pad(b6, ((0, 0), (0, HIDDEN_PAD - HIDDEN)))

    params["fc7_w"], params["fc7_b"] = dense(ks[2], HIDDEN, HIDDEN, HIDDEN_PAD, HIDDEN_PAD)
    params["fc8_w"], params["fc8_b"] = dense(ks[3], HIDDEN, FC8_DIM, HIDDEN_PAD, FC8_PAD)
    params["bneck_w"], params["bneck_b"] = dense(ks[4], FC8_DIM, BOTTLENECK_DIM,
                                                 FC8_PAD, BOTTLENECK_PAD)      # nn.Linear(1000, bdim)
    params["cls_w"], params["cls_b"] = dense(ks[5], BOTTLENECK_DIM, N_LABELS,
                                             BOTTLENECK_PAD, N_LABELS_PAD)     # nn.Linear(bdim, n_labels)
    return params


if __name__ == "__main__":
    key = jax.random.PRNGKey(0)
    pkey, skey, tkey = jax.random.split(key, 3)
    params = init_params(pkey)

    # Small shapes consistent with the forward: batch=2, channels=4, spatial=16x16 (NCHW).
    source = jax.random.normal(skey, (2, 4, 16, 16), jnp.float32)
    target = jax.random.normal(tkey, (2, 4, 16, 16), jnp.float32)

    fwd = jax.jit(functools.partial(dan_forward, params=params))
    source_out, mmd = fwd(source, target)
    jax.block_until_ready((source_out, mmd))

    assert source_out.shape == (2, N_LABELS)
    assert mmd.shape == ()
    print("KERNEL_OK")
</pallas_src>

<mosaic_0001>
module attributes {stable_mosaic.version = 11 : i64} {
  func.func @_dan_fused_kernel(%arg0: memref<4x128x256xbf16, #tpu.memory_space<vmem>>, %arg1: memref<8x128xbf16, #tpu.memory_space<vmem>>, %arg2: memref<8x1xf32, #tpu.memory_space<vmem>>, %arg3: memref<8x256x128xbf16, #tpu.memory_space<vmem>>, %arg4: memref<1x128xf32, #tpu.memory_space<vmem>>, %arg5: memref<128x128xbf16, #tpu.memory_space<vmem>>, %arg6: memref<1x128xf32, #tpu.memory_space<vmem>>, %arg7: memref<128x1024xbf16, #tpu.memory_space<vmem>>, %arg8: memref<1x1024xf32, #tpu.memory_space<vmem>>, %arg9: memref<1024x128xbf16, #tpu.memory_space<vmem>>, %arg10: memref<1x128xf32, #tpu.memory_space<vmem>>, %arg11: memref<128x128xbf16, #tpu.memory_space<vmem>>, %arg12: memref<1x128xf32, #tpu.memory_space<vmem>>, %arg13: memref<4x128xf32, #tpu.memory_space<vmem>>, %arg14: memref<1x128xf32, #tpu.memory_space<vmem>>) attributes {dimension_semantics = [], scalar_prefetch = 0 : i64, scratch_operands = 0 : i64, tpu.core_type = #tpu.core_type<tc>} {
    %c0 = arith.constant 0 : index
    %c0_0 = arith.constant 0 : index
    %0 = vector.load %arg1[%c0, %c0_0] : memref<8x128xbf16, #tpu.memory_space<vmem>>, vector<8x128xbf16>
    %c0_1 = arith.constant 0 : index
    %c0_2 = arith.constant 0 : index
    %1 = vector.load %arg2[%c0_1, %c0_2] : memref<8x1xf32, #tpu.memory_space<vmem>>, vector<8x1xf32>
    %c0_3 = arith.constant 0 : index
    %c0_4 = arith.constant 0 : index
    %2 = vector.load %arg4[%c0_3, %c0_4] : memref<1x128xf32, #tpu.memory_space<vmem>>, vector<1x128xf32>
    %c0_5 = arith.constant 0 : index
    %c0_6 = arith.constant 0 : index
    %c0_7 = arith.constant 0 : index
    %3 = vector.load %arg0[%c0_5, %c0_6, %c0_7] : memref<4x128x256xbf16, #tpu.memory_space<vmem>>, vector<1x128x256xbf16>
    %4 = vector.shape_cast %3 : vector<1x128x256xbf16> to vector<128x256xbf16>
    %cst = arith.constant dense<0.000000e+00> : vector<8x256xf32>
    %5 = tpu.matmul %0, %4, %cst {dimension_numbers = #tpu.dot_dimension_numbers<[1], [0], [0], [1], [0, 0, 1, 1], [], []>} : vector<8x128xbf16>, vector<128x256xbf16>, vector<8x256xf32> -> vector<8x256xf32>
    %6 = vector.broadcast %1 : vector<8x1xf32> to vector<8x256xf32>
    %7 = arith.addf %5, %6 : vector<8x256xf32>
    %cst_8 = arith.constant 0.000000e+00 : f32
    %8 = vector.broadcast %cst_8 : f32 to vector<8x256xf32>
    %9 = arith.maximumf %7, %8 : vector<8x256xf32>
    %10 = vector.extract_strided_slice %9 {offsets = [0, 0], sizes = [1, 256], strides = [1, 1]} : vector<8x256xf32> to vector<1x256xf32>
    %11 = arith.truncf %10 : vector<1x256xf32> to vector<1x256xbf16>
    %c0_9 = arith.constant 0 : index
    %c0_10 = arith.constant 0 : index
    %c0_11 = arith.constant 0 : index
    %12 = vector.load %arg3[%c0_9, %c0_10, %c0_11] : memref<8x256x128xbf16, #tpu.memory_space<vmem>>, vector<1x256x128xbf16>
    %13 = vector.shape_cast %12 : vector<1x256x128xbf16> to vector<256x128xbf16>
    %cst_12 = arith.constant dense<0.000000e+00> : vector<1x128xf32>
    %14 = tpu.matmul %11, %13, %cst_12 {dimension_numbers = #tpu.dot_dimension_numbers<[1], [0], [0], [1], [0, 0, 1, 1], [], []>} : vector<1x256xbf16>, vector<256x128xbf16>, vector<1x128xf32> -> vector<1x128xf32>
    %15 = arith.addf %2, %14 : vector<1x128xf32>
    %16 = vector.extract_strided_slice %9 {offsets = [1, 0], sizes = [1, 256], strides = [1, 1]} : vector<8x256xf32> to vector<1x256xf32>
    %17 = arith.truncf %16 : vector<1x256xf32> to vector<1x256xbf16>
    %c1 = arith.constant 1 : index
    %c0_13 = arith.constant 0 : index
    %c0_14 = arith.constant 0 : index
    %18 = vector.load %arg3[%c1, %c0_13, %c0_14] : memref<8x256x128xbf16, #tpu.memory_space<vmem>>, vector<1x256x128xbf16>
    %19 = vector.shape_cast %18 : vector<1x256x128xbf16> to vector<256x128xbf16>
    %cst_15 = arith.constant dense<0.000000e+00> : vector<1x128xf32>
    %20 = tpu.matmul %17, %19, %cst_15 {dimension_numbers = #tpu.dot_dimension_numbers<[1], [0], [0], [1], [0, 0, 1, 1], [], []>} : vector<1x256xbf16>, vector<256x128xbf16>, vector<1x128xf32> -> vector<1x128xf32>
    %21 = arith.addf %15, %20 : vector<1x128xf32>
    %22 = vector.extract_strided_slice %9 {offsets = [2, 0], sizes = [1, 256], strides = [1, 1]} : vector<8x256xf32> to vector<1x256xf32>
    %23 = arith.truncf %22 : vector<1x256xf32> to vector<1x256xbf16>
    %c2 = arith.constant 2 : index
    %c0_16 = arith.constant 0 : index
    %c0_17 = arith.constant 0 : index
    %24 = vector.load %arg3[%c2, %c0_16, %c0_17] : memref<8x256x128xbf16, #tpu.memory_space<vmem>>, vector<1x256x128xbf16>
    %25 = vector.shape_cast %24 : vector<1x256x128xbf16> to vector<256x128xbf16>
    %cst_18 = arith.constant dense<0.000000e+00> : vector<1x128xf32>
    %26 = tpu.matmul %23, %25, %cst_18 {dimension_numbers = #tpu.dot_dimension_numbers<[1], [0], [0], [1], [0, 0, 1, 1], [], []>} : vector<1x256xbf16>, vector<256x128xbf16>, vector<1x128xf32> -> vector<1x128xf32>
    %27 = arith.addf %21, %26 : vector<1x128xf32>
    %28 = vector.extract_strided_slice %9 {offsets = [3, 0], sizes = [1, 256], strides = [1, 1]} : vector<8x256xf32> to vector<1x256xf32>
    %29 = arith.truncf %28 : vector<1x256xf32> to vector<1x256xbf16>
    %c3 = arith.constant 3 : index
    %c0_19 = arith.constant 0 : index
    %c0_20 = arith.constant 0 : index
    %30 = vector.load %arg3[%c3, %c0_19, %c0_20] : memref<8x256x128xbf16, #tpu.memory_space<vmem>>, vector<1x256x128xbf16>
    %31 = vector.shape_cast %30 : vector<1x256x128xbf16> to vector<256x128xbf16>
    %cst_21 = arith.constant dense<0.000000e+00> : vector<1x128xf32>
    %32 = tpu.matmul %29, %31, %cst_21 {dimension_numbers = #tpu.dot_dimension_numbers<[1], [0], [0], [1], [0, 0, 1, 1], [], []>} : vector<1x256xbf16>, vector<256x128xbf16>, vector<1x128xf32> -> vector<1x128xf32>
    %33 = arith.addf %27, %32 : vector<1x128xf32>
    %34 = vector.extract_strided_slice %9 {offsets = [4, 0], sizes = [1, 256], strides = [1, 1]} : vector<8x256xf32> to vector<1x256xf32>
    %35 = arith.truncf %34 : vector<1x256xf32> to vector<1x256xbf16>
    %c4 = arith.constant 4 : index
    %c0_22 = arith.constant 0 : index
    %c0_23 = arith.constant 0 : index
    %36 = vector.load %arg3[%c4, %c0_22, %c0_23] : memref<8x256x128xbf16, #tpu.memory_space<vmem>>, vector<1x256x128xbf16>
    %37 = vector.shape_cast %36 : vector<1x256x128xbf16> to vector<256x128xbf16>
    %cst_24 = arith.constant dense<0.000000e+00> : vector<1x128xf32>
    %38 = tpu.matmul %35, %37, %cst_24 {dimension_numbers = #tpu.dot_dimension_numbers<[1], [0], [0], [1], [0, 0, 1, 1], [], []>} : vector<1x256xbf16>, vector<256x128xbf16>, vector<1x128xf32> -> vector<1x128xf32>
    %39 = arith.addf %33, %38 : vector<1x128xf32>
    %40 = vector.extract_strided_slice %9 {offsets = [5, 0], sizes = [1, 256], strides = [1, 1]} : vector<8x256xf32> to vector<1x256xf32>
    %41 = arith.truncf %40 : vector<1x256xf32> to vector<1x256xbf16>
    %c5 = arith.constant 5 : index
    %c0_25 = arith.constant 0 : index
    %c0_26 = arith.constant 0 : index
    %42 = vector.load %arg3[%c5, %c0_25, %c0_26] : memref<8x256x128xbf16, #tpu.memory_space<vmem>>, vector<1x256x128xbf16>
    %43 = vector.shape_cast %42 : vector<1x256x128xbf16> to vector<256x128xbf16>
    %cst_27 = arith.constant dense<0.000000e+00> : vector<1x128xf32>
    %44 = tpu.matmul %41, %43, %cst_27 {dimension_numbers = #tpu.dot_dimension_numbers<[1], [0], [0], [1], [0, 0, 1, 1], [], []>} : vector<1x256xbf16>, vector<256x128xbf16>, vector<1x128xf32> -> vector<1x128xf32>
    %45 = arith.addf %39, %44 : vector<1x128xf32>
    %46 = vector.extract_strided_slice %9 {offsets = [6, 0], sizes = [1, 256], strides = [1, 1]} : vector<8x256xf32> to vector<1x256xf32>
    %47 = arith.truncf %46 : vector<1x256xf32> to vector<1x256xbf16>
    %c6 = arith.constant 6 : index
    %c0_28 = arith.constant 0 : index
    %c0_29 = arith.constant 0 : index
    %48 = vector.load %arg3[%c6, %c0_28, %c0_29] : memref<8x256x128xbf16, #tpu.memory_space<vmem>>, vector<1x256x128xbf16>
    %49 = vector.shape_cast %48 : vector<1x256x128xbf16> to vector<256x128xbf16>
    %cst_30 = arith.constant dense<0.000000e+00> : vector<1x128xf32>
    %50 = tpu.matmul %47, %49, %cst_30 {dimension_numbers = #tpu.dot_dimension_numbers<[1], [0], [0], [1], [0, 0, 1, 1], [], []>} : vector<1x256xbf16>, vector<256x128xbf16>, vector<1x128xf32> -> vector<1x128xf32>
    %51 = arith.addf %45, %50 : vector<1x128xf32>
    %52 = vector.extract_strided_slice %9 {offsets = [7, 0], sizes = [1, 256], strides = [1, 1]} : vector<8x256xf32> to vector<1x256xf32>
    %53 = arith.truncf %52 : vector<1x256xf32> to vector<1x256xbf16>
    %c7 = arith.constant 7 : index
    %c0_31 = arith.constant 0 : index
    %c0_32 = arith.constant 0 : index
    %54 = vector.load %arg3[%c7, %c0_31, %c0_32] : memref<8x256x128xbf16, #tpu.memory_space<vmem>>, vector<1x256x128xbf16>
    %55 = vector.shape_cast %54 : vector<1x256x128xbf16> to vector<256x128xbf16>
    %cst_33 = arith.constant dense<0.000000e+00> : vector<1x128xf32>
    %56 = tpu.matmul %53, %55, %cst_33 {dimension_numbers = #tpu.dot_dimension_numbers<[1], [0], [0], [1], [0, 0, 1, 1], [], []>} : vector<1x256xbf16>, vector<256x128xbf16>, vector<1x128xf32> -> vector<1x128xf32>
    %57 = arith.addf %51, %56 : vector<1x128xf32>
    %cst_34 = arith.constant 0.000000e+00 : f32
    %58 = vector.broadcast %cst_34 : f32 to vector<1x128xf32>
    %59 = arith.maximumf %57, %58 : vector<1x128xf32>
    %c1_35 = arith.constant 1 : index
    %c0_36 = arith.constant 0 : index
    %c0_37 = arith.constant 0 : index
    %60 = vector.load %arg0[%c1_35, %c0_36, %c0_37] : memref<4x128x256xbf16, #tpu.memory_space<vmem>>, vector<1x128x256xbf16>
    %61 = vector.shape_cast %60 : vector<1x128x256xbf16> to vector<128x256xbf16>
    %cst_38 = arith.constant dense<0.000000e+00> : vector<8x256xf32>
    %62 = tpu.matmul %0, %61, %cst_38 {dimension_numbers = #tpu.dot_dimension_numbers<[1], [0], [0], [1], [0, 0, 1, 1], [], []>} : vector<8x128xbf16>, vector<128x256xbf16>, vector<8x256xf32> -> vector<8x256xf32>
    %63 = vector.broadcast %1 : vector<8x1xf32> to vector<8x256xf32>
    %64 = arith.addf %62, %63 : vector<8x256xf32>
    %cst_39 = arith.constant 0.000000e+00 : f32
    %65 = vector.broadcast %cst_39 : f32 to vector<8x256xf32>
    %66 = arith.maximumf %64, %65 : vector<8x256xf32>
    %67 = vector.extract_strided_slice %66 {offsets = [0, 0], sizes = [1, 256], strides = [1, 1]} : vector<8x256xf32> to vector<1x256xf32>
    %68 = arith.truncf %67 : vector<1x256xf32> to vector<1x256xbf16>
    %c0_40 = arith.constant 0 : index
    %c0_41 = arith.constant 0 : index
    %c0_42 = arith.constant 0 : index
    %69 = vector.load %arg3[%c0_40, %c0_41, %c0_42] : memref<8x256x128xbf16, #tpu.memory_space<vmem>>, vector<1x256x128xbf16>
    %70 = vector.shape_cast %69 : vector<1x256x128xbf16> to vector<256x128xbf16>
    %cst_43 = arith.constant dense<0.000000e+00> : vector<1x128xf32>
    %71 = tpu.matmul %68, %70, %cst_43 {dimension_numbers = #tpu.dot_dimension_numbers<[1], [0], [0], [1], [0, 0, 1, 1], [], []>} : vector<1x256xbf16>, vector<256x128xbf16>, vector<1x128xf32> -> vector<1x128xf32>
    %72 = arith.addf %2, %71 : vector<1x128xf32>
    %73 = vector.extract_strided_slice %66 {offsets = [1, 0], sizes = [1, 256], strides = [1, 1]} : vector<8x256xf32> to vector<1x256xf32>
    %74 = arith.truncf %73 : vector<1x256xf32> to vector<1x256xbf16>
    %c1_44 = arith.constant 1 : index
    %c0_45 = arith.constant 0 : index
    %c0_46 = arith.constant 0 : index
    %75 = vector.load %arg3[%c1_44, %c0_45, %c0_46] : memref<8x256x128xbf16, #tpu.memory_space<vmem>>, vector<1x256x128xbf16>
    %76 = vector.shape_cast %75 : vector<1x256x128xbf16> to vector<256x128xbf16>
    %cst_47 = arith.constant dense<0.000000e+00> : vector<1x128xf32>
    %77 = tpu.matmul %74, %76, %cst_47 {dimension_numbers = #tpu.dot_dimension_numbers<[1], [0], [0], [1], [0, 0, 1, 1], [], []>} : vector<1x256xbf16>, vector<256x128xbf16>, vector<1x128xf32> -> vector<1x128xf32>
    %78 = arith.addf %72, %77 : vector<1x128xf32>
    %79 = vector.extract_strided_slice %66 {offsets = [2, 0], sizes = [1, 256], strides = [1, 1]} : vector<8x256xf32> to vector<1x256xf32>
    %80 = arith.truncf %79 : vector<1x256xf32> to vector<1x256xbf16>
    %c2_48 = arith.constant 2 : index
    %c0_49 = arith.constant 0 : index
    %c0_50 = arith.constant 0 : index
    %81 = vector.load %arg3[%c2_48, %c0_49, %c0_50] : memref<8x256x128xbf16, #tpu.memory_space<vmem>>, vector<1x256x128xbf16>
    %82 = vector.shape_cast %81 : vector<1x256x128xbf16> to vector<256x128xbf16>
    %cst_51 = arith.constant dense<0.000000e+00> : vector<1x128xf32>
    %83 = tpu.matmul %80, %82, %cst_51 {dimension_numbers = #tpu.dot_dimension_numbers<[1], [0], [0], [1], [0, 0, 1, 1], [], []>} : vector<1x256xbf16>, vector<256x128xbf16>, vector<1x128xf32> -> vector<1x128xf32>
    %84 = arith.addf %78, %83 : vector<1x128xf32>
    %85 = vector.extract_strided_slice %66 {offsets = [3, 0], sizes = [1, 256], strides = [1, 1]} : vector<8x256xf32> to vector<1x256xf32>
    %86 = arith.truncf %85 : vector<1x256xf32> to vector<1x256xbf16>
    %c3_52 = arith.constant 3 : index
    %c0_53 = arith.constant 0 : index
    %c0_54 = arith.constant 0 : index
    %87 = vector.load %arg3[%c3_52, %c0_53, %c0_54] : memref<8x256x128xbf16, #tpu.memory_space<vmem>>, vector<1x256x128xbf16>
    %88 = vector.shape_cast %87 : vector<1x256x128xbf16> to vector<256x128xbf16>
    %cst_55 = arith.constant dense<0.000000e+00> : vector<1x128xf32>
    %89 = tpu.matmul %86, %88, %cst_55 {dimension_numbers = #tpu.dot_dimension_numbers<[1], [0], [0], [1], [0, 0, 1, 1], [], []>} : vector<1x256xbf16>, vector<256x128xbf16>, vector<1x128xf32> -> vector<1x128xf32>
    %90 = arith.addf %84, %89 : vector<1x128xf32>
    %91 = vector.extract_strided_slice %66 {offsets = [4, 0], sizes = [1, 256], strides = [1, 1]} : vector<8x256xf32> to vector<1x256xf32>
    %92 = arith.truncf %91 : vector<1x256xf32> to vector<1x256xbf16>
    %c4_56 = arith.constant 4 : index
    %c0_57 = arith.constant 0 : index
    %c0_58 = arith.constant 0 : index
    %93 = vector.load %arg3[%c4_56, %c0_57, %c0_58] : memref<8x256x128xbf16, #tpu.memory_space<vmem>>, vector<1x256x128xbf16>
    %94 = vector.shape_cast %93 : vector<1x256x128xbf16> to vector<256x128xbf16>
    %cst_59 = arith.constant dense<0.000000e+00> : vector<1x128xf32>
    %95 = tpu.matmul %92, %94, %cst_59 {dimension_numbers = #tpu.dot_dimension_numbers<[1], [0], [0], [1], [0, 0, 1, 1], [], []>} : vector<1x256xbf16>, vector<256x128xbf16>, vector<1x128xf32> -> vector<1x128xf32>
    %96 = arith.addf %90, %95 : vector<1x128xf32>
    %97 = vector.extract_strided_slice %66 {offsets = [5, 0], sizes = [1, 256], strides = [1, 1]} : vector<8x256xf32> to vector<1x256xf32>
    %98 = arith.truncf %97 : vector<1x256xf32> to vector<1x256xbf16>
    %c5_60 = arith.constant 5 : index
    %c0_61 = arith.constant 0 : index
    %c0_62 = arith.constant 0 : index
    %99 = vector.load %arg3[%c5_60, %c0_61, %c0_62] : memref<8x256x128xbf16, #tpu.memory_space<vmem>>, vector<1x256x128xbf16>
    %100 = vector.shape_cast %99 : vector<1x256x128xbf16> to vector<256x128xbf16>
    %cst_63 = arith.constant dense<0.000000e+00> : vector<1x128xf32>
    %101 = tpu.matmul %98, %100, %cst_63 {dimension_numbers = #tpu.dot_dimension_numbers<[1], [0], [0], [1], [0, 0, 1, 1], [], []>} : vector<1x256xbf16>, vector<256x128xbf16>, vector<1x128xf32> -> vector<1x128xf32>
    %102 = arith.addf %96, %101 : vector<1x128xf32>
    %103 = vector.extract_strided_slice %66 {offsets = [6, 0], sizes = [1, 256], strides = [1, 1]} : vector<8x256xf32> to vector<1x256xf32>
    %104 = arith.truncf %103 : vector<1x256xf32> to vector<1x256xbf16>
    %c6_64 = arith.constant 6 : index
    %c0_65 = arith.constant 0 : index
    %c0_66 = arith.constant 0 : index
    %105 = vector.load %arg3[%c6_64, %c0_65, %c0_66] : memref<8x256x128xbf16, #tpu.memory_space<vmem>>, vector<1x256x128xbf16>
    %106 = vector.shape_cast %105 : vector<1x256x128xbf16> to vector<256x128xbf16>
    %cst_67 = arith.constant dense<0.000000e+00> : vector<1x128xf32>
    %107 = tpu.matmul %104, %106, %cst_67 {dimension_numbers = #tpu.dot_dimension_numbers<[1], [0], [0], [1], [0, 0, 1, 1], [], []>} : vector<1x256xbf16>, vector<256x128xbf16>, vector<1x128xf32> -> vector<1x128xf32>
    %108 = arith.addf %102, %107 : vector<1x128xf32>
    %109 = vector.extract_strided_slice %66 {offsets = [7, 0], sizes = [1, 256], strides = [1, 1]} : vector<8x256xf32> to vector<1x256xf32>
    %110 = arith.truncf %109 : vector<1x256xf32> to vector<1x256xbf16>
    %c7_68 = arith.constant 7 : index
    %c0_69 = arith.constant 0 : index
    %c0_70 = arith.constant 0 : index
    %111 = vector.load %arg3[%c7_68, %c0_69, %c0_70] : memref<8x256x128xbf16, #tpu.memory_space<vmem>>, vector<1x256x128xbf16>
    %112 = vector.shape_cast %111 : vector<1x256x128xbf16> to vector<256x128xbf16>
    %cst_71 = arith.constant dense<0.000000e+00> : vector<1x128xf32>
    %113 = tpu.matmul %110, %112, %cst_71 {dimension_numbers = #tpu.dot_dimension_numbers<[1], [0], [0], [1], [0, 0, 1, 1], [], []>} : vector<1x256xbf16>, vector<256x128xbf16>, vector<1x128xf32> -> vector<1x128xf32>
    %114 = arith.addf %108, %113 : vector<1x128xf32>
    %cst_72 = arith.constant 0.000000e+00 : f32
    %115 = vector.broadcast %cst_72 : f32 to vector<1x128xf32>
    %116 = arith.maximumf %114, %115 : vector<1x128xf32>
    %c2_73 = arith.constant 2 : index
    %c0_74 = arith.constant 0 : index
    %c0_75 = arith.constant 0 : index
    %117 = vector.load %arg0[%c2_73, %c0_74, %c0_75] : memref<4x128x256xbf16, #tpu.memory_space<vmem>>, vector<1x128x256xbf16>
    %118 = vector.shape_cast %117 : vector<1x128x256xbf16> to vector<128x256xbf16>
    %cst_76 = arith.constant dense<0.000000e+00> : vector<8x256xf32>
    %119 = tpu.matmul %0, %118, %cst_76 {dimension_numbers = #tpu.dot_dimension_numbers<[1], [0], [0], [1], [0, 0, 1, 1], [], []>} : vector<8x128xbf16>, vector<128x256xbf16>, vector<8x256xf32> -> vector<8x256xf32>
    %120 = vector.broadcast %1 : vector<8x1xf32> to vector<8x256xf32>
    %121 = arith.addf %119, %120 : vector<8x256xf32>
    %cst_77 = arith.constant 0.000000e+00 : f32
    %122 = vector.broadcast %cst_77 : f32 to vector<8x256xf32>
    %123 = arith.maximumf %121, %122 : vector<8x256xf32>
    %124 = vector.extract_strided_slice %123 {offsets = [0, 0], sizes = [1, 256], strides = [1, 1]} : vector<8x256xf32> to vector<1x256xf32>
    %125 = arith.truncf %124 : vector<1x256xf32> to vector<1x256xbf16>
    %c0_78 = arith.constant 0 : index
    %c0_79 = arith.constant 0 : index
    %c0_80 = arith.constant 0 : index
    %126 = vector.load %arg3[%c0_78, %c0_79, %c0_80] : memref<8x256x128xbf16, #tpu.memory_space<vmem>>, vector<1x256x128xbf16>
    %127 = vector.shape_cast %126 : vector<1x256x128xbf16> to vector<256x128xbf16>
    %cst_81 = arith.constant dense<0.000000e+00> : vector<1x128xf32>
    %128 = tpu.matmul %125, %127, %cst_81 {dimension_numbers = #tpu.dot_dimension_numbers<[1], [0], [0], [1], [0, 0, 1, 1], [], []>} : vector<1x256xbf16>, vector<256x128xbf16>, vector<1x128xf32> -> vector<1x128xf32>
    %129 = arith.addf %2, %128 : vector<1x128xf32>
    %130 = vector.extract_strided_slice %123 {offsets = [1, 0], sizes = [1, 256], strides = [1, 1]} : vector<8x256xf32> to vector<1x256xf32>
    %131 = arith.truncf %130 : vector<1x256xf32> to vector<1x256xbf16>
    %c1_82 = arith.constant 1 : index
    %c0_83 = arith.constant 0 : index
    %c0_84 = arith.constant 0 : index
    %132 = vector.load %arg3[%c1_82, %c0_83, %c0_84] : memref<8x256x128xbf16, #tpu.memory_space<vmem>>, vector<1x256x128xbf16>
    %133 = vector.shape_cast %132 : vector<1x256x128xbf16> to vector<256x128xbf16>
    %cst_85 = arith.constant dense<0.000000e+00> : vector<1x128xf32>
    %134 = tpu.matmul %131, %133, %cst_85 {dimension_numbers = #tpu.dot_dimension_numbers<[1], [0], [0], [1], [0, 0, 1, 1], [], []>} : vector<1x256xbf16>, vector<256x128xbf16>, vector<1x128xf32> -> vector<1x128xf32>
    %135 = arith.addf %129, %134 : vector<1x128xf32>
    %136 = vector.extract_strided_slice %123 {offsets = [2, 0], sizes = [1, 256], strides = [1, 1]} : vector<8x256xf32> to vector<1x256xf32>
    %137 = arith.truncf %136 : vector<1x256xf32> to vector<1x256xbf16>
    %c2_86 = arith.constant 2 : index
    %c0_87 = arith.constant 0 : index
    %c0_88 = arith.constant 0 : index
    %138 = vector.load %arg3[%c2_86, %c0_87, %c0_88] : memref<8x256x128xbf16, #tpu.memory_space<vmem>>, vector<1x256x128xbf16>
    %139 = vector.shape_cast %138 : vector<1x256x128xbf16> to vector<256x128xbf16>
    %cst_89 = arith.constant dense<0.000000e+00> : vector<1x128xf32>
    %140 = tpu.matmul %137, %139, %cst_89 {dimension_numbers = #tpu.dot_dimension_numbers<[1], [0], [0], [1], [0, 0, 1, 1], [], []>} : vector<1x256xbf16>, vector<256x128xbf16>, vector<1x128xf32> -> vector<1x128xf32>
    %141 = arith.addf %135, %140 : vector<1x128xf32>
    %142 = vector.extract_strided_slice %123 {offsets = [3, 0], sizes = [1, 256], strides = [1, 1]} : vector<8x256xf32> to vector<1x256xf32>
    %143 = arith.truncf %142 : vector<1x256xf32> to vector<1x256xbf16>
    %c3_90 = arith.constant 3 : index
    %c0_91 = arith.constant 0 : index
    %c0_92 = arith.constant 0 : index
    %144 = vector.load %arg3[%c3_90, %c0_91, %c0_92] : memref<8x256x128xbf16, #tpu.memory_space<vmem>>, vector<1x256x128xbf16>
    %145 = vector.shape_cast %144 : vector<1x256x128xbf16> to vector<256x128xbf16>
    %cst_93 = arith.constant dense<0.000000e+00> : vector<1x128xf32>
    %146 = tpu.matmul %143, %145, %cst_93 {dimension_numbers = #tpu.dot_dimension_numbers<[1], [0], [0], [1], [0, 0, 1, 1], [], []>} : vector<1x256xbf16>, vector<256x128xbf16>, vector<1x128xf32> -> vector<1x128xf32>
    %147 = arith.addf %141, %146 : vector<1x128xf32>
    %148 = vector.extract_strided_slice %123 {offsets = [4, 0], sizes = [1, 256], strides = [1, 1]} : vector<8x256xf32> to vector<1x256xf32>
    %149 = arith.truncf %148 : vector<1x256xf32> to vector<1x256xbf16>
    %c4_94 = arith.constant 4 : index
    %c0_95 = arith.constant 0 : index
    %c0_96 = arith.constant 0 : index
    %150 = vector.load %arg3[%c4_94, %c0_95, %c0_96] : memref<8x256x128xbf16, #tpu.memory_space<vmem>>, vector<1x256x128xbf16>
    %151 = vector.shape_cast %150 : vector<1x256x128xbf16> to vector<256x128xbf16>
    %cst_97 = arith.constant dense<0.000000e+00> : vector<1x128xf32>
    %152 = tpu.matmul %149, %151, %cst_97 {dimension_numbers = #tpu.dot_dimension_numbers<[1], [0], [0], [1], [0, 0, 1, 1], [], []>} : vector<1x256xbf16>, vector<256x128xbf16>, vector<1x128xf32> -> vector<1x128xf32>
    %153 = arith.addf %147, %152 : vector<1x128xf32>
    %154 = vector.extract_strided_slice %123 {offsets = [5, 0], sizes = [1, 256], strides = [1, 1]} : vector<8x256xf32> to vector<1x256xf32>
    %155 = arith.truncf %154 : vector<1x256xf32> to vector<1x256xbf16>
    %c5_98 = arith.constant 5 : index
    %c0_99 = arith.constant 0 : index
    %c0_100 = arith.constant 0 : index
    %156 = vector.load %arg3[%c5_98, %c0_99, %c0_100] : memref<8x256x128xbf16, #tpu.memory_space<vmem>>, vector<1x256x128xbf16>
    %157 = vector.shape_cast %156 : vector<1x256x128xbf16> to vector<256x128xbf16>
    %cst_101 = arith.constant dense<0.000000e+00> : vector<1x128xf32>
    %158 = tpu.matmul %155, %157, %cst_101 {dimension_numbers = #tpu.dot_dimension_numbers<[1], [0], [0], [1], [0, 0, 1, 1], [], []>} : vector<1x256xbf16>, vector<256x128xbf16>, vector<1x128xf32> -> vector<1x128xf32>
    %159 = arith.addf %153, %158 : vector<1x128xf32>
    %160 = vector.extract_strided_slice %123 {offsets = [6, 0], sizes = [1, 256], strides = [1, 1]} : vector<8x256xf32> to vector<1x256xf32>
    %161 = arith.truncf %160 : vector<1x256xf32> to vector<1x256xbf16>
    %c6_102 = arith.constant 6 : index
    %c0_103 = arith.constant 0 : index
    %c0_104 = arith.constant 0 : index
    %162 = vector.load %arg3[%c6_102, %c0_103, %c0_104] : memref<8x256x128xbf16, #tpu.memory_space<vmem>>, vector<1x256x128xbf16>
    %163 = vector.shape_cast %162 : vector<1x256x128xbf16> to vector<256x128xbf16>
    %cst_105 = arith.constant dense<0.000000e+00> : vector<1x128xf32>
    %164 = tpu.matmul %161, %163, %cst_105 {dimension_numbers = #tpu.dot_dimension_numbers<[1], [0], [0], [1], [0, 0, 1, 1], [], []>} : vector<1x256xbf16>, vector<256x128xbf16>, vector<1x128xf32> -> vector<1x128xf32>
    %165 = arith.addf %159, %164 : vector<1x128xf32>
    %166 = vector.extract_strided_slice %123 {offsets = [7, 0], sizes = [1, 256], strides = [1, 1]} : vector<8x256xf32> to vector<1x256xf32>
    %167 = arith.truncf %166 : vector<1x256xf32> to vector<1x256xbf16>
    %c7_106 = arith.constant 7 : index
    %c0_107 = arith.constant 0 : index
    %c0_108 = arith.constant 0 : index
    %168 = vector.load %arg3[%c7_106, %c0_107, %c0_108] : memref<8x256x128xbf16, #tpu.memory_space<vmem>>, vector<1x256x128xbf16>
    %169 = vector.shape_cast %168 : vector<1x256x128xbf16> to vector<256x128xbf16>
    %cst_109 = arith.constant dense<0.000000e+00> : vector<1x128xf32>
    %170 = tpu.matmul %167, %169, %cst_109 {dimension_numbers = #tpu.dot_dimension_numbers<[1], [0], [0], [1], [0, 0, 1, 1], [], []>} : vector<1x256xbf16>, vector<256x128xbf16>, vector<1x128xf32> -> vector<1x128xf32>
    %171 = arith.addf %165, %170 : vector<1x128xf32>
    %cst_110 = arith.constant 0.000000e+00 : f32
    %172 = vector.broadcast %cst_110 : f32 to vector<1x128xf32>
    %173 = arith.maximumf %171, %172 : vector<1x128xf32>
    %c3_111 = arith.constant 3 : index
    %c0_112 = arith.constant 0 : index
    %c0_113 = arith.constant 0 : index
    %174 = vector.load %arg0[%c3_111, %c0_112, %c0_113] : memref<4x128x256xbf16, #tpu.memory_space<vmem>>, vector<1x128x256xbf16>
    %175 = vector.shape_cast %174 : vector<1x128x256xbf16> to vector<128x256xbf16>
    %cst_114 = arith.constant dense<0.000000e+00> : vector<8x256xf32>
    %176 = tpu.matmul %0, %175, %cst_114 {dimension_numbers = #tpu.dot_dimension_numbers<[1], [0], [0], [1], [0, 0, 1, 1], [], []>} : vector<8x128xbf16>, vector<128x256xbf16>, vector<8x256xf32> -> vector<8x256xf32>
    %177 = vector.broadcast %1 : vector<8x1xf32> to vector<8x256xf32>
    %178 = arith.addf %176, %177 : vector<8x256xf32>
    %cst_115 = arith.constant 0.000000e+00 : f32
    %179 = vector.broadcast %cst_115 : f32 to vector<8x256xf32>
    %180 = arith.maximumf %178, %179 : vector<8x256xf32>
    %181 = vector.extract_strided_slice %180 {offsets = [0, 0], sizes = [1, 256], strides = [1, 1]} : vector<8x256xf32> to vector<1x256xf32>
    %182 = arith.truncf %181 : vector<1x256xf32> to vector<1x256xbf16>
    %c0_116 = arith.constant 0 : index
    %c0_117 = arith.constant 0 : index
    %c0_118 = arith.constant 0 : index
    %183 = vector.load %arg3[%c0_116, %c0_117, %c0_118] : memref<8x256x128xbf16, #tpu.memory_space<vmem>>, vector<1x256x128xbf16>
    %184 = vector.shape_cast %183 : vector<1x256x128xbf16> to vector<256x128xbf16>
    %cst_119 = arith.constant dense<0.000000e+00> : vector<1x128xf32>
    %185 = tpu.matmul %182, %184, %cst_119 {dimension_numbers = #tpu.dot_dimension_numbers<[1], [0], [0], [1], [0, 0, 1, 1], [], []>} : vector<1x256xbf16>, vector<256x128xbf16>, vector<1x128xf32> -> vector<1x128xf32>
    %186 = arith.addf %2, %185 : vector<1x128xf32>
    %187 = vector.extract_strided_slice %180 {offsets = [1, 0], sizes = [1, 256], strides = [1, 1]} : vector<8x256xf32> to vector<1x256xf32>
    %188 = arith.truncf %187 : vector<1x256xf32> to vector<1x256xbf16>
    %c1_120 = arith.constant 1 : index
    %c0_121 = arith.constant 0 : index
    %c0_122 = arith.constant 0 : index
    %189 = vector.load %arg3[%c1_120, %c0_121, %c0_122] : memref<8x256x128xbf16, #tpu.memory_space<vmem>>, vector<1x256x128xbf16>
    %190 = vector.shape_cast %189 : vector<1x256x128xbf16> to vector<256x128xbf16>
    %cst_123 = arith.constant dense<0.000000e+00> : vector<1x128xf32>
    %191 = tpu.matmul %188, %190, %cst_123 {dimension_numbers = #tpu.dot_dimension_numbers<[1], [0], [0], [1], [0, 0, 1, 1], [], []>} : vector<1x256xbf16>, vector<256x128xbf16>, vector<1x128xf32> -> vector<1x128xf32>
    %192 = arith.addf %186, %191 : vector<1x128xf32>
    %193 = vector.extract_strided_slice %180 {offsets = [2, 0], sizes = [1, 256], strides = [1, 1]} : vector<8x256xf32> to vector<1x256xf32>
    %194 = arith.truncf %193 : vector<1x256xf32> to vector<1x256xbf16>
    %c2_124 = arith.constant 2 : index
    %c0_125 = arith.constant 0 : index
    %c0_126 = arith.constant 0 : index
    %195 = vector.load %arg3[%c2_124, %c0_125, %c0_126] : memref<8x256x128xbf16, #tpu.memory_space<vmem>>, vector<1x256x128xbf16>
    %196 = vector.shape_cast %195 : vector<1x256x128xbf16> to vector<256x128xbf16>
    %cst_127 = arith.constant dense<0.000000e+00> : vector<1x128xf32>
    %197 = tpu.matmul %194, %196, %cst_127 {dimension_numbers = #tpu.dot_dimension_numbers<[1], [0], [0], [1], [0, 0, 1, 1], [], []>} : vector<1x256xbf16>, vector<256x128xbf16>, vector<1x128xf32> -> vector<1x128xf32>
    %198 = arith.addf %192, %197 : vector<1x128xf32>
    %199 = vector.extract_strided_slice %180 {offsets = [3, 0], sizes = [1, 256], strides = [1, 1]} : vector<8x256xf32> to vector<1x256xf32>
    %200 = arith.truncf %199 : vector<1x256xf32> to vector<1x256xbf16>
    %c3_128 = arith.constant 3 : index
    %c0_129 = arith.constant 0 : index
    %c0_130 = arith.constant 0 : index
    %201 = vector.load %arg3[%c3_128, %c0_129, %c0_130] : memref<8x256x128xbf16, #tpu.memory_space<vmem>>, vector<1x256x128xbf16>
    %202 = vector.shape_cast %201 : vector<1x256x128xbf16> to vector<256x128xbf16>
    %cst_131 = arith.constant dense<0.000000e+00> : vector<1x128xf32>
    %203 = tpu.matmul %200, %202, %cst_131 {dimension_numbers = #tpu.dot_dimension_numbers<[1], [0], [0], [1], [0, 0, 1, 1], [], []>} : vector<1x256xbf16>, vector<256x128xbf16>, vector<1x128xf32> -> vector<1x128xf32>
    %204 = arith.addf %198, %203 : vector<1x128xf32>
    %205 = vector.extract_strided_slice %180 {offsets = [4, 0], sizes = [1, 256], strides = [1, 1]} : vector<8x256xf32> to vector<1x256xf32>
    %206 = arith.truncf %205 : vector<1x256xf32> to vector<1x256xbf16>
    %c4_132 = arith.constant 4 : index
    %c0_133 = arith.constant 0 : index
    %c0_134 = arith.constant 0 : index
    %207 = vector.load %arg3[%c4_132, %c0_133, %c0_134] : memref<8x256x128xbf16, #tpu.memory_space<vmem>>, vector<1x256x128xbf16>
    %208 = vector.shape_cast %207 : vector<1x256x128xbf16> to vector<256x128xbf16>
    %cst_135 = arith.constant dense<0.000000e+00> : vector<1x128xf32>
    %209 = tpu.matmul %206, %208, %cst_135 {dimension_numbers = #tpu.dot_dimension_numbers<[1], [0], [0], [1], [0, 0, 1, 1], [], []>} : vector<1x256xbf16>, vector<256x128xbf16>, vector<1x128xf32> -> vector<1x128xf32>
    %210 = arith.addf %204, %209 : vector<1x128xf32>
    %211 = vector.extract_strided_slice %180 {offsets = [5, 0], sizes = [1, 256], strides = [1, 1]} : vector<8x256xf32> to vector<1x256xf32>
    %212 = arith.truncf %211 : vector<1x256xf32> to vector<1x256xbf16>
    %c5_136 = arith.constant 5 : index
    %c0_137 = arith.constant 0 : index
    %c0_138 = arith.constant 0 : index
    %213 = vector.load %arg3[%c5_136, %c0_137, %c0_138] : memref<8x256x128xbf16, #tpu.memory_space<vmem>>, vector<1x256x128xbf16>
    %214 = vector.shape_cast %213 : vector<1x256x128xbf16> to vector<256x128xbf16>
    %cst_139 = arith.constant dense<0.000000e+00> : vector<1x128xf32>
    %215 = tpu.matmul %212, %214, %cst_139 {dimension_numbers = #tpu.dot_dimension_numbers<[1], [0], [0], [1], [0, 0, 1, 1], [], []>} : vector<1x256xbf16>, vector<256x128xbf16>, vector<1x128xf32> -> vector<1x128xf32>
    %216 = arith.addf %210, %215 : vector<1x128xf32>
    %217 = vector.extract_strided_slice %180 {offsets = [6, 0], sizes = [1, 256], strides = [1, 1]} : vector<8x256xf32> to vector<1x256xf32>
    %218 = arith.truncf %217 : vector<1x256xf32> to vector<1x256xbf16>
    %c6_140 = arith.constant 6 : index
    %c0_141 = arith.constant 0 : index
    %c0_142 = arith.constant 0 : index
    %219 = vector.load %arg3[%c6_140, %c0_141, %c0_142] : memref<8x256x128xbf16, #tpu.memory_space<vmem>>, vector<1x256x128xbf16>
    %220 = vector.shape_cast %219 : vector<1x256x128xbf16> to vector<256x128xbf16>
    %cst_143 = arith.constant dense<0.000000e+00> : vector<1x128xf32>
    %221 = tpu.matmul %218, %220, %cst_143 {dimension_numbers = #tpu.dot_dimension_numbers<[1], [0], [0], [1], [0, 0, 1, 1], [], []>} : vector<1x256xbf16>, vector<256x128xbf16>, vector<1x128xf32> -> vector<1x128xf32>
    %222 = arith.addf %216, %221 : vector<1x128xf32>
    %223 = vector.extract_strided_slice %180 {offsets = [7, 0], sizes = [1, 256], strides = [1, 1]} : vector<8x256xf32> to vector<1x256xf32>
    %224 = arith.truncf %223 : vector<1x256xf32> to vector<1x256xbf16>
    %c7_144 = arith.constant 7 : index
    %c0_145 = arith.constant 0 : index
    %c0_146 = arith.constant 0 : index
    %225 = vector.load %arg3[%c7_144, %c0_145, %c0_146] : memref<8x256x128xbf16, #tpu.memory_space<vmem>>, vector<1x256x128xbf16>
    %226 = vector.shape_cast %225 : vector<1x256x128xbf16> to vector<256x128xbf16>
    %cst_147 = arith.constant dense<0.000000e+00> : vector<1x128xf32>
    %227 = tpu.matmul %224, %226, %cst_147 {dimension_numbers = #tpu.dot_dimension_numbers<[1], [0], [0], [1], [0, 0, 1, 1], [], []>} : vector<1x256xbf16>, vector<256x128xbf16>, vector<1x128xf32> -> vector<1x128xf32>
    %228 = arith.addf %222, %227 : vector<1x128xf32>
    %cst_148 = arith.constant 0.000000e+00 : f32
    %229 = vector.broadcast %cst_148 : f32 to vector<1x128xf32>
    %230 = arith.maximumf %228, %229 : vector<1x128xf32>
    %231 = tpu.concatenate %59, %116, %173, %230 in 0 : vector<1x128xf32>, vector<1x128xf32>, vector<1x128xf32>, vector<1x128xf32> -> vector<4x128xf32>
    %232 = arith.truncf %231 : vector<4x128xf32> to vector<4x128xbf16>
    %c0_149 = arith.constant 0 : index
    %c0_150 = arith.constant 0 : index
    %233 = vector.load %arg5[%c0_149, %c0_150] : memref<128x128xbf16, #tpu.memory_space<vmem>>, vector<128x128xbf16>
    %cst_151 = arith.constant dense<0.000000e+00> : vector<4x128xf32>
    %234 = tpu.matmul %232, %233, %cst_151 {dimension_numbers = #tpu.dot_dimension_numbers<[1], [0], [0], [1], [0, 0, 1, 1], [], []>} : vector<4x128xbf16>, vector<128x128xbf16>, vector<4x128xf32> -> vector<4x128xf32>
    %c0_152 = arith.constant 0 : index
    %c0_153 = arith.constant 0 : index
    %235 = vector.load %arg6[%c0_152, %c0_153] : memref<1x128xf32, #tpu.memory_space<vmem>>, vector<1x128xf32>
    %236 = vector.broadcast %235 : vector<1x128xf32> to vector<4x128xf32>
    %237 = arith.addf %234, %236 : vector<4x128xf32>
    %cst_154 = arith.constant 0.000000e+00 : f32
    %238 = vector.broadcast %cst_154 : f32 to vector<4x128xf32>
    %239 = arith.maximumf %237, %238 : vector<4x128xf32>
    %240 = arith.truncf %239 : vector<4x128xf32> to vector<4x128xbf16>
    %c0_155 = arith.constant 0 : index
    %c0_156 = arith.constant 0 : index
    %241 = vector.load %arg7[%c0_155, %c0_156] : memref<128x1024xbf16, #tpu.memory_space<vmem>>, vector<128x1024xbf16>
    %cst_157 = arith.constant dense<0.000000e+00> : vector<4x1024xf32>
    %242 = tpu.matmul %240, %241, %cst_157 {dimension_numbers = #tpu.dot_dimension_numbers<[1], [0], [0], [1], [0, 0, 1, 1], [], []>} : vector<4x128xbf16>, vector<128x1024xbf16>, vector<4x1024xf32> -> vector<4x1024xf32>
    %c0_158 = arith.constant 0 : index
    %c0_159 = arith.constant 0 : index
    %243 = vector.load %arg8[%c0_158, %c0_159] : memref<1x1024xf32, #tpu.memory_space<vmem>>, vector<1x1024xf32>
    %244 = vector.broadcast %243 : vector<1x1024xf32> to vector<4x1024xf32>
    %245 = arith.addf %242, %244 : vector<4x1024xf32>
    %246 = arith.truncf %245 : vector<4x1024xf32> to vector<4x1024xbf16>
    %c0_160 = arith.constant 0 : index
    %c0_161 = arith.constant 0 : index
    %247 = vector.load %arg9[%c0_160, %c0_161] : memref<1024x128xbf16, #tpu.memory_space<vmem>>, vector<1024x128xbf16>
    %cst_162 = arith.constant dense<0.000000e+00> : vector<4x128xf32>
    %248 = tpu.matmul %246, %247, %cst_162 {dimension_numbers = #tpu.dot_dimension_numbers<[1], [0], [0], [1], [0, 0, 1, 1], [], []>} : vector<4x1024xbf16>, vector<1024x128xbf16>, vector<4x128xf32> -> vector<4x128xf32>
    %c0_163 = arith.constant 0 : index
    %c0_164 = arith.constant 0 : index
    %249 = vector.load %arg10[%c0_163, %c0_164] : memref<1x128xf32, #tpu.memory_space<vmem>>, vector<1x128xf32>
    %250 = vector.broadcast %249 : vector<1x128xf32> to vector<4x128xf32>
    %251 = arith.addf %248, %250 : vector<4x128xf32>
    %cst_165 = arith.constant 0.000000e+00 : f32
    %252 = vector.broadcast %cst_165 : f32 to vector<4x128xf32>
    %253 = arith.maximumf %251, %252 : vector<4x128xf32>
    %254 = arith.truncf %253 : vector<4x128xf32> to vector<4x128xbf16>
    %c0_166 = arith.constant 0 : index
    %c0_167 = arith.constant 0 : index
    %255 = vector.load %arg11[%c0_166, %c0_167] : memref<128x128xbf16, #tpu.memory_space<vmem>>, vector<128x128xbf16>
    %cst_168 = arith.constant dense<0.000000e+00> : vector<4x128xf32>
    %256 = tpu.matmul %254, %255, %cst_168 {dimension_numbers = #tpu.dot_dimension_numbers<[1], [0], [0], [1], [0, 0, 1, 1], [], []>} : vector<4x128xbf16>, vector<128x128xbf16>, vector<4x128xf32> -> vector<4x128xf32>
    %c0_169 = arith.constant 0 : index
    %c0_170 = arith.constant 0 : index
    %257 = vector.load %arg12[%c0_169, %c0_170] : memref<1x128xf32, #tpu.memory_space<vmem>>, vector<1x128xf32>
    %258 = vector.broadcast %257 : vector<1x128xf32> to vector<4x128xf32>
    %259 = arith.addf %256, %258 : vector<4x128xf32>
    %c0_171 = arith.constant 0 : index
    %c0_172 = arith.constant 0 : index
    %260 = vector.load %arg13[%c0_171, %c0_172] : memref<4x128xf32, #tpu.memory_space<vmem>>, vector<4x128xf32>
    tpu.vector_store %arg13[%c0_171, %c0_172], %259 {strides = array<i32>} : memref<4x128xf32, #tpu.memory_space<vmem>>, vector<4x128xf32>,
    %261 = tpu.iota {dimensions = array<i32: 0>} : vector<4x1xi32>
    %c2_i32 = arith.constant 2 : i32
    %262 = vector.broadcast %c2_i32 : i32 to vector<4x1xi32>
    %263 = arith.cmpi slt, %261, %262 : vector<4x1xi32>
    %cst_173 = arith.constant 1.000000e+00 : f32
    %cst_174 = arith.constant -1.000000e+00 : f32
    %264 = vector.broadcast %cst_173 : f32 to vector<4x1xf32>
    %265 = vector.broadcast %cst_174 : f32 to vector<4x1xf32>
    %266 = arith.select %263, %264, %265 : vector<4x1xi1>, vector<4x1xf32>
    %267 = tpu.iota {dimensions = array<i32: 1>} : vector<1x4xi32>
    %c2_i32_175 = arith.constant 2 : i32
    %268 = vector.broadcast %c2_i32_175 : i32 to vector<1x4xi32>
    %269 = arith.cmpi slt, %267, %268 : vector<1x4xi32>
    %cst_176 = arith.constant 1.000000e+00 : f32
    %cst_177 = arith.constant -1.000000e+00 : f32
    %270 = vector.broadcast %cst_176 : f32 to vector<1x4xf32>
    %271 = vector.broadcast %cst_177 : f32 to vector<1x4xf32>
    %272 = arith.select %269, %270, %271 : vector<1x4xi1>, vector<1x4xf32>
    %cst_178 = arith.constant dense<0.000000e+00> : vector<4x4xf32>
    %273 = tpu.matmul %245, %245, %cst_178 {dimension_numbers = #tpu.dot_dimension_numbers<[1], [1], [0], [0], [0, 0, 1, 0], [], []>} : vector<4x1024xf32>, vector<4x1024xf32>, vector<4x4xf32> -> vector<4x4xf32>
    %274 = arith.mulf %245, %245 : vector<4x1024xf32>
    %cst_179 = arith.constant dense<0.000000e+00> : vector<4xf32>
    %275 = vector.multi_reduction <add>, %274, %cst_179 [1] : vector<4x1024xf32> to vector<4xf32>
    %276 = vector.shape_cast %275 : vector<4xf32> to vector<4x1xf32>
    %cst_180 = arith.constant 1.000000e+00 : f32
    %277 = vector.broadcast %cst_180 : f32 to vector<1x1024xf32>
    %cst_181 = arith.constant dense<0.000000e+00> : vector<1x4xf32>
    %278 = tpu.matmul %277, %274, %cst_181 {dimension_numbers = #tpu.dot_dimension_numbers<[1], [1], [0], [0], [0, 0, 1, 0], [], []>} : vector<1x1024xf32>, vector<4x1024xf32>, vector<1x4xf32> -> vector<1x4xf32>
    %279 = vector.broadcast %276 : vector<4x1xf32> to vector<4x4xf32>
    %280 = vector.broadcast %278 : vector<1x4xf32> to vector<4x4xf32>
    %281 = arith.addf %279, %280 : vector<4x4xf32>
    %cst_182 = arith.constant 2.000000e+00 : f32
    %282 = vector.broadcast %cst_182 : f32 to vector<4x4xf32>
    %283 = arith.mulf %282, %273 : vector<4x4xf32>
    %284 = arith.subf %281, %283 : vector<4x4xf32>
    %cst_183 = arith.constant 0.000000e+00 : f32
    %285 = vector.broadcast %cst_183 : f32 to vector<4x4xf32>
    %286 = arith.maximumf %284, %285 : vector<4x4xf32>
    %287 = vector.shape_cast %286 : vector<4x4xf32> to vector<1x4x4xf32>
    %cst_184 = arith.constant dense<0.000000e+00> : vector<1xf32>
    %288 = vector.multi_reduction <add>, %287, %cst_184 [1, 2] : vector<1x4x4xf32> to vector<1xf32>
    %289 = vector.shape_cast %288 : vector<1xf32> to vector<1x1x1xf32>
    %290 = vector.extract %289[0, 0, 0] : f32 from vector<1x1x1xf32>
    %291 = vector.broadcast %290 : f32 to vector<1x1xf32>
    %cst_185 = arith.constant 0.0833333358 : f32
    %292 = vector.broadcast %cst_185 : f32 to vector<1x1xf32>
    %293 = arith.mulf %291, %292 : vector<1x1xf32>
    %cst_186 = arith.constant 9.99999996E-13 : f32
    %294 = vector.broadcast %cst_186 : f32 to vector<1x1xf32>
    %295 = arith.maximumf %293, %294 : vector<1x1xf32>
    %cst_187 = arith.constant 2.500000e-01 : f32
    %296 = vector.broadcast %cst_187 : f32 to vector<1x1xf32>
    %297 = arith.mulf %295, %296 : vector<1x1xf32>
    %cst_188 = arith.constant 1.600000e+01 : f32
    %298 = vector.broadcast %cst_188 : f32 to vector<1x1xf32>
    %299 = arith.mulf %297, %298 : vector<1x1xf32>
    %300 = tpu.reciprocal %299 {approx = true} : vector<1x1xf32> -> vector<1x1xf32>
    %cst_189 = arith.constant 0.000000e+00 : f32
    %301 = vector.broadcast %cst_189 : f32 to vector<4x4xf32>
    %302 = arith.subf %301, %286 : vector<4x4xf32>
    %303 = vector.broadcast %300 : vector<1x1xf32> to vector<4x4xf32>
    %304 = arith.mulf %302, %303 : vector<4x4xf32>
    %305 = math.exp %304 : vector<4x4xf32>
    %306 = arith.mulf %305, %305 : vector<4x4xf32>
    %307 = arith.addf %305, %306 : vector<4x4xf32>
    %308 = arith.mulf %306, %306 : vector<4x4xf32>
    %309 = arith.addf %307, %308 : vector<4x4xf32>
    %310 = arith.mulf %308, %308 : vector<4x4xf32>
    %311 = arith.addf %309, %310 : vector<4x4xf32>
    %312 = arith.mulf %310, %310 : vector<4x4xf32>
    %313 = arith.addf %311, %312 : vector<4x4xf32>
    %314 = vector.broadcast %272 : vector<1x4xf32> to vector<4x4xf32>
    %315 = arith.mulf %313, %314 : vector<4x4xf32>
    %cst_190 = arith.constant dense<0.000000e+00> : vector<4xf32>
    %316 = vector.multi_reduction <add>, %315, %cst_190 [1] : vector<4x4xf32> to vector<4xf32>
    %317 = vector.shape_cast %316 : vector<4xf32> to vector<4x1xf32>
    %318 = arith.mulf %317, %266 : vector<4x1xf32>
    %319 = vector.shape_cast %318 : vector<4x1xf32> to vector<1x4x1xf32>
    %cst_191 = arith.constant dense<0.000000e+00> : vector<1xf32>
    %320 = vector.multi_reduction <add>, %319, %cst_191 [1, 2] : vector<1x4x1xf32> to vector<1xf32>
    %321 = vector.shape_cast %320 : vector<1xf32> to vector<1x1x1xf32>
    %322 = vector.extract %321[0, 0, 0] : f32 from vector<1x1x1xf32>
    %323 = vector.broadcast %322 : f32 to vector<1x1xf32>
    %cst_192 = arith.constant 2.500000e-01 : f32
    %324 = vector.broadcast %cst_192 : f32 to vector<1x1xf32>
    %325 = arith.mulf %323, %324 : vector<1x1xf32>
    %cst_193 = arith.constant dense<0.000000e+00> : vector<4x4xf32>
    %326 = tpu.matmul %253, %253, %cst_193 {dimension_numbers = #tpu.dot_dimension_numbers<[1], [1], [0], [0], [0, 0, 1, 0], [], []>} : vector<4x128xf32>, vector<4x128xf32>, vector<4x4xf32> -> vector<4x4xf32>
    %327 = arith.mulf %253, %253 : vector<4x128xf32>
    %cst_194 = arith.constant dense<0.000000e+00> : vector<4xf32>
    %328 = vector.multi_reduction <add>, %327, %cst_194 [1] : vector<4x128xf32> to vector<4xf32>
    %329 = vector.shape_cast %328 : vector<4xf32> to vector<4x1xf32>
    %cst_195 = arith.constant 1.000000e+00 : f32
    %330 = vector.broadcast %cst_195 : f32 to vector<1x128xf32>
    %cst_196 = arith.constant dense<0.000000e+00> : vector<1x4xf32>
    %331 = tpu.matmul %330, %327, %cst_196 {dimension_numbers = #tpu.dot_dimension_numbers<[1], [1], [0], [0], [0, 0, 1, 0], [], []>} : vector<1x128xf32>, vector<4x128xf32>, vector<1x4xf32> -> vector<1x4xf32>
    %332 = vector.broadcast %329 : vector<4x1xf32> to vector<4x4xf32>
    %333 = vector.broadcast %331 : vector<1x4xf32> to vector<4x4xf32>
    %334 = arith.addf %332, %333 : vector<4x4xf32>
    %cst_197 = arith.constant 2.000000e+00 : f32
    %335 = vector.broadcast %cst_197 : f32 to vector<4x4xf32>
    %336 = arith.mulf %335, %326 : vector<4x4xf32>
    %337 = arith.subf %334, %336 : vector<4x4xf32>
    %cst_198 = arith.constant 0.000000e+00 : f32
    %338 = vector.broadcast %cst_198 : f32 to vector<4x4xf32>
    %339 = arith.maximumf %337, %338 : vector<4x4xf32>
    %340 = vector.shape_cast %339 : vector<4x4xf32> to vector<1x4x4xf32>
    %cst_199 = arith.constant dense<0.000000e+00> : vector<1xf32>
    %341 = vector.multi_reduction <add>, %340, %cst_199 [1, 2] : vector<1x4x4xf32> to vector<1xf32>
    %342 = vector.shape_cast %341 : vector<1xf32> to vector<1x1x1xf32>
    %343 = vector.extract %342[0, 0, 0] : f32 from vector<1x1x1xf32>
    %344 = vector.broadcast %343 : f32 to vector<1x1xf32>
    %cst_200 = arith.constant 0.0833333358 : f32
    %345 = vector.broadcast %cst_200 : f32 to vector<1x1xf32>
    %346 = arith.mulf %344, %345 : vector<1x1xf32>
    %cst_201 = arith.constant 9.99999996E-13 : f32
    %347 = vector.broadcast %cst_201 : f32 to vector<1x1xf32>
    %348 = arith.maximumf %346, %347 : vector<1x1xf32>
    %cst_202 = arith.constant 2.500000e-01 : f32
    %349 = vector.broadcast %cst_202 : f32 to vector<1x1xf32>
    %350 = arith.mulf %348, %349 : vector<1x1xf32>
    %cst_203 = arith.constant 1.600000e+01 : f32
    %351 = vector.broadcast %cst_203 : f32 to vector<1x1xf32>
    %352 = arith.mulf %350, %351 : vector<1x1xf32>
    %353 = tpu.reciprocal %352 {approx = true} : vector<1x1xf32> -> vector<1x1xf32>
    %cst_204 = arith.constant 0.000000e+00 : f32
    %354 = vector.broadcast %cst_204 : f32 to vector<4x4xf32>
    %355 = arith.subf %354, %339 : vector<4x4xf32>
    %356 = vector.broadcast %353 : vector<1x1xf32> to vector<4x4xf32>
    %357 = arith.mulf %355, %356 : vector<4x4xf32>
    %358 = math.exp %357 : vector<4x4xf32>
    %359 = arith.mulf %358, %358 : vector<4x4xf32>
    %360 = arith.addf %358, %359 : vector<4x4xf32>
    %361 = arith.mulf %359, %359 : vector<4x4xf32>
    %362 = arith.addf %360, %361 : vector<4x4xf32>
    %363 = arith.mulf %361, %361 : vector<4x4xf32>
    %364 = arith.addf %362, %363 : vector<4x4xf32>
    %365 = arith.mulf %363, %363 : vector<4x4xf32>
    %366 = arith.addf %364, %365 : vector<4x4xf32>
    %367 = vector.broadcast %272 : vector<1x4xf32> to vector<4x4xf32>
    %368 = arith.mulf %366, %367 : vector<4x4xf32>
    %cst_205 = arith.constant dense<0.000000e+00> : vector<4xf32>
    %369 = vector.multi_reduction <add>, %368, %cst_205 [1] : vector<4x4xf32> to vector<4xf32>
    %370 = vector.shape_cast %369 : vector<4xf32> to vector<4x1xf32>
    %371 = arith.mulf %370, %266 : vector<4x1xf32>
    %372 = vector.shape_cast %371 : vector<4x1xf32> to vector<1x4x1xf32>
    %cst_206 = arith.constant dense<0.000000e+00> : vector<1xf32>
    %373 = vector.multi_reduction <add>, %372, %cst_206 [1, 2] : vector<1x4x1xf32> to vector<1xf32>
    %374 = vector.shape_cast %373 : vector<1xf32> to vector<1x1x1xf32>
    %375 = vector.extract %374[0, 0, 0] : f32 from vector<1x1x1xf32>
    %376 = vector.broadcast %375 : f32 to vector<1x1xf32>
    %cst_207 = arith.constant 2.500000e-01 : f32
    %377 = vector.broadcast %cst_207 : f32 to vector<1x1xf32>
    %378 = arith.mulf %376, %377 : vector<1x1xf32>
    %379 = arith.addf %325, %378 : vector<1x1xf32>
    %cst_208 = arith.constant dense<0.000000e+00> : vector<4x4xf32>
    %380 = tpu.matmul %259, %259, %cst_208 {dimension_numbers = #tpu.dot_dimension_numbers<[1], [1], [0], [0], [0, 0, 1, 0], [], []>} : vector<4x128xf32>, vector<4x128xf32>, vector<4x4xf32> -> vector<4x4xf32>
    %381 = arith.mulf %259, %259 : vector<4x128xf32>
    %cst_209 = arith.constant dense<0.000000e+00> : vector<4xf32>
    %382 = vector.multi_reduction <add>, %381, %cst_209 [1] : vector<4x128xf32> to vector<4xf32>
    %383 = vector.shape_cast %382 : vector<4xf32> to vector<4x1xf32>
    %cst_210 = arith.constant 1.000000e+00 : f32
    %384 = vector.broadcast %cst_210 : f32 to vector<1x128xf32>
    %cst_211 = arith.constant dense<0.000000e+00> : vector<1x4xf32>
    %385 = tpu.matmul %384, %381, %cst_211 {dimension_numbers = #tpu.dot_dimension_numbers<[1], [1], [0], [0], [0, 0, 1, 0], [], []>} : vector<1x128xf32>, vector<4x128xf32>, vector<1x4xf32> -> vector<1x4xf32>
    %386 = vector.broadcast %383 : vector<4x1xf32> to vector<4x4xf32>
    %387 = vector.broadcast %385 : vector<1x4xf32> to vector<4x4xf32>
    %388 = arith.addf %386, %387 : vector<4x4xf32>
    %cst_212 = arith.constant 2.000000e+00 : f32
    %389 = vector.broadcast %cst_212 : f32 to vector<4x4xf32>
    %390 = arith.mulf %389, %380 : vector<4x4xf32>
    %391 = arith.subf %388, %390 : vector<4x4xf32>
    %cst_213 = arith.constant 0.000000e+00 : f32
    %392 = vector.broadcast %cst_213 : f32 to vector<4x4xf32>
    %393 = arith.maximumf %391, %392 : vector<4x4xf32>
    %394 = vector.shape_cast %393 : vector<4x4xf32> to vector<1x4x4xf32>
    %cst_214 = arith.constant dense<0.000000e+00> : vector<1xf32>
    %395 = vector.multi_reduction <add>, %394, %cst_214 [1, 2] : vector<1x4x4xf32> to vector<1xf32>
    %396 = vector.shape_cast %395 : vector<1xf32> to vector<1x1x1xf32>
    %397 = vector.extract %396[0, 0, 0] : f32 from vector<1x1x1xf32>
    %398 = vector.broadcast %397 : f32 to vector<1x1xf32>
    %cst_215 = arith.constant 0.0833333358 : f32
    %399 = vector.broadcast %cst_215 : f32 to vector<1x1xf32>
    %400 = arith.mulf %398, %399 : vector<1x1xf32>
    %cst_216 = arith.constant 9.99999996E-13 : f32
    %401 = vector.broadcast %cst_216 : f32 to vector<1x1xf32>
    %402 = arith.maximumf %400, %401 : vector<1x1xf32>
    %cst_217 = arith.constant 2.500000e-01 : f32
    %403 = vector.broadcast %cst_217 : f32 to vector<1x1xf32>
    %404 = arith.mulf %402, %403 : vector<1x1xf32>
    %cst_218 = arith.constant 1.600000e+01 : f32
    %405 = vector.broadcast %cst_218 : f32 to vector<1x1xf32>
    %406 = arith.mulf %404, %405 : vector<1x1xf32>
    %407 = tpu.reciprocal %406 {approx = true} : vector<1x1xf32> -> vector<1x1xf32>
    %cst_219 = arith.constant 0.000000e+00 : f32
    %408 = vector.broadcast %cst_219 : f32 to vector<4x4xf32>
    %409 = arith.subf %408, %393 : vector<4x4xf32>
    %410 = vector.broadcast %407 : vector<1x1xf32> to vector<4x4xf32>
    %411 = arith.mulf %409, %410 : vector<4x4xf32>
    %412 = math.exp %411 : vector<4x4xf32>
    %413 = arith.mulf %412, %412 : vector<4x4xf32>
    %414 = arith.addf %412, %413 : vector<4x4xf32>
    %415 = arith.mulf %413, %413 : vector<4x4xf32>
    %416 = arith.addf %414, %415 : vector<4x4xf32>
    %417 = arith.mulf %415, %415 : vector<4x4xf32>
    %418 = arith.addf %416, %417 : vector<4x4xf32>
    %419 = arith.mulf %417, %417 : vector<4x4xf32>
    %420 = arith.addf %418, %419 : vector<4x4xf32>
    %421 = vector.broadcast %272 : vector<1x4xf32> to vector<4x4xf32>
    %422 = arith.mulf %420, %421 : vector<4x4xf32>
    %cst_220 = arith.constant dense<0.000000e+00> : vector<4xf32>
    %423 = vector.multi_reduction <add>, %422, %cst_220 [1] : vector<4x4xf32> to vector<4xf32>
    %424 = vector.shape_cast %423 : vector<4xf32> to vector<4x1xf32>
    %425 = arith.mulf %424, %266 : vector<4x1xf32>
    %426 = vector.shape_cast %425 : vector<4x1xf32> to vector<1x4x1xf32>
    %cst_221 = arith.constant dense<0.000000e+00> : vector<1xf32>
    %427 = vector.multi_reduction <add>, %426, %cst_221 [1, 2] : vector<1x4x1xf32> to vector<1xf32>
    %428 = vector.shape_cast %427 : vector<1xf32> to vector<1x1x1xf32>
    %429 = vector.extract %428[0, 0, 0] : f32 from vector<1x1x1xf32>
    %430 = vector.broadcast %429 : f32 to vector<1x1xf32>
    %cst_222 = arith.constant 2.500000e-01 : f32
    %431 = vector.broadcast %cst_222 : f32 to vector<1x1xf32>
    %432 = arith.mulf %430, %431 : vector<1x1xf32>
    %433 = arith.addf %379, %432 : vector<1x1xf32>
    %434 = vector.shape_cast %433 : vector<1x1xf32> to vector<1x1xf32>
    %435 = vector.broadcast %434 : vector<1x1xf32> to vector<1x128xf32>
    %c0_223 = arith.constant 0 : index
    %c0_224 = arith.constant 0 : index
    %436 = vector.load %arg14[%c0_223, %c0_224] : memref<1x128xf32, #tpu.memory_space<vmem>>, vector<1x128xf32>
    tpu.vector_store %arg14[%c0_223, %c0_224], %435 {strides = array<i32>} : memref<1x128xf32, #tpu.memory_space<vmem>>, vector<1x128xf32>,
    return
  }
}

</mosaic_0001>

<llo_original>
// kernel: dan_forward.1
$region0: #{dan_forward.1}
  #allocation0 [shape = 'u32[]', space=smem, size = 0x4, offset = 0x4, fixed_abs, tag = 'smem constant byte address 0x4 - core index']
  #allocation1 [shape = 'u32[144,128]{1,0:T(1,128)}', space=vmem, size = 0x12000, scoped, tag = 'internal scratch']
  %s0 = inlined_call_operand.vmem [shape: bf16[4,128,256], index: 0, kind: input, shape index: {}]
  %s1 = inlined_call_operand.vmem [shape: bf16[8,128], index: 1, kind: input, shape index: {}]
  %s2 = inlined_call_operand.vmem [shape: f32[8,1], index: 2, kind: input, shape index: {}]
  %s3 = inlined_call_operand.vmem [shape: bf16[8,256,128], index: 3, kind: input, shape index: {}]
  %s4 = inlined_call_operand.vmem [shape: f32[1,128], index: 4, kind: input, shape index: {}]
  %s5 = inlined_call_operand.vmem [shape: bf16[128,128], index: 5, kind: input, shape index: {}]
  %s6 = inlined_call_operand.vmem [shape: f32[1,128], index: 6, kind: input, shape index: {}]
  %s7 = inlined_call_operand.vmem [shape: bf16[128,1024], index: 7, kind: input, shape index: {}]
  %s8 = inlined_call_operand.vmem [shape: f32[1,1024], index: 8, kind: input, shape index: {}]
  %s9 = inlined_call_operand.vmem [shape: bf16[1024,128], index: 9, kind: input, shape index: {}]
  %s10 = inlined_call_operand.vmem [shape: f32[1,128], index: 10, kind: input, shape index: {}]
  %s11 = inlined_call_operand.vmem [shape: bf16[128,128], index: 11, kind: input, shape index: {}]
  %s12 = inlined_call_operand.vmem [shape: f32[1,128], index: 12, kind: input, shape index: {}]
  %s13 = inlined_call_operand.vmem [shape: f32[4,128], index: 13, kind: output, shape index: {0}]
  %s14 = inlined_call_operand.hbm [shape: f32[1,128], index: 14, kind: output, shape index: {1}]
  %15 = xla_tuple %s13, %s14
  %s16 = sld [smem:[#allocation0]]
  $region70: #{dan_forward.1} parent=0
    _
  %s18 = ssub.s32 1, %s16
  %s19 = scalar_select 0, %s18, %s16
  $region1: #{dan_forward.1} parent=0
    #allocation2 [shape = 'u8[512]{0}', space=vmem, size = 0x400, scoped, tag = 'output window, operand 1, single buffered']
    #allocation3 [shape = 's32[1]{0}', space=sflag, size = 0x4, scoped, tag = 'scoped memory for dan_forward.1']
    %20 = vsyncpa [#allocation3], 0
    // Predicated region
    $region2: #{dan_forward.1} parent=1 // pred_check
      _
    $region3: #{dan_forward.1} parent=1 // pred_check_branch
      %22 = sbr.rel (0) target = $region5
    $region4: #{dan_forward.1} parent=1 // pred_region
      _
    $region5: #{dan_forward.1} parent=1 // pred_fallthru
      _
    // Predicated region
    $region6: #{dan_forward.1} parent=1 // pred_check
      _
    $region7: #{dan_forward.1} parent=1 // pred_check_branch
      %24 = sbr.rel (0) target = $region9
    $region8: #{dan_forward.1} parent=1 // pred_region
      _
    $region9: #{dan_forward.1} parent=1 // pred_fallthru
      _
    // Predicated region
    $region10: #{dan_forward.1} parent=1 // pred_check
      _
    $region11: #{dan_forward.1} parent=1 // pred_check_branch
      %26 = sbr.rel (0) target = $region13
    $region12: #{dan_forward.1} parent=1 // pred_region
      _
    $region13: #{dan_forward.1} parent=1 // pred_fallthru
      _
    // Predicated region
    $region14: #{dan_forward.1} parent=1 // pred_check
      _
    $region15: #{dan_forward.1} parent=1 // pred_check_branch
      %28 = sbr.rel (0) target = $region17
    $region16: #{dan_forward.1} parent=1 // pred_region
      _
    $region17: #{dan_forward.1} parent=1 // pred_fallthru
      _
    // Predicated region
    $region18: #{dan_forward.1} parent=1 // pred_check
      _
    $region19: #{dan_forward.1} parent=1 // pred_check_branch
      %30 = sbr.rel (0) target = $region21
    $region20: #{dan_forward.1} parent=1 // pred_region
      _
    $region21: #{dan_forward.1} parent=1 // pred_fallthru
      _
    // Predicated region
    $region22: #{dan_forward.1} parent=1 // pred_check
      _
    $region23: #{dan_forward.1} parent=1 // pred_check_branch
      %32 = sbr.rel (0) target = $region25
    $region24: #{dan_forward.1} parent=1 // pred_region
      _
    $region25: #{dan_forward.1} parent=1 // pred_fallthru
      _
    // Predicated region
    $region26: #{dan_forward.1} parent=1 // pred_check
      _
    $region27: #{dan_forward.1} parent=1 // pred_check_branch
      %34 = sbr.rel (0) target = $region29
    $region28: #{dan_forward.1} parent=1 // pred_region
      _
    $region29: #{dan_forward.1} parent=1 // pred_fallthru
      _
    // Predicated region
    $region30: #{dan_forward.1} parent=1 // pred_check
      _
    $region31: #{dan_forward.1} parent=1 // pred_check_branch
      %36 = sbr.rel (0) target = $region33
    $region32: #{dan_forward.1} parent=1 // pred_region
      _
    $region33: #{dan_forward.1} parent=1 // pred_fallthru
      _
    // Predicated region
    $region34: #{dan_forward.1} parent=1 // pred_check
      _
    $region35: #{dan_forward.1} parent=1 // pred_check_branch
      %38 = sbr.rel (0) target = $region37
    $region36: #{dan_forward.1} parent=1 // pred_region
      _
    $region37: #{dan_forward.1} parent=1 // pred_fallthru
      _
    // Predicated region
    $region38: #{dan_forward.1} parent=1 // pred_check
      _
    $region39: #{dan_forward.1} parent=1 // pred_check_branch
      %40 = sbr.rel (0) target = $region41
    $region40: #{dan_forward.1} parent=1 // pred_region
      _
    $region41: #{dan_forward.1} parent=1 // pred_fallthru
      _
    // Predicated region
    $region42: #{dan_forward.1} parent=1 // pred_check
      _
    $region43: #{dan_forward.1} parent=1 // pred_check_branch
      %42 = sbr.rel (0) target = $region45
    $region44: #{dan_forward.1} parent=1 // pred_region
      _
    $region45: #{dan_forward.1} parent=1 // pred_fallthru
      _
    // Predicated region
    $region46: #{dan_forward.1} parent=1 // pred_check
      _
    $region47: #{dan_forward.1} parent=1 // pred_check_branch
      %44 = sbr.rel (0) target = $region49
    $region48: #{dan_forward.1} parent=1 // pred_region
      _
    $region49: #{dan_forward.1} parent=1 // pred_fallthru
      _
    // Predicated region
    $region50: #{dan_forward.1} parent=1 // pred_check
      _
    $region51: #{dan_forward.1} parent=1 // pred_check_branch
      %46 = sbr.rel (0) target = $region53
    $region52: #{dan_forward.1} parent=1 // pred_region
      _
    $region53: #{dan_forward.1} parent=1 // pred_fallthru
      _
    %v48 = vld [vmem:[%s1] sm:$0xf]
    %v49 = vld [vmem:[%s2] sm:$0xff]
    %v50 = vld [vmem:[%s4] sm:$0x1]
    %v51 = vld [vmem:[%s0] sm:$0xff]
    %v52 = vld [vmem:[%s0 + $0x8] sm:$0xff]
    %v53 = vld [vmem:[%s0 + $0x10] sm:$0xff]
    %v54 = vld [vmem:[%s0 + $0x18] sm:$0xff]
    %v55 = vld [vmem:[%s0 + $0x20] sm:$0xff]
    %v56 = vld [vmem:[%s0 + $0x28] sm:$0xff]
    %v57 = vld [vmem:[%s0 + $0x30] sm:$0xff]
    %v58 = vld [vmem:[%s0 + $0x38] sm:$0xff]
    %v59 = vld [vmem:[%s0 + $0x40] sm:$0xff]
    %v60 = vld [vmem:[%s0 + $0x48] sm:$0xff]
    %v61 = vld [vmem:[%s0 + $0x50] sm:$0xff]
    %v62 = vld [vmem:[%s0 + $0x58] sm:$0xff]
    %v63 = vld [vmem:[%s0 + $0x60] sm:$0xff]
    %v64 = vld [vmem:[%s0 + $0x68] sm:$0xff]
    %v65 = vld [vmem:[%s0 + $0x70] sm:$0xff]
    %v66 = vld [vmem:[%s0 + $0x78] sm:$0xff]
    %68 = vset.pattern.permute.xlu0 0
    %69 = vperm.xlu0 %68, %v49
    %v70 = vpop.permute.xlu0 %69
    %v88 = vunpack.c.l.b16 %v51
    %v89 = vunpack.c.h.b16 %v51
    %v90 = vunpack.c.l.b16 %v52
    %v91 = vunpack.c.h.b16 %v52
    %v92 = vunpack.c.l.b16 %v53
    %v93 = vunpack.c.h.b16 %v53
    %v94 = vunpack.c.l.b16 %v54
    %v95 = vunpack.c.h.b16 %v54
    %v96 = vunpack.c.l.b16 %v55
    %v97 = vunpack.c.h.b16 %v55
    %v98 = vunpack.c.l.b16 %v56
    %v99 = vunpack.c.h.b16 %v56
    %v100 = vunpack.c.l.b16 %v57
    %v101 = vunpack.c.h.b16 %v57
    %v102 = vunpack.c.l.b16 %v58
    %v103 = vunpack.c.h.b16 %v58
    %v104 = vunpack.c.l.b16 %v59
    %v105 = vunpack.c.h.b16 %v59
    %v106 = vunpack.c.l.b16 %v60
    %v107 = vunpack.c.h.b16 %v60
    %v108 = vunpack.c.l.b16 %v61
    %v109 = vunpack.c.h.b16 %v61
    %v110 = vunpack.c.l.b16 %v62
    %v111 = vunpack.c.h.b16 %v62
    %v112 = vunpack.c.l.b16 %v63
    %v113 = vunpack.c.h.b16 %v63
    %v114 = vunpack.c.l.b16 %v64
    %v115 = vunpack.c.h.b16 %v64
    %v116 = vunpack.c.l.b16 %v65
    %v117 = vunpack.c.h.b16 %v65
    %v118 = vunpack.c.l.b16 %v66
    %v119 = vunpack.c.h.b16 %v66
    %v120 = vpack.c.b16 %v90, %v88
    %v121 = vpack.c.b16 %v91, %v89
    %v122 = vpack.c.b16 %v94, %v92
    %v123 = vpack.c.b16 %v95, %v93
    %v124 = vpack.c.b16 %v98, %v96
    %v125 = vpack.c.b16 %v99, %v97
    %v126 = vpack.c.b16 %v102, %v100
    %v127 = vpack.c.b16 %v103, %v101
    %v128 = vpack.c.b16 %v106, %v104
    %v129 = vpack.c.b16 %v107, %v105
    %v130 = vpack.c.b16 %v110, %v108
    %v131 = vpack.c.b16 %v111, %v109
    %v132 = vpack.c.b16 %v114, %v112
    %v133 = vpack.c.b16 %v115, %v113
    %v134 = vpack.c.b16 %v118, %v116
    %v135 = vpack.c.b16 %v119, %v117
    %152 = vmatprep.subr.bf16.mxu0 %v121
    %153 = vmatpush1.bf16.msra.mxu0 %v120
    %154 = vmatprep.subr.bf16.mxu0 %v123
    %155 = vmatpush1.bf16.msra.mxu0 %v122
    %156 = vmatprep.subr.bf16.mxu0 %v125
    %157 = vmatpush1.bf16.msra.mxu0 %v124
    %158 = vmatprep.subr.bf16.mxu0 %v127
    %159 = vmatpush1.bf16.msra.mxu0 %v126
    %160 = vmatprep.subr.bf16.mxu0 %v129
    %161 = vmatpush1.bf16.msra.mxu0 %v128
    %162 = vmatprep.subr.bf16.mxu0 %v131
    %163 = vmatpush1.bf16.msra.mxu0 %v130
    %164 = vmatprep.subr.bf16.mxu0 %v133
    %165 = vmatpush1.bf16.msra.mxu0 %v132
    %166 = vmatprep.subr.bf16.mxu0 %v135
    %167 = vmatpush1.bf16.msra.mxu0 %v134
    %168 = vmatprep.subr.bf16.mxu0 0
    %169 = vmatpush1.bf16.msra.mxu0 0
    %170 = vmatprep.subr.bf16.mxu0 0
    %171 = vmatpush1.bf16.msra.mxu0 0
    %172 = vmatprep.subr.bf16.mxu0 0
    %173 = vmatpush1.bf16.msra.mxu0 0
    %174 = vmatprep.subr.bf16.mxu0 0
    %175 = vmatpush1.bf16.msra.mxu0 0
    %176 = vmatprep.subr.bf16.mxu0 0
    %177 = vmatpush1.bf16.msra.mxu0 0
    %178 = vmatprep.subr.bf16.mxu0 0
    %179 = vmatpush1.bf16.msra.mxu0 0
    %180 = vmatprep.subr.bf16.mxu0 0
    %181 = vmatpush1.bf16.msra.mxu0 0
    %182 = vmatprep.subr.bf16.mxu0 0
    %183 = vmatpush1.bf16.msra.mxu0 0
    %184 = vmatprep.mubr.bf16.mxu0 0
    %185 = vmatmul.mubr.bf16.gmra.mrb[0].mxu0 %v48
    %v186 = vpop.f32.mrb[0].mxu0
    %v187 = vadd.f32 %v70, %v186
    %v188 = vpop.f32.mrb[0].mxu0
    %v189 = vadd.f32 %v70, %v188
    %v190 = vpop.f32.mrb[0].mxu0
    %v191 = vpop.f32.mrb[0].mxu0
    %192 = vdwg.mxu0
    %v193 = vmax.f32 %v187, 0.0
    %v194 = vmax.f32 %v189, 0.0
    %v195 = vpack.c.bf16 %v193, %v193
    %v196 = vpack.c.bf16 %v194, %v194
    %v197 = vld [vmem:[%s3] sm:$0xf]
    %v198 = vld [vmem:[%s3 + $0x4] sm:$0xf]
    %v199 = vld [vmem:[%s3 + $0x8] sm:$0xf]
    %v200 = vld [vmem:[%s3 + $0xc] sm:$0xf]
    %v201 = vld [vmem:[%s3 + $0x10] sm:$0xf]
    %v202 = vld [vmem:[%s3 + $0x14] sm:$0xf]
    %v203 = vld [vmem:[%s3 + $0x18] sm:$0xf]
    %v204 = vld [vmem:[%s3 + $0x1c] sm:$0xf]
    %v205 = vld [vmem:[%s3 + $0x20] sm:$0xf]
    %v206 = vld [vmem:[%s3 + $0x24] sm:$0xf]
    %v207 = vld [vmem:[%s3 + $0x28] sm:$0xf]
    %v208 = vld [vmem:[%s3 + $0x2c] sm:$0xf]
    %v209 = vld [vmem:[%s3 + $0x30] sm:$0xf]
    %v210 = vld [vmem:[%s3 + $0x34] sm:$0xf]
    %v211 = vld [vmem:[%s3 + $0x38] sm:$0xf]
    %v212 = vld [vmem:[%s3 + $0x3c] sm:$0xf]
    %v213 = vld [vmem:[%s3 + $0x40] sm:$0xf]
    %v214 = vld [vmem:[%s3 + $0x44] sm:$0xf]
    %v215 = vld [vmem:[%s3 + $0x48] sm:$0xf]
    %v216 = vld [vmem:[%s3 + $0x4c] sm:$0xf]
    %v217 = vld [vmem:[%s3 + $0x50] sm:$0xf]
    %v218 = vld [vmem:[%s3 + $0x54] sm:$0xf]
    %v219 = vld [vmem:[%s3 + $0x58] sm:$0xf]
    %v220 = vld [vmem:[%s3 + $0x5c] sm:$0xf]
    %v221 = vld [vmem:[%s3 + $0x60] sm:$0xf]
    %v222 = vld [vmem:[%s3 + $0x64] sm:$0xf]
    %v223 = vld [vmem:[%s3 + $0x68] sm:$0xf]
    %v224 = vld [vmem:[%s3 + $0x6c] sm:$0xf]
    %v225 = vld [vmem:[%s3 + $0x70] sm:$0xf]
    %v226 = vld [vmem:[%s3 + $0x74] sm:$0xf]
    %v227 = vld [vmem:[%s3 + $0x78] sm:$0xf]
    %v228 = vld [vmem:[%s3 + $0x7c] sm:$0xf]
    %v261 = vunpack.c.l.b16 %v197
    %v262 = vunpack.c.l.b16 %v198
    %v263 = vunpack.c.l.b16 %v199
    %v264 = vunpack.c.l.b16 %v200
    %v265 = vunpack.c.l.b16 %v201
    %v266 = vunpack.c.l.b16 %v202
    %v267 = vunpack.c.l.b16 %v203
    %v268 = vunpack.c.l.b16 %v204
    %v269 = vunpack.c.l.b16 %v205
    %v270 = vunpack.c.l.b16 %v206
    %v271 = vunpack.c.l.b16 %v207
    %v272 = vunpack.c.l.b16 %v208
    %v273 = vunpack.c.l.b16 %v209
    %v274 = vunpack.c.l.b16 %v210
    %v275 = vunpack.c.l.b16 %v211
    %v276 = vunpack.c.l.b16 %v212
    %v277 = vunpack.c.l.b16 %v213
    %v278 = vunpack.c.l.b16 %v214
    %v279 = vunpack.c.l.b16 %v215
    %v280 = vunpack.c.l.b16 %v216
    %v281 = vunpack.c.l.b16 %v217
    %v282 = vunpack.c.l.b16 %v218
    %v283 = vunpack.c.l.b16 %v219
    %v284 = vunpack.c.l.b16 %v220
    %v285 = vunpack.c.l.b16 %v221
    %v286 = vunpack.c.l.b16 %v222
    %v287 = vunpack.c.l.b16 %v223
    %v288 = vunpack.c.l.b16 %v224
    %v289 = vunpack.c.l.b16 %v225
    %v290 = vunpack.c.l.b16 %v226
    %v291 = vunpack.c.l.b16 %v227
    %v292 = vunpack.c.l.b16 %v228
    %v293 = vpack.c.b16 %v262, %v261
    %v294 = vpack.c.b16 %v264, %v263
    %v295 = vpack.c.b16 %v266, %v265
    %v296 = vpack.c.b16 %v268, %v267
    %v297 = vpack.c.b16 %v270, %v269
    %v298 = vpack.c.b16 %v272, %v271
    %v299 = vpack.c.b16 %v274, %v273
    %v300 = vpack.c.b16 %v276, %v275
    %v301 = vpack.c.b16 %v278, %v277
    %v302 = vpack.c.b16 %v280, %v279
    %v303 = vpack.c.b16 %v282, %v281
    %v304 = vpack.c.b16 %v284, %v283
    %v305 = vpack.c.b16 %v286, %v285
    %v306 = vpack.c.b16 %v288, %v287
    %v307 = vpack.c.b16 %v290, %v289
    %v308 = vpack.c.b16 %v292, %v291
    %325 = vmatprep.subr.bf16.mxu0 0
    %326 = vmatpush1.bf16.msra.mxu0 %v293
    %327 = vmatprep.subr.bf16.mxu0 0
    %328 = vmatpush1.bf16.msra.mxu0 %v294
    %329 = vmatprep.subr.bf16.mxu0 0
    %330 = vmatpush1.bf16.msra.mxu0 %v295
    %331 = vmatprep.subr.bf16.mxu0 0
    %332 = vmatpush1.bf16.msra.mxu0 %v296
    %333 = vmatprep.subr.bf16.mxu0 0
    %334 = vmatpush1.bf16.msra.mxu0 %v297
    %335 = vmatprep.subr.bf16.mxu0 0
    %336 = vmatpush1.bf16.msra.mxu0 %v298
    %337 = vmatprep.subr.bf16.mxu0 0
    %338 = vmatpush1.bf16.msra.mxu0 %v299
    %339 = vmatprep.subr.bf16.mxu0 0
    %340 = vmatpush1.bf16.msra.mxu0 %v300
    %341 = vmatprep.subr.bf16.mxu0 0
    %342 = vmatpush1.bf16.msra.mxu0 %v301
    %343 = vmatprep.subr.bf16.mxu0 0
    %344 = vmatpush1.bf16.msra.mxu0 %v302
    %345 = vmatprep.subr.bf16.mxu0 0
    %346 = vmatpush1.bf16.msra.mxu0 %v303
    %347 = vmatprep.subr.bf16.mxu0 0
    %348 = vmatpush1.bf16.msra.mxu0 %v304
    %349 = vmatprep.subr.bf16.mxu0 0
    %350 = vmatpush1.bf16.msra.mxu0 %v305
    %351 = vmatprep.subr.bf16.mxu0 0
    %352 = vmatpush1.bf16.msra.mxu0 %v306
    %353 = vmatprep.subr.bf16.mxu0 0
    %354 = vmatpush1.bf16.msra.mxu0 %v307
    %355 = vmatprep.subr.bf16.mxu0 0
    %356 = vmatpush1.bf16.msra.mxu0 %v308
    %357 = vmatprep.mubr.bf16.mxu0 %v196
    %358 = vmatmul.mubr.bf16.gmra.mrb[0].mxu0 %v195
    %v359 = vpop.f32.mrb[0].mxu0
    %v360 = vadd.f32 0.0, %v359
    %v361 = vpop.f32.mrb[0].mxu0
    %v362 = vpop.f32.mrb[0].mxu0
    %v363 = vpop.f32.mrb[0].mxu0
    %364 = vdwg.mxu0
    %v365 = vadd.f32 %v50, %v360
    %s366 = scalar_lea.vmem %s3, 128
    %v367 = vld [vmem:[%s366] sm:$0xf]
    %v368 = vld [vmem:[%s366 + $0x4] sm:$0xf]
    %v369 = vld [vmem:[%s366 + $0x8] sm:$0xf]
    %v370 = vld [vmem:[%s366 + $0xc] sm:$0xf]
    %v371 = vld [vmem:[%s366 + $0x10] sm:$0xf]
    %v372 = vld [vmem:[%s366 + $0x14] sm:$0xf]
    %v373 = vld [vmem:[%s366 + $0x18] sm:$0xf]
    %v374 = vld [vmem:[%s366 + $0x1c] sm:$0xf]
    %v375 = vld [vmem:[%s366 + $0x20] sm:$0xf]
    %v376 = vld [vmem:[%s366 + $0x24] sm:$0xf]
    %v377 = vld [vmem:[%s366 + $0x28] sm:$0xf]
    %v378 = vld [vmem:[%s366 + $0x2c] sm:$0xf]
    %v379 = vld [vmem:[%s366 + $0x30] sm:$0xf]
    %v380 = vld [vmem:[%s366 + $0x34] sm:$0xf]
    %v381 = vld [vmem:[%s366 + $0x38] sm:$0xf]
    %v382 = vld [vmem:[%s366 + $0x3c] sm:$0xf]
    %v383 = vld [vmem:[%s366 + $0x40] sm:$0xf]
    %v384 = vld [vmem:[%s366 + $0x44] sm:$0xf]
    %v385 = vld [vmem:[%s366 + $0x48] sm:$0xf]
    %v386 = vld [vmem:[%s366 + $0x4c] sm:$0xf]
    %v387 = vld [vmem:[%s366 + $0x50] sm:$0xf]
    %v388 = vld [vmem:[%s366 + $0x54] sm:$0xf]
    %v389 = vld [vmem:[%s366 + $0x58] sm:$0xf]
    %v390 = vld [vmem:[%s366 + $0x5c] sm:$0xf]
    %v391 = vld [vmem:[%s366 + $0x60] sm:$0xf]
    %v392 = vld [vmem:[%s366 + $0x64] sm:$0xf]
    %v393 = vld [vmem:[%s366 + $0x68] sm:$0xf]
    %v394 = vld [vmem:[%s366 + $0x6c] sm:$0xf]
    %v395 = vld [vmem:[%s366 + $0x70] sm:$0xf]
    %v396 = vld [vmem:[%s366 + $0x74] sm:$0xf]
    %v397 = vld [vmem:[%s366 + $0x78] sm:$0xf]
    %v398 = vld [vmem:[%s366 + $0x7c] sm:$0xf]
    %v400 = vshrl.u32 %v195, 16
    %v403 = vshrl.u32 %v196, 16
    %v439 = vunpack.c.l.b16 %v367
    %v440 = vunpack.c.l.b16 %v368
    %v441 = vunpack.c.l.b16 %v369
    %v442 = vunpack.c.l.b16 %v370
    %v443 = vunpack.c.l.b16 %v371
    %v444 = vunpack.c.l.b16 %v372
    %v445 = vunpack.c.l.b16 %v373
    %v446 = vunpack.c.l.b16 %v374
    %v447 = vunpack.c.l.b16 %v375
    %v448 = vunpack.c.l.b16 %v376
    %v449 = vunpack.c.l.b16 %v377
    %v450 = vunpack.c.l.b16 %v378
    %v451 = vunpack.c.l.b16 %v379
    %v452 = vunpack.c.l.b16 %v380
    %v453 = vunpack.c.l.b16 %v381
    %v454 = vunpack.c.l.b16 %v382
    %v455 = vunpack.c.l.b16 %v383
    %v456 = vunpack.c.l.b16 %v384
    %v457 = vunpack.c.l.b16 %v385
    %v458 = vunpack.c.l.b16 %v386
    %v459 = vunpack.c.l.b16 %v387
    %v460 = vunpack.c.l.b16 %v388
    %v461 = vunpack.c.l.b16 %v389
    %v462 = vunpack.c.l.b16 %v390
    %v463 = vunpack.c.l.b16 %v391
    %v464 = vunpack.c.l.b16 %v392
    %v465 = vunpack.c.l.b16 %v393
    %v466 = vunpack.c.l.b16 %v394
    %v467 = vunpack.c.l.b16 %v395
    %v468 = vunpack.c.l.b16 %v396
    %v469 = vunpack.c.l.b16 %v397
    %v470 = vunpack.c.l.b16 %v398
    %v471 = vpack.c.b16 %v440, %v439
    %v472 = vpack.c.b16 %v442, %v441
    %v473 = vpack.c.b16 %v444, %v443
    %v474 = vpack.c.b16 %v446, %v445
    %v475 = vpack.c.b16 %v448, %v447
    %v476 = vpack.c.b16 %v450, %v449
    %v477 = vpack.c.b16 %v452, %v451
    %v478 = vpack.c.b16 %v454, %v453
    %v479 = vpack.c.b16 %v456, %v455
    %v480 = vpack.c.b16 %v458, %v457
    %v481 = vpack.c.b16 %v460, %v459
    %v482 = vpack.c.b16 %v462, %v461
    %v483 = vpack.c.b16 %v464, %v463
    %v484 = vpack.c.b16 %v466, %v465
    %v485 = vpack.c.b16 %v468, %v467
    %v486 = vpack.c.b16 %v470, %v469
    %503 = vmatprep.subr.bf16.mxu0 0
    %504 = vmatpush1.bf16.msra.mxu0 %v471
    %505 = vmatprep.subr.bf16.mxu0 0
    %506 = vmatpush1.bf16.msra.mxu0 %v472
    %507 = vmatprep.subr.bf16.mxu0 0
    %508 = vmatpush1.bf16.msra.mxu0 %v473
    %509 = vmatprep.subr.bf16.mxu0 0
    %510 = vmatpush1.bf16.msra.mxu0 %v474
    %511 = vmatprep.subr.bf16.mxu0 0
    %512 = vmatpush1.bf16.msra.mxu0 %v475
    %513 = vmatprep.subr.bf16.mxu0 0
    %514 = vmatpush1.bf16.msra.mxu0 %v476
    %515 = vmatprep.subr.bf16.mxu0 0
    %516 = vmatpush1.bf16.msra.mxu0 %v477
    %517 = vmatprep.subr.bf16.mxu0 0
    %518 = vmatpush1.bf16.msra.mxu0 %v478
    %519 = vmatprep.subr.bf16.mxu0 0
    %520 = vmatpush1.bf16.msra.mxu0 %v479
    %521 = vmatprep.subr.bf16.mxu0 0
    %522 = vmatpush1.bf16.msra.mxu0 %v480
    %523 = vmatprep.subr.bf16.mxu0 0
    %524 = vmatpush1.bf16.msra.mxu0 %v481
    %525 = vmatprep.subr.bf16.mxu0 0
    %526 = vmatpush1.bf16.msra.mxu0 %v482
    %527 = vmatprep.subr.bf16.mxu0 0
    %528 = vmatpush1.bf16.msra.mxu0 %v483
    %529 = vmatprep.subr.bf16.mxu0 0
    %530 = vmatpush1.bf16.msra.mxu0 %v484
    %531 = vmatprep.subr.bf16.mxu0 0
    %532 = vmatpush1.bf16.msra.mxu0 %v485
    %533 = vmatprep.subr.bf16.mxu0 0
    %534 = vmatpush1.bf16.msra.mxu0 %v486
    %535 = vmatprep.mubr.bf16.mxu0 %v403
    %536 = vmatmul.mubr.bf16.gmra.mrb[0].mxu0 %v400
    %v537 = vpop.f32.mrb[0].mxu0
    %v538 = vadd.f32 0.0, %v537
    %v539 = vpop.f32.mrb[0].mxu0
    %v540 = vpop.f32.mrb[0].mxu0
    %v541 = vpop.f32.mrb[0].mxu0
    %542 = vdwg.mxu0
    %v543 = vadd.f32 %v365, %v538
    %s544 = scalar_lea.vmem %s3, 256
    %v545 = vld [vmem:[%s544] sm:$0xf]
    %v546 = vld [vmem:[%s544 + $0x4] sm:$0xf]
    %v547 = vld [vmem:[%s544 + $0x8] sm:$0xf]
    %v548 = vld [vmem:[%s544 + $0xc] sm:$0xf]
    %v549 = vld [vmem:[%s544 + $0x10] sm:$0xf]
    %v550 = vld [vmem:[%s544 + $0x14] sm:$0xf]
    %v551 = vld [vmem:[%s544 + $0x18] sm:$0xf]
    %v552 = vld [vmem:[%s544 + $0x1c] sm:$0xf]
    %v553 = vld [vmem:[%s544 + $0x20] sm:$0xf]
    %v554 = vld [vmem:[%s544 + $0x24] sm:$0xf]
    %v555 = vld [vmem:[%s544 + $0x28] sm:$0xf]
    %v556 = vld [vmem:[%s544 + $0x2c] sm:$0xf]
    %v557 = vld [vmem:[%s544 + $0x30] sm:$0xf]
    %v558 = vld [vmem:[%s544 + $0x34] sm:$0xf]
    %v559 = vld [vmem:[%s544 + $0x38] sm:$0xf]
    %v560 = vld [vmem:[%s544 + $0x3c] sm:$0xf]
    %v561 = vld [vmem:[%s544 + $0x40] sm:$0xf]
    %v562 = vld [vmem:[%s544 + $0x44] sm:$0xf]
    %v563 = vld [vmem:[%s544 + $0x48] sm:$0xf]
    %v564 = vld [vmem:[%s544 + $0x4c] sm:$0xf]
    %v565 = vld [vmem:[%s544 + $0x50] sm:$0xf]
    %v566 = vld [vmem:[%s544 + $0x54] sm:$0xf]
    %v567 = vld [vmem:[%s544 + $0x58] sm:$0xf]
    %v568 = vld [vmem:[%s544 + $0x5c] sm:$0xf]
    %v569 = vld [vmem:[%s544 + $0x60] sm:$0xf]
    %v570 = vld [vmem:[%s544 + $0x64] sm:$0xf]
    %v571 = vld [vmem:[%s544 + $0x68] sm:$0xf]
    %v572 = vld [vmem:[%s544 + $0x6c] sm:$0xf]
    %v573 = vld [vmem:[%s544 + $0x70] sm:$0xf]
    %v574 = vld [vmem:[%s544 + $0x74] sm:$0xf]
    %v575 = vld [vmem:[%s544 + $0x78] sm:$0xf]
    %v576 = vld [vmem:[%s544 + $0x7c] sm:$0xf]
    %v579 = vrot.slane %v195, 1
    %v580 = vrot.slane %v196, 1
    %v615 = vunpack.c.l.b16 %v545
    %v616 = vunpack.c.l.b16 %v546
    %v617 = vunpack.c.l.b16 %v547
    %v618 = vunpack.c.l.b16 %v548
    %v619 = vunpack.c.l.b16 %v549
    %v620 = vunpack.c.l.b16 %v550
    %v621 = vunpack.c.l.b16 %v551
    %v622 = vunpack.c.l.b16 %v552
    %v623 = vunpack.c.l.b16 %v553
    %v624 = vunpack.c.l.b16 %v554
    %v625 = vunpack.c.l.b16 %v555
    %v626 = vunpack.c.l.b16 %v556
    %v627 = vunpack.c.l.b16 %v557
    %v628 = vunpack.c.l.b16 %v558
    %v629 = vunpack.c.l.b16 %v559
    %v630 = vunpack.c.l.b16 %v560
    %v631 = vunpack.c.l.b16 %v561
    %v632 = vunpack.c.l.b16 %v562
    %v633 = vunpack.c.l.b16 %v563
    %v634 = vunpack.c.l.b16 %v564
    %v635 = vunpack.c.l.b16 %v565
    %v636 = vunpack.c.l.b16 %v566
    %v637 = vunpack.c.l.b16 %v567
    %v638 = vunpack.c.l.b16 %v568
    %v639 = vunpack.c.l.b16 %v569
    %v640 = vunpack.c.l.b16 %v570
    %v641 = vunpack.c.l.b16 %v571
    %v642 = vunpack.c.l.b16 %v572
    %v643 = vunpack.c.l.b16 %v573
    %v644 = vunpack.c.l.b16 %v574
    %v645 = vunpack.c.l.b16 %v575
    %v646 = vunpack.c.l.b16 %v576
    %v647 = vpack.c.b16 %v616, %v615
    %v648 = vpack.c.b16 %v618, %v617
    %v649 = vpack.c.b16 %v620, %v619
    %v650 = vpack.c.b16 %v622, %v621
    %v651 = vpack.c.b16 %v624, %v623
    %v652 = vpack.c.b16 %v626, %v625
    %v653 = vpack.c.b16 %v628, %v627
    %v654 = vpack.c.b16 %v630, %v629
    %v655 = vpack.c.b16 %v632, %v631
    %v656 = vpack.c.b16 %v634, %v633
    %v657 = vpack.c.b16 %v636, %v635
    %v658 = vpack.c.b16 %v638, %v637
    %v659 = vpack.c.b16 %v640, %v639
    %v660 = vpack.c.b16 %v642, %v641
    %v661 = vpack.c.b16 %v644, %v643
    %v662 = vpack.c.b16 %v646, %v645
    %679 = vmatprep.subr.bf16.mxu0 0
    %680 = vmatpush1.bf16.msra.mxu0 %v647
    %681 = vmatprep.subr.bf16.mxu0 0
    %682 = vmatpush1.bf16.msra.mxu0 %v648
    %683 = vmatprep.subr.bf16.mxu0 0
    %684 = vmatpush1.bf16.msra.mxu0 %v649
    %685 = vmatprep.subr.bf16.mxu0 0
    %686 = vmatpush1.bf16.msra.mxu0 %v650
    %687 = vmatprep.subr.bf16.mxu0 0
    %688 = vmatpush1.bf16.msra.mxu0 %v651
    %689 = vmatprep.subr.bf16.mxu0 0
    %690 = vmatpush1.bf16.msra.mxu0 %v652
    %691 = vmatprep.subr.bf16.mxu0 0
    %692 = vmatpush1.bf16.msra.mxu0 %v653
    %693 = vmatprep.subr.bf16.mxu0 0
    %694 = vmatpush1.bf16.msra.mxu0 %v654
    %695 = vmatprep.subr.bf16.mxu0 0
    %696 = vmatpush1.bf16.msra.mxu0 %v655
    %697 = vmatprep.subr.bf16.mxu0 0
    %698 = vmatpush1.bf16.msra.mxu0 %v656
    %699 = vmatprep.subr.bf16.mxu0 0
    %700 = vmatpush1.bf16.msra.mxu0 %v657
    %701 = vmatprep.subr.bf16.mxu0 0
    %702 = vmatpush1.bf16.msra.mxu0 %v658
    %703 = vmatprep.subr.bf16.mxu0 0
    %704 = vmatpush1.bf16.msra.mxu0 %v659
    %705 = vmatprep.subr.bf16.mxu0 0
    %706 = vmatpush1.bf16.msra.mxu0 %v660
    %707 = vmatprep.subr.bf16.mxu0 0
    %708 = vmatpush1.bf16.msra.mxu0 %v661
    %709 = vmatprep.subr.bf16.mxu0 0
    %710 = vmatpush1.bf16.msra.mxu0 %v662
    %711 = vmatprep.mubr.bf16.mxu0 %v580
    %712 = vmatmul.mubr.bf16.gmra.mrb[0].mxu0 %v579
    %v713 = vpop.f32.mrb[0].mxu0
    %v714 = vadd.f32 0.0, %v713
    %v715 = vpop.f32.mrb[0].mxu0
    %v716 = vpop.f32.mrb[0].mxu0
    %v717 = vpop.f32.mrb[0].mxu0
    %718 = vdwg.mxu0
    %v719 = vadd.f32 %v543, %v714
    %s720 = scalar_lea.vmem %s3, 384
    %v721 = vld [vmem:[%s720] sm:$0xf]
    %v722 = vld [vmem:[%s720 + $0x4] sm:$0xf]
    %v723 = vld [vmem:[%s720 + $0x8] sm:$0xf]
    %v724 = vld [vmem:[%s720 + $0xc] sm:$0xf]
    %v725 = vld [vmem:[%s720 + $0x10] sm:$0xf]
    %v726 = vld [vmem:[%s720 + $0x14] sm:$0xf]
    %v727 = vld [vmem:[%s720 + $0x18] sm:$0xf]
    %v728 = vld [vmem:[%s720 + $0x1c] sm:$0xf]
    %v729 = vld [vmem:[%s720 + $0x20] sm:$0xf]
    %v730 = vld [vmem:[%s720 + $0x24] sm:$0xf]
    %v731 = vld [vmem:[%s720 + $0x28] sm:$0xf]
    %v732 = vld [vmem:[%s720 + $0x2c] sm:$0xf]
    %v733 = vld [vmem:[%s720 + $0x30] sm:$0xf]
    %v734 = vld [vmem:[%s720 + $0x34] sm:$0xf]
    %v735 = vld [vmem:[%s720 + $0x38] sm:$0xf]
    %v736 = vld [vmem:[%s720 + $0x3c] sm:$0xf]
    %v737 = vld [vmem:[%s720 + $0x40] sm:$0xf]
    %v738 = vld [vmem:[%s720 + $0x44] sm:$0xf]
    %v739 = vld [vmem:[%s720 + $0x48] sm:$0xf]
    %v740 = vld [vmem:[%s720 + $0x4c] sm:$0xf]
    %v741 = vld [vmem:[%s720 + $0x50] sm:$0xf]
    %v742 = vld [vmem:[%s720 + $0x54] sm:$0xf]
    %v743 = vld [vmem:[%s720 + $0x58] sm:$0xf]
    %v744 = vld [vmem:[%s720 + $0x5c] sm:$0xf]
    %v745 = vld [vmem:[%s720 + $0x60] sm:$0xf]
    %v746 = vld [vmem:[%s720 + $0x64] sm:$0xf]
    %v747 = vld [vmem:[%s720 + $0x68] sm:$0xf]
    %v748 = vld [vmem:[%s720 + $0x6c] sm:$0xf]
    %v749 = vld [vmem:[%s720 + $0x70] sm:$0xf]
    %v750 = vld [vmem:[%s720 + $0x74] sm:$0xf]
    %v751 = vld [vmem:[%s720 + $0x78] sm:$0xf]
    %v752 = vld [vmem:[%s720 + $0x7c] sm:$0xf]
    %v753 = vrot.slane %v400, 1
    %v754 = vrot.slane %v403, 1
    %v789 = vunpack.c.l.b16 %v721
    %v790 = vunpack.c.l.b16 %v722
    %v791 = vunpack.c.l.b16 %v723
    %v792 = vunpack.c.l.b16 %v724
    %v793 = vunpack.c.l.b16 %v725
    %v794 = vunpack.c.l.b16 %v726
    %v795 = vunpack.c.l.b16 %v727
    %v796 = vunpack.c.l.b16 %v728
    %v797 = vunpack.c.l.b16 %v729
    %v798 = vunpack.c.l.b16 %v730
    %v799 = vunpack.c.l.b16 %v731
    %v800 = vunpack.c.l.b16 %v732
    %v801 = vunpack.c.l.b16 %v733
    %v802 = vunpack.c.l.b16 %v734
    %v803 = vunpack.c.l.b16 %v735
    %v804 = vunpack.c.l.b16 %v736
    %v805 = vunpack.c.l.b16 %v737
    %v806 = vunpack.c.l.b16 %v738
    %v807 = vunpack.c.l.b16 %v739
    %v808 = vunpack.c.l.b16 %v740
    %v809 = vunpack.c.l.b16 %v741
    %v810 = vunpack.c.l.b16 %v742
    %v811 = vunpack.c.l.b16 %v743
    %v812 = vunpack.c.l.b16 %v744
    %v813 = vunpack.c.l.b16 %v745
    %v814 = vunpack.c.l.b16 %v746
    %v815 = vunpack.c.l.b16 %v747
    %v816 = vunpack.c.l.b16 %v748
    %v817 = vunpack.c.l.b16 %v749
    %v818 = vunpack.c.l.b16 %v750
    %v819 = vunpack.c.l.b16 %v751
    %v820 = vunpack.c.l.b16 %v752
    %v821 = vpack.c.b16 %v790, %v789
    %v822 = vpack.c.b16 %v792, %v791
    %v823 = vpack.c.b16 %v794, %v793
    %v824 = vpack.c.b16 %v796, %v795
    %v825 = vpack.c.b16 %v798, %v797
    %v826 = vpack.c.b16 %v800, %v799
    %v827 = vpack.c.b16 %v802, %v801
    %v828 = vpack.c.b16 %v804, %v803
    %v829 = vpack.c.b16 %v806, %v805
    %v830 = vpack.c.b16 %v808, %v807
    %v831 = vpack.c.b16 %v810, %v809
    %v832 = vpack.c.b16 %v812, %v811
    %v833 = vpack.c.b16 %v814, %v813
    %v834 = vpack.c.b16 %v816, %v815
    %v835 = vpack.c.b16 %v818, %v817
    %v836 = vpack.c.b16 %v820, %v819
    %853 = vmatprep.subr.bf16.mxu0 0
    %854 = vmatpush1.bf16.msra.mxu0 %v821
    %855 = vmatprep.subr.bf16.mxu0 0
    %856 = vmatpush1.bf16.msra.mxu0 %v822
    %857 = vmatprep.subr.bf16.mxu0 0
    %858 = vmatpush1.bf16.msra.mxu0 %v823
    %859 = vmatprep.subr.bf16.mxu0 0
    %860 = vmatpush1.bf16.msra.mxu0 %v824
    %861 = vmatprep.subr.bf16.mxu0 0
    %862 = vmatpush1.bf16.msra.mxu0 %v825
    %863 = vmatprep.subr.bf16.mxu0 0
    %864 = vmatpush1.bf16.msra.mxu0 %v826
    %865 = vmatprep.subr.bf16.mxu0 0
    %866 = vmatpush1.bf16.msra.mxu0 %v827
    %867 = vmatprep.subr.bf16.mxu0 0
    %868 = vmatpush1.bf16.msra.mxu0 %v828
    %869 = vmatprep.subr.bf16.mxu0 0
    %870 = vmatpush1.bf16.msra.mxu0 %v829
    %871 = vmatprep.subr.bf16.mxu0 0
    %872 = vmatpush1.bf16.msra.mxu0 %v830
    %873 = vmatprep.subr.bf16.mxu0 0
    %874 = vmatpush1.bf16.msra.mxu0 %v831
    %875 = vmatprep.subr.bf16.mxu0 0
    %876 = vmatpush1.bf16.msra.mxu0 %v832
    %877 = vmatprep.subr.bf16.mxu0 0
    %878 = vmatpush1.bf16.msra.mxu0 %v833
    %879 = vmatprep.subr.bf16.mxu0 0
    %880 = vmatpush1.bf16.msra.mxu0 %v834
    %881 = vmatprep.subr.bf16.mxu0 0
    %882 = vmatpush1.bf16.msra.mxu0 %v835
    %883 = vmatprep.subr.bf16.mxu0 0
    %884 = vmatpush1.bf16.msra.mxu0 %v836
    %885 = vmatprep.mubr.bf16.mxu0 %v754
    %886 = vmatmul.mubr.bf16.gmra.mrb[0].mxu0 %v753
    %v887 = vpop.f32.mrb[0].mxu0
    %v888 = vadd.f32 0.0, %v887
    %v889 = vpop.f32.mrb[0].mxu0
    %v890 = vpop.f32.mrb[0].mxu0
    %v891 = vpop.f32.mrb[0].mxu0
    %892 = vdwg.mxu0
    %v893 = vadd.f32 %v719, %v888
    %s894 = scalar_lea.vmem %s3, 512
    %v895 = vld [vmem:[%s894] sm:$0xf]
    %v896 = vld [vmem:[%s894 + $0x4] sm:$0xf]
    %v897 = vld [vmem:[%s894 + $0x8] sm:$0xf]
    %v898 = vld [vmem:[%s894 + $0xc] sm:$0xf]
    %v899 = vld [vmem:[%s894 + $0x10] sm:$0xf]
    %v900 = vld [vmem:[%s894 + $0x14] sm:$0xf]
    %v901 = vld [vmem:[%s894 + $0x18] sm:$0xf]
    %v902 = vld [vmem:[%s894 + $0x1c] sm:$0xf]
    %v903 = vld [vmem:[%s894 + $0x20] sm:$0xf]
    %v904 = vld [vmem:[%s894 + $0x24] sm:$0xf]
    %v905 = vld [vmem:[%s894 + $0x28] sm:$0xf]
    %v906 = vld [vmem:[%s894 + $0x2c] sm:$0xf]
    %v907 = vld [vmem:[%s894 + $0x30] sm:$0xf]
    %v908 = vld [vmem:[%s894 + $0x34] sm:$0xf]
    %v909 = vld [vmem:[%s894 + $0x38] sm:$0xf]
    %v910 = vld [vmem:[%s894 + $0x3c] sm:$0xf]
    %v911 = vld [vmem:[%s894 + $0x40] sm:$0xf]
    %v912 = vld [vmem:[%s894 + $0x44] sm:$0xf]
    %v913 = vld [vmem:[%s894 + $0x48] sm:$0xf]
    %v914 = vld [vmem:[%s894 + $0x4c] sm:$0xf]
    %v915 = vld [vmem:[%s894 + $0x50] sm:$0xf]
    %v916 = vld [vmem:[%s894 + $0x54] sm:$0xf]
    %v917 = vld [vmem:[%s894 + $0x58] sm:$0xf]
    %v918 = vld [vmem:[%s894 + $0x5c] sm:$0xf]
    %v919 = vld [vmem:[%s894 + $0x60] sm:$0xf]
    %v920 = vld [vmem:[%s894 + $0x64] sm:$0xf]
    %v921 = vld [vmem:[%s894 + $0x68] sm:$0xf]
    %v922 = vld [vmem:[%s894 + $0x6c] sm:$0xf]
    %v923 = vld [vmem:[%s894 + $0x70] sm:$0xf]
    %v924 = vld [vmem:[%s894 + $0x74] sm:$0xf]
    %v925 = vld [vmem:[%s894 + $0x78] sm:$0xf]
    %v926 = vld [vmem:[%s894 + $0x7c] sm:$0xf]
    %v927 = vrot.slane %v195, 2
    %v928 = vrot.slane %v196, 2
    %v963 = vunpack.c.l.b16 %v895
    %v964 = vunpack.c.l.b16 %v896
    %v965 = vunpack.c.l.b16 %v897
    %v966 = vunpack.c.l.b16 %v898
    %v967 = vunpack.c.l.b16 %v899
    %v968 = vunpack.c.l.b16 %v900
    %v969 = vunpack.c.l.b16 %v901
    %v970 = vunpack.c.l.b16 %v902
    %v971 = vunpack.c.l.b16 %v903
    %v972 = vunpack.c.l.b16 %v904
    %v973 = vunpack.c.l.b16 %v905
    %v974 = vunpack.c.l.b16 %v906
    %v975 = vunpack.c.l.b16 %v907
    %v976 = vunpack.c.l.b16 %v908
    %v977 = vunpack.c.l.b16 %v909
    %v978 = vunpack.c.l.b16 %v910
    %v979 = vunpack.c.l.b16 %v911
    %v980 = vunpack.c.l.b16 %v912
    %v981 = vunpack.c.l.b16 %v913
    %v982 = vunpack.c.l.b16 %v914
    %v983 = vunpack.c.l.b16 %v915
    %v984 = vunpack.c.l.b16 %v916
    %v985 = vunpack.c.l.b16 %v917
    %v986 = vunpack.c.l.b16 %v918
    %v987 = vunpack.c.l.b16 %v919
    %v988 = vunpack.c.l.b16 %v920
    %v989 = vunpack.c.l.b16 %v921
    %v990 = vunpack.c.l.b16 %v922
    %v991 = vunpack.c.l.b16 %v923
    %v992 = vunpack.c.l.b16 %v924
    %v993 = vunpack.c.l.b16 %v925
    %v994 = vunpack.c.l.b16 %v926
    %v995 = vpack.c.b16 %v964, %v963
    %v996 = vpack.c.b16 %v966, %v965
    %v997 = vpack.c.b16 %v968, %v967
    %v998 = vpack.c.b16 %v970, %v969
    %v999 = vpack.c.b16 %v972, %v971
    %v1000 = vpack.c.b16 %v974, %v973
    %v1001 = vpack.c.b16 %v976, %v975
    %v1002 = vpack.c.b16 %v978, %v977
    %v1003 = vpack.c.b16 %v980, %v979
    %v1004 = vpack.c.b16 %v982, %v981
    %v1005 = vpack.c.b16 %v984, %v983
    %v1006 = vpack.c.b16 %v986, %v985
    %v1007 = vpack.c.b16 %v988, %v987
    %v1008 = vpack.c.b16 %v990, %v989
    %v1009 = vpack.c.b16 %v992, %v991
    %v1010 = vpack.c.b16 %v994, %v993
    %1027 = vmatprep.subr.bf16.mxu0 0
    %1028 = vmatpush1.bf16.msra.mxu0 %v995
    %1029 = vmatprep.subr.bf16.mxu0 0
    %1030 = vmatpush1.bf16.msra.mxu0 %v996
    %1031 = vmatprep.subr.bf16.mxu0 0
    %1032 = vmatpush1.bf16.msra.mxu0 %v997
    %1033 = vmatprep.subr.bf16.mxu0 0
    %1034 = vmatpush1.bf16.msra.mxu0 %v998
    %1035 = vmatprep.subr.bf16.mxu0 0
    %1036 = vmatpush1.bf16.msra.mxu0 %v999
    %1037 = vmatprep.subr.bf16.mxu0 0
    %1038 = vmatpush1.bf16.msra.mxu0 %v1000
    %1039 = vmatprep.subr.bf16.mxu0 0
    %1040 = vmatpush1.bf16.msra.mxu0 %v1001
    %1041 = vmatprep.subr.bf16.mxu0 0
    %1042 = vmatpush1.bf16.msra.mxu0 %v1002
    %1043 = vmatprep.subr.bf16.mxu0 0
    %1044 = vmatpush1.bf16.msra.mxu0 %v1003
    %1045 = vmatprep.subr.bf16.mxu0 0
    %1046 = vmatpush1.bf16.msra.mxu0 %v1004
    %1047 = vmatprep.subr.bf16.mxu0 0
    %1048 = vmatpush1.bf16.msra.mxu0 %v1005
    %1049 = vmatprep.subr.bf16.mxu0 0
    %1050 = vmatpush1.bf16.msra.mxu0 %v1006
    %1051 = vmatprep.subr.bf16.mxu0 0
    %1052 = vmatpush1.bf16.msra.mxu0 %v1007
    %1053 = vmatprep.subr.bf16.mxu0 0
    %1054 = vmatpush1.bf16.msra.mxu0 %v1008
    %1055 = vmatprep.subr.bf16.mxu0 0
    %1056 = vmatpush1.bf16.msra.mxu0 %v1009
    %1057 = vmatprep.subr.bf16.mxu0 0
    %1058 = vmatpush1.bf16.msra.mxu0 %v1010
    %1059 = vmatprep.mubr.bf16.mxu0 %v928
    %1060 = vmatmul.mubr.bf16.gmra.mrb[0].mxu0 %v927
    %v1061 = vpop.f32.mrb[0].mxu0
    %v1062 = vadd.f32 0.0, %v1061
    %v1063 = vpop.f32.mrb[0].mxu0
    %v1064 = vpop.f32.mrb[0].mxu0
    %v1065 = vpop.f32.mrb[0].mxu0
    %1066 = vdwg.mxu0
    %v1067 = vadd.f32 %v893, %v1062
    %s1068 = scalar_lea.vmem %s3, 640
    %v1069 = vld [vmem:[%s1068] sm:$0xf]
    %v1070 = vld [vmem:[%s1068 + $0x4] sm:$0xf]
    %v1071 = vld [vmem:[%s1068 + $0x8] sm:$0xf]
    %v1072 = vld [vmem:[%s1068 + $0xc] sm:$0xf]
    %v1073 = vld [vmem:[%s1068 + $0x10] sm:$0xf]
    %v1074 = vld [vmem:[%s1068 + $0x14] sm:$0xf]
    %v1075 = vld [vmem:[%s1068 + $0x18] sm:$0xf]
    %v1076 = vld [vmem:[%s1068 + $0x1c] sm:$0xf]
    %v1077 = vld [vmem:[%s1068 + $0x20] sm:$0xf]
    %v1078 = vld [vmem:[%s1068 + $0x24] sm:$0xf]
    %v1079 = vld [vmem:[%s1068 + $0x28] sm:$0xf]
    %v1080 = vld [vmem:[%s1068 + $0x2c] sm:$0xf]
    %v1081 = vld [vmem:[%s1068 + $0x30] sm:$0xf]
    %v1082 = vld [vmem:[%s1068 + $0x34] sm:$0xf]
    %v1083 = vld [vmem:[%s1068 + $0x38] sm:$0xf]
    %v1084 = vld [vmem:[%s1068 + $0x3c] sm:$0xf]
    %v1085 = vld [vmem:[%s1068 + $0x40] sm:$0xf]
    %v1086 = vld [vmem:[%s1068 + $0x44] sm:$0xf]
    %v1087 = vld [vmem:[%s1068 + $0x48] sm:$0xf]
    %v1088 = vld [vmem:[%s1068 + $0x4c] sm:$0xf]
    %v1089 = vld [vmem:[%s1068 + $0x50] sm:$0xf]
    %v1090 = vld [vmem:[%s1068 + $0x54] sm:$0xf]
    %v1091 = vld [vmem:[%s1068 + $0x58] sm:$0xf]
    %v1092 = vld [vmem:[%s1068 + $0x5c] sm:$0xf]
    %v1093 = vld [vmem:[%s1068 + $0x60] sm:$0xf]
    %v1094 = vld [vmem:[%s1068 + $0x64] sm:$0xf]
    %v1095 = vld [vmem:[%s1068 + $0x68] sm:$0xf]
    %v1096 = vld [vmem:[%s1068 + $0x6c] sm:$0xf]
    %v1097 = vld [vmem:[%s1068 + $0x70] sm:$0xf]
    %v1098 = vld [vmem:[%s1068 + $0x74] sm:$0xf]
    %v1099 = vld [vmem:[%s1068 + $0x78] sm:$0xf]
    %v1100 = vld [vmem:[%s1068 + $0x7c] sm:$0xf]
    %v1101 = vrot.slane %v400, 2
    %v1102 = vrot.slane %v403, 2
    %v1137 = vunpack.c.l.b16 %v1069
    %v1138 = vunpack.c.l.b16 %v1070
    %v1139 = vunpack.c.l.b16 %v1071
    %v1140 = vunpack.c.l.b16 %v1072
    %v1141 = vunpack.c.l.b16 %v1073
    %v1142 = vunpack.c.l.b16 %v1074
    %v1143 = vunpack.c.l.b16 %v1075
    %v1144 = vunpack.c.l.b16 %v1076
    %v1145 = vunpack.c.l.b16 %v1077
    %v1146 = vunpack.c.l.b16 %v1078
    %v1147 = vunpack.c.l.b16 %v1079
    %v1148 = vunpack.c.l.b16 %v1080
    %v1149 = vunpack.c.l.b16 %v1081
    %v1150 = vunpack.c.l.b16 %v1082
    %v1151 = vunpack.c.l.b16 %v1083
    %v1152 = vunpack.c.l.b16 %v1084
    %v1153 = vunpack.c.l.b16 %v1085
    %v1154 = vunpack.c.l.b16 %v1086
    %v1155 = vunpack.c.l.b16 %v1087
    %v1156 = vunpack.c.l.b16 %v1088
    %v1157 = vunpack.c.l.b16 %v1089
    %v1158 = vunpack.c.l.b16 %v1090
    %v1159 = vunpack.c.l.b16 %v1091
    %v1160 = vunpack.c.l.b16 %v1092
    %v1161 = vunpack.c.l.b16 %v1093
    %v1162 = vunpack.c.l.b16 %v1094
    %v1163 = vunpack.c.l.b16 %v1095
    %v1164 = vunpack.c.l.b16 %v1096
    %v1165 = vunpack.c.l.b16 %v1097
    %v1166 = vunpack.c.l.b16 %v1098
    %v1167 = vunpack.c.l.b16 %v1099
    %v1168 = vunpack.c.l.b16 %v1100
    %v1169 = vpack.c.b16 %v1138, %v1137
    %v1170 = vpack.c.b16 %v1140, %v1139
    %v1171 = vpack.c.b16 %v1142, %v1141
    %v1172 = vpack.c.b16 %v1144, %v1143
    %v1173 = vpack.c.b16 %v1146, %v1145
    %v1174 = vpack.c.b16 %v1148, %v1147
    %v1175 = vpack.c.b16 %v1150, %v1149
    %v1176 = vpack.c.b16 %v1152, %v1151
    %v1177 = vpack.c.b16 %v1154, %v1153
    %v1178 = vpack.c.b16 %v1156, %v1155
    %v1179 = vpack.c.b16 %v1158, %v1157
    %v1180 = vpack.c.b16 %v1160, %v1159
    %v1181 = vpack.c.b16 %v1162, %v1161
    %v1182 = vpack.c.b16 %v1164, %v1163
    %v1183 = vpack.c.b16 %v1166, %v1165
    %v1184 = vpack.c.b16 %v1168, %v1167
    %1201 = vmatprep.subr.bf16.mxu0 0
    %1202 = vmatpush1.bf16.msra.mxu0 %v1169
    %1203 = vmatprep.subr.bf16.mxu0 0
    %1204 = vmatpush1.bf16.msra.mxu0 %v1170
    %1205 = vmatprep.subr.bf16.mxu0 0
    %1206 = vmatpush1.bf16.msra.mxu0 %v1171
    %1207 = vmatprep.subr.bf16.mxu0 0
    %1208 = vmatpush1.bf16.msra.mxu0 %v1172
    %1209 = vmatprep.subr.bf16.mxu0 0
    %1210 = vmatpush1.bf16.msra.mxu0 %v1173
    %1211 = vmatprep.subr.bf16.mxu0 0
    %1212 = vmatpush1.bf16.msra.mxu0 %v1174
    %1213 = vmatprep.subr.bf16.mxu0 0
    %1214 = vmatpush1.bf16.msra.mxu0 %v1175
    %1215 = vmatprep.subr.bf16.mxu0 0
    %1216 = vmatpush1.bf16.msra.mxu0 %v1176
    %1217 = vmatprep.subr.bf16.mxu0 0
    %1218 = vmatpush1.bf16.msra.mxu0 %v1177
    %1219 = vmatprep.subr.bf16.mxu0 0
    %1220 = vmatpush1.bf16.msra.mxu0 %v1178
    %1221 = vmatprep.subr.bf16.mxu0 0
    %1222 = vmatpush1.bf16.msra.mxu0 %v1179
    %1223 = vmatprep.subr.bf16.mxu0 0
    %1224 = vmatpush1.bf16.msra.mxu0 %v1180
    %1225 = vmatprep.subr.bf16.mxu0 0
    %1226 = vmatpush1.bf16.msra.mxu0 %v1181
    %1227 = vmatprep.subr.bf16.mxu0 0
    %1228 = vmatpush1.bf16.msra.mxu0 %v1182
    %1229 = vmatprep.subr.bf16.mxu0 0
    %1230 = vmatpush1.bf16.msra.mxu0 %v1183
    %1231 = vmatprep.subr.bf16.mxu0 0
    %1232 = vmatpush1.bf16.msra.mxu0 %v1184
    %1233 = vmatprep.mubr.bf16.mxu0 %v1102
    %1234 = vmatmul.mubr.bf16.gmra.mrb[0].mxu0 %v1101
    %v1235 = vpop.f32.mrb[0].mxu0
    %v1236 = vadd.f32 0.0, %v1235
    %v1237 = vpop.f32.mrb[0].mxu0
    %v1238 = vpop.f32.mrb[0].mxu0
    %v1239 = vpop.f32.mrb[0].mxu0
    %1240 = vdwg.mxu0
    %v1241 = vadd.f32 %v1067, %v1236
    %s1242 = scalar_lea.vmem %s3, 768
    %v1243 = vld [vmem:[%s1242] sm:$0xf]
    %v1244 = vld [vmem:[%s1242 + $0x4] sm:$0xf]
    %v1245 = vld [vmem:[%s1242 + $0x8] sm:$0xf]
    %v1246 = vld [vmem:[%s1242 + $0xc] sm:$0xf]
    %v1247 = vld [vmem:[%s1242 + $0x10] sm:$0xf]
    %v1248 = vld [vmem:[%s1242 + $0x14] sm:$0xf]
    %v1249 = vld [vmem:[%s1242 + $0x18] sm:$0xf]
    %v1250 = vld [vmem:[%s1242 + $0x1c] sm:$0xf]
    %v1251 = vld [vmem:[%s1242 + $0x20] sm:$0xf]
    %v1252 = vld [vmem:[%s1242 + $0x24] sm:$0xf]
    %v1253 = vld [vmem:[%s1242 + $0x28] sm:$0xf]
    %v1254 = vld [vmem:[%s1242 + $0x2c] sm:$0xf]
    %v1255 = vld [vmem:[%s1242 + $0x30] sm:$0xf]
    %v1256 = vld [vmem:[%s1242 + $0x34] sm:$0xf]
    %v1257 = vld [vmem:[%s1242 + $0x38] sm:$0xf]
    %v1258 = vld [vmem:[%s1242 + $0x3c] sm:$0xf]
    %v1259 = vld [vmem:[%s1242 + $0x40] sm:$0xf]
    %v1260 = vld [vmem:[%s1242 + $0x44] sm:$0xf]
    %v1261 = vld [vmem:[%s1242 + $0x48] sm:$0xf]
    %v1262 = vld [vmem:[%s1242 + $0x4c] sm:$0xf]
    %v1263 = vld [vmem:[%s1242 + $0x50] sm:$0xf]
    %v1264 = vld [vmem:[%s1242 + $0x54] sm:$0xf]
    %v1265 = vld [vmem:[%s1242 + $0x58] sm:$0xf]
    %v1266 = vld [vmem:[%s1242 + $0x5c] sm:$0xf]
    %v1267 = vld [vmem:[%s1242 + $0x60] sm:$0xf]
    %v1268 = vld [vmem:[%s1242 + $0x64] sm:$0xf]
    %v1269 = vld [vmem:[%s1242 + $0x68] sm:$0xf]
    %v1270 = vld [vmem:[%s1242 + $0x6c] sm:$0xf]
    %v1271 = vld [vmem:[%s1242 + $0x70] sm:$0xf]
    %v1272 = vld [vmem:[%s1242 + $0x74] sm:$0xf]
    %v1273 = vld [vmem:[%s1242 + $0x78] sm:$0xf]
    %v1274 = vld [vmem:[%s1242 + $0x7c] sm:$0xf]
    %v1275 = vrot.slane %v195, 3
    %v1276 = vrot.slane %v196, 3
    %v1311 = vunpack.c.l.b16 %v1243
    %v1312 = vunpack.c.l.b16 %v1244
    %v1313 = vunpack.c.l.b16 %v1245
    %v1314 = vunpack.c.l.b16 %v1246
    %v1315 = vunpack.c.l.b16 %v1247
    %v1316 = vunpack.c.l.b16 %v1248
    %v1317 = vunpack.c.l.b16 %v1249
    %v1318 = vunpack.c.l.b16 %v1250
    %v1319 = vunpack.c.l.b16 %v1251
    %v1320 = vunpack.c.l.b16 %v1252
    %v1321 = vunpack.c.l.b16 %v1253
    %v1322 = vunpack.c.l.b16 %v1254
    %v1323 = vunpack.c.l.b16 %v1255
    %v1324 = vunpack.c.l.b16 %v1256
    %v1325 = vunpack.c.l.b16 %v1257
    %v1326 = vunpack.c.l.b16 %v1258
    %v1327 = vunpack.c.l.b16 %v1259
    %v1328 = vunpack.c.l.b16 %v1260
    %v1329 = vunpack.c.l.b16 %v1261
    %v1330 = vunpack.c.l.b16 %v1262
    %v1331 = vunpack.c.l.b16 %v1263
    %v1332 = vunpack.c.l.b16 %v1264
    %v1333 = vunpack.c.l.b16 %v1265
    %v1334 = vunpack.c.l.b16 %v1266
    %v1335 = vunpack.c.l.b16 %v1267
    %v1336 = vunpack.c.l.b16 %v1268
    %v1337 = vunpack.c.l.b16 %v1269
    %v1338 = vunpack.c.l.b16 %v1270
    %v1339 = vunpack.c.l.b16 %v1271
    %v1340 = vunpack.c.l.b16 %v1272
    %v1341 = vunpack.c.l.b16 %v1273
    %v1342 = vunpack.c.l.b16 %v1274
    %v1343 = vpack.c.b16 %v1312, %v1311
    %v1344 = vpack.c.b16 %v1314, %v1313
    %v1345 = vpack.c.b16 %v1316, %v1315
    %v1346 = vpack.c.b16 %v1318, %v1317
    %v1347 = vpack.c.b16 %v1320, %v1319
    %v1348 = vpack.c.b16 %v1322, %v1321
    %v1349 = vpack.c.b16 %v1324, %v1323
    %v1350 = vpack.c.b16 %v1326, %v1325
    %v1351 = vpack.c.b16 %v1328, %v1327
    %v1352 = vpack.c.b16 %v1330, %v1329
    %v1353 = vpack.c.b16 %v1332, %v1331
    %v1354 = vpack.c.b16 %v1334, %v1333
    %v1355 = vpack.c.b16 %v1336, %v1335
    %v1356 = vpack.c.b16 %v1338, %v1337
    %v1357 = vpack.c.b16 %v1340, %v1339
    %v1358 = vpack.c.b16 %v1342, %v1341
    %1375 = vmatprep.subr.bf16.mxu0 0
    %1376 = vmatpush1.bf16.msra.mxu0 %v1343
    %1377 = vmatprep.subr.bf16.mxu0 0
    %1378 = vmatpush1.bf16.msra.mxu0 %v1344
    %1379 = vmatprep.subr.bf16.mxu0 0
    %1380 = vmatpush1.bf16.msra.mxu0 %v1345
    %1381 = vmatprep.subr.bf16.mxu0 0
    %1382 = vmatpush1.bf16.msra.mxu0 %v1346
    %1383 = vmatprep.subr.bf16.mxu0 0
    %1384 = vmatpush1.bf16.msra.mxu0 %v1347
    %1385 = vmatprep.subr.bf16.mxu0 0
    %1386 = vmatpush1.bf16.msra.mxu0 %v1348
    %1387 = vmatprep.subr.bf16.mxu0 0
    %1388 = vmatpush1.bf16.msra.mxu0 %v1349
    %1389 = vmatprep.subr.bf16.mxu0 0
    %1390 = vmatpush1.bf16.msra.mxu0 %v1350
    %1391 = vmatprep.subr.bf16.mxu0 0
    %1392 = vmatpush1.bf16.msra.mxu0 %v1351
    %1393 = vmatprep.subr.bf16.mxu0 0
    %1394 = vmatpush1.bf16.msra.mxu0 %v1352
    %1395 = vmatprep.subr.bf16.mxu0 0
    %1396 = vmatpush1.bf16.msra.mxu0 %v1353
    %1397 = vmatprep.subr.bf16.mxu0 0
    %1398 = vmatpush1.bf16.msra.mxu0 %v1354
    %1399 = vmatprep.subr.bf16.mxu0 0
    %1400 = vmatpush1.bf16.msra.mxu0 %v1355
    %1401 = vmatprep.subr.bf16.mxu0 0
    %1402 = vmatpush1.bf16.msra.mxu0 %v1356
    %1403 = vmatprep.subr.bf16.mxu0 0
    %1404 = vmatpush1.bf16.msra.mxu0 %v1357
    %1405 = vmatprep.subr.bf16.mxu0 0
    %1406 = vmatpush1.bf16.msra.mxu0 %v1358
    %1407 = vmatprep.mubr.bf16.mxu0 %v1276
    %1408 = vmatmul.mubr.bf16.gmra.mrb[0].mxu0 %v1275
    %v1409 = vpop.f32.mrb[0].mxu0
    %v1410 = vadd.f32 0.0, %v1409
    %v1411 = vpop.f32.mrb[0].mxu0
    %v1412 = vpop.f32.mrb[0].mxu0
    %v1413 = vpop.f32.mrb[0].mxu0
    %1414 = vdwg.mxu0
    %v1415 = vadd.f32 %v1241, %v1410
    %s1416 = scalar_lea.vmem %s3, 896
    %v1417 = vld [vmem:[%s1416] sm:$0xf]
    %v1418 = vld [vmem:[%s1416 + $0x4] sm:$0xf]
    %v1419 = vld [vmem:[%s1416 + $0x8] sm:$0xf]
    %v1420 = vld [vmem:[%s1416 + $0xc] sm:$0xf]
    %v1421 = vld [vmem:[%s1416 + $0x10] sm:$0xf]
    %v1422 = vld [vmem:[%s1416 + $0x14] sm:$0xf]
    %v1423 = vld [vmem:[%s1416 + $0x18] sm:$0xf]
    %v1424 = vld [vmem:[%s1416 + $0x1c] sm:$0xf]
    %v1425 = vld [vmem:[%s1416 + $0x20] sm:$0xf]
    %v1426 = vld [vmem:[%s1416 + $0x24] sm:$0xf]
    %v1427 = vld [vmem:[%s1416 + $0x28] sm:$0xf]
    %v1428 = vld [vmem:[%s1416 + $0x2c] sm:$0xf]
    %v1429 = vld [vmem:[%s1416 + $0x30] sm:$0xf]
    %v1430 = vld [vmem:[%s1416 + $0x34] sm:$0xf]
    %v1431 = vld [vmem:[%s1416 + $0x38] sm:$0xf]
    %v1432 = vld [vmem:[%s1416 + $0x3c] sm:$0xf]
    %v1433 = vld [vmem:[%s1416 + $0x40] sm:$0xf]
    %v1434 = vld [vmem:[%s1416 + $0x44] sm:$0xf]
    %v1435 = vld [vmem:[%s1416 + $0x48] sm:$0xf]
    %v1436 = vld [vmem:[%s1416 + $0x4c] sm:$0xf]
    %v1437 = vld [vmem:[%s1416 + $0x50] sm:$0xf]
    %v1438 = vld [vmem:[%s1416 + $0x54] sm:$0xf]
    %v1439 = vld [vmem:[%s1416 + $0x58] sm:$0xf]
    %v1440 = vld [vmem:[%s1416 + $0x5c] sm:$0xf]
    %v1441 = vld [vmem:[%s1416 + $0x60] sm:$0xf]
    %v1442 = vld [vmem:[%s1416 + $0x64] sm:$0xf]
    %v1443 = vld [vmem:[%s1416 + $0x68] sm:$0xf]
    %v1444 = vld [vmem:[%s1416 + $0x6c] sm:$0xf]
    %v1445 = vld [vmem:[%s1416 + $0x70] sm:$0xf]
    %v1446 = vld [vmem:[%s1416 + $0x74] sm:$0xf]
    %v1447 = vld [vmem:[%s1416 + $0x78] sm:$0xf]
    %v1448 = vld [vmem:[%s1416 + $0x7c] sm:$0xf]
    %v1449 = vrot.slane %v400, 3
    %v1450 = vrot.slane %v403, 3
    %v1485 = vunpack.c.l.b16 %v1417
    %v1486 = vunpack.c.l.b16 %v1418
    %v1487 = vunpack.c.l.b16 %v1419
    %v1488 = vunpack.c.l.b16 %v1420
    %v1489 = vunpack.c.l.b16 %v1421
    %v1490 = vunpack.c.l.b16 %v1422
    %v1491 = vunpack.c.l.b16 %v1423
    %v1492 = vunpack.c.l.b16 %v1424
    %v1493 = vunpack.c.l.b16 %v1425
    %v1494 = vunpack.c.l.b16 %v1426
    %v1495 = vunpack.c.l.b16 %v1427
    %v1496 = vunpack.c.l.b16 %v1428
    %v1497 = vunpack.c.l.b16 %v1429
    %v1498 = vunpack.c.l.b16 %v1430
    %v1499 = vunpack.c.l.b16 %v1431
    %v1500 = vunpack.c.l.b16 %v1432
    %v1501 = vunpack.c.l.b16 %v1433
    %v1502 = vunpack.c.l.b16 %v1434
    %v1503 = vunpack.c.l.b16 %v1435
    %v1504 = vunpack.c.l.b16 %v1436
    %v1505 = vunpack.c.l.b16 %v1437
    %v1506 = vunpack.c.l.b16 %v1438
    %v1507 = vunpack.c.l.b16 %v1439
    %v1508 = vunpack.c.l.b16 %v1440
    %v1509 = vunpack.c.l.b16 %v1441
    %v1510 = vunpack.c.l.b16 %v1442
    %v1511 = vunpack.c.l.b16 %v1443
    %v1512 = vunpack.c.l.b16 %v1444
    %v1513 = vunpack.c.l.b16 %v1445
    %v1514 = vunpack.c.l.b16 %v1446
    %v1515 = vunpack.c.l.b16 %v1447
    %v1516 = vunpack.c.l.b16 %v1448
    %v1517 = vpack.c.b16 %v1486, %v1485
    %v1518 = vpack.c.b16 %v1488, %v1487
    %v1519 = vpack.c.b16 %v1490, %v1489
    %v1520 = vpack.c.b16 %v1492, %v1491
    %v1521 = vpack.c.b16 %v1494, %v1493
    %v1522 = vpack.c.b16 %v1496, %v1495
    %v1523 = vpack.c.b16 %v1498, %v1497
    %v1524 = vpack.c.b16 %v1500, %v1499
    %v1525 = vpack.c.b16 %v1502, %v1501
    %v1526 = vpack.c.b16 %v1504, %v1503
    %v1527 = vpack.c.b16 %v1506, %v1505
    %v1528 = vpack.c.b16 %v1508, %v1507
    %v1529 = vpack.c.b16 %v1510, %v1509
    %v1530 = vpack.c.b16 %v1512, %v1511
    %v1531 = vpack.c.b16 %v1514, %v1513
    %v1532 = vpack.c.b16 %v1516, %v1515
    %1549 = vmatprep.subr.bf16.mxu0 0
    %1550 = vmatpush1.bf16.msra.mxu0 %v1517
    %1551 = vmatprep.subr.bf16.mxu0 0
    %1552 = vmatpush1.bf16.msra.mxu0 %v1518
    %1553 = vmatprep.subr.bf16.mxu0 0
    %1554 = vmatpush1.bf16.msra.mxu0 %v1519
    %1555 = vmatprep.subr.bf16.mxu0 0
    %1556 = vmatpush1.bf16.msra.mxu0 %v1520
    %1557 = vmatprep.subr.bf16.mxu0 0
    %1558 = vmatpush1.bf16.msra.mxu0 %v1521
    %1559 = vmatprep.subr.bf16.mxu0 0
    %1560 = vmatpush1.bf16.msra.mxu0 %v1522
    %1561 = vmatprep.subr.bf16.mxu0 0
    %1562 = vmatpush1.bf16.msra.mxu0 %v1523
    %1563 = vmatprep.subr.bf16.mxu0 0
    %1564 = vmatpush1.bf16.msra.mxu0 %v1524
    %1565 = vmatprep.subr.bf16.mxu0 0
    %1566 = vmatpush1.bf16.msra.mxu0 %v1525
    %1567 = vmatprep.subr.bf16.mxu0 0
    %1568 = vmatpush1.bf16.msra.mxu0 %v1526
    %1569 = vmatprep.subr.bf16.mxu0 0
    %1570 = vmatpush1.bf16.msra.mxu0 %v1527
    %1571 = vmatprep.subr.bf16.mxu0 0
    %1572 = vmatpush1.bf16.msra.mxu0 %v1528
    %1573 = vmatprep.subr.bf16.mxu0 0
    %1574 = vmatpush1.bf16.msra.mxu0 %v1529
    %1575 = vmatprep.subr.bf16.mxu0 0
    %1576 = vmatpush1.bf16.msra.mxu0 %v1530
    %1577 = vmatprep.subr.bf16.mxu0 0
    %1578 = vmatpush1.bf16.msra.mxu0 %v1531
    %1579 = vmatprep.subr.bf16.mxu0 0
    %1580 = vmatpush1.bf16.msra.mxu0 %v1532
    %1581 = vmatprep.mubr.bf16.mxu0 %v1450
    %1582 = vmatmul.mubr.bf16.gmra.mrb[0].mxu0 %v1449
    %v1583 = vpop.f32.mrb[0].mxu0
    %v1584 = vadd.f32 0.0, %v1583
    %v1585 = vpop.f32.mrb[0].mxu0
    %v1586 = vpop.f32.mrb[0].mxu0
    %v1587 = vpop.f32.mrb[0].mxu0
    %1588 = vdwg.mxu0
    %v1589 = vadd.f32 %v1415, %v1584
    %v1590 = vmax.f32 %v1589, 0.0
    %s1591 = scalar_lea.vmem %s0, 128
    %v1592 = vld [vmem:[%s1591] sm:$0xff]
    %v1593 = vld [vmem:[%s1591 + $0x8] sm:$0xff]
    %v1594 = vld [vmem:[%s1591 + $0x10] sm:$0xff]
    %v1595 = vld [vmem:[%s1591 + $0x18] sm:$0xff]
    %v1596 = vld [vmem:[%s1591 + $0x20] sm:$0xff]
    %v1597 = vld [vmem:[%s1591 + $0x28] sm:$0xff]
    %v1598 = vld [vmem:[%s1591 + $0x30] sm:$0xff]
    %v1599 = vld [vmem:[%s1591 + $0x38] sm:$0xff]
    %v1600 = vld [vmem:[%s1591 + $0x40] sm:$0xff]
    %v1601 = vld [vmem:[%s1591 + $0x48] sm:$0xff]
    %v1602 = vld [vmem:[%s1591 + $0x50] sm:$0xff]
    %v1603 = vld [vmem:[%s1591 + $0x58] sm:$0xff]
    %v1604 = vld [vmem:[%s1591 + $0x60] sm:$0xff]
    %v1605 = vld [vmem:[%s1591 + $0x68] sm:$0xff]
    %v1606 = vld [vmem:[%s1591 + $0x70] sm:$0xff]
    %v1607 = vld [vmem:[%s1591 + $0x78] sm:$0xff]
    %v1624 = vunpack.c.l.b16 %v1592
    %v1625 = vunpack.c.h.b16 %v1592
    %v1626 = vunpack.c.l.b16 %v1593
    %v1627 = vunpack.c.h.b16 %v1593
    %v1628 = vunpack.c.l.b16 %v1594
    %v1629 = vunpack.c.h.b16 %v1594
    %v1630 = vunpack.c.l.b16 %v1595
    %v1631 = vunpack.c.h.b16 %v1595
    %v1632 = vunpack.c.l.b16 %v1596
    %v1633 = vunpack.c.h.b16 %v1596
    %v1634 = vunpack.c.l.b16 %v1597
    %v1635 = vunpack.c.h.b16 %v1597
    %v1636 = vunpack.c.l.b16 %v1598
    %v1637 = vunpack.c.h.b16 %v1598
    %v1638 = vunpack.c.l.b16 %v1599
    %v1639 = vunpack.c.h.b16 %v1599
    %v1640 = vunpack.c.l.b16 %v1600
    %v1641 = vunpack.c.h.b16 %v1600
    %v1642 = vunpack.c.l.b16 %v1601
    %v1643 = vunpack.c.h.b16 %v1601
    %v1644 = vunpack.c.l.b16 %v1602
    %v1645 = vunpack.c.h.b16 %v1602
    %v1646 = vunpack.c.l.b16 %v1603
    %v1647 = vunpack.c.h.b16 %v1603
    %v1648 = vunpack.c.l.b16 %v1604
    %v1649 = vunpack.c.h.b16 %v1604
    %v1650 = vunpack.c.l.b16 %v1605
    %v1651 = vunpack.c.h.b16 %v1605
    %v1652 = vunpack.c.l.b16 %v1606
    %v1653 = vunpack.c.h.b16 %v1606
    %v1654 = vunpack.c.l.b16 %v1607
    %v1655 = vunpack.c.h.b16 %v1607
    %v1656 = vpack.c.b16 %v1626, %v1624
    %v1657 = vpack.c.b16 %v1627, %v1625
    %v1658 = vpack.c.b16 %v1630, %v1628
    %v1659 = vpack.c.b16 %v1631, %v1629
    %v1660 = vpack.c.b16 %v1634, %v1632
    %v1661 = vpack.c.b16 %v1635, %v1633
    %v1662 = vpack.c.b16 %v1638, %v1636
    %v1663 = vpack.c.b16 %v1639, %v1637
    %v1664 = vpack.c.b16 %v1642, %v1640
    %v1665 = vpack.c.b16 %v1643, %v1641
    %v1666 = vpack.c.b16 %v1646, %v1644
    %v1667 = vpack.c.b16 %v1647, %v1645
    %v1668 = vpack.c.b16 %v1650, %v1648
    %v1669 = vpack.c.b16 %v1651, %v1649
    %v1670 = vpack.c.b16 %v1654, %v1652
    %v1671 = vpack.c.b16 %v1655, %v1653
    %1688 = vmatprep.subr.bf16.mxu0 %v1657
    %1689 = vmatpush1.bf16.msra.mxu0 %v1656
    %1690 = vmatprep.subr.bf16.mxu0 %v1659
    %1691 = vmatpush1.bf16.msra.mxu0 %v1658
    %1692 = vmatprep.subr.bf16.mxu0 %v1661
    %1693 = vmatpush1.bf16.msra.mxu0 %v1660
    %1694 = vmatprep.subr.bf16.mxu0 %v1663
    %1695 = vmatpush1.bf16.msra.mxu0 %v1662
    %1696 = vmatprep.subr.bf16.mxu0 %v1665
    %1697 = vmatpush1.bf16.msra.mxu0 %v1664
    %1698 = vmatprep.subr.bf16.mxu0 %v1667
    %1699 = vmatpush1.bf16.msra.mxu0 %v1666
    %1700 = vmatprep.subr.bf16.mxu0 %v1669
    %1701 = vmatpush1.bf16.msra.mxu0 %v1668
    %1702 = vmatprep.subr.bf16.mxu0 %v1671
    %1703 = vmatpush1.bf16.msra.mxu0 %v1670
    %1704 = vmatprep.subr.bf16.mxu0 0
    %1705 = vmatpush1.bf16.msra.mxu0 0
    %1706 = vmatprep.subr.bf16.mxu0 0
    %1707 = vmatpush1.bf16.msra.mxu0 0
    %1708 = vmatprep.subr.bf16.mxu0 0
    %1709 = vmatpush1.bf16.msra.mxu0 0
    %1710 = vmatprep.subr.bf16.mxu0 0
    %1711 = vmatpush1.bf16.msra.mxu0 0
    %1712 = vmatprep.subr.bf16.mxu0 0
    %1713 = vmatpush1.bf16.msra.mxu0 0
    %1714 = vmatprep.subr.bf16.mxu0 0
    %1715 = vmatpush1.bf16.msra.mxu0 0
    %1716 = vmatprep.subr.bf16.mxu0 0
    %1717 = vmatpush1.bf16.msra.mxu0 0
    %1718 = vmatprep.subr.bf16.mxu0 0
    %1719 = vmatpush1.bf16.msra.mxu0 0
    %1720 = vmatprep.mubr.bf16.mxu0 0
    %1721 = vmatmul.mubr.bf16.gmra.mrb[0].mxu0 %v48
    %v1722 = vpop.f32.mrb[0].mxu0
    %v1723 = vadd.f32 %v70, %v1722
    %v1724 = vpop.f32.mrb[0].mxu0
    %v1725 = vadd.f32 %v70, %v1724
    %v1726 = vpop.f32.mrb[0].mxu0
    %v1727 = vpop.f32.mrb[0].mxu0
    %1728 = vdwg.mxu0
    %v1729 = vmax.f32 %v1723, 0.0
    %v1730 = vmax.f32 %v1725, 0.0
    %v1731 = vpack.c.bf16 %v1729, %v1729
    %v1732 = vpack.c.bf16 %v1730, %v1730
    %1733 = vmatprep.subr.bf16.mxu0 0
    %1734 = vmatpush1.bf16.msra.mxu0 %v293
    %1735 = vmatprep.subr.bf16.mxu0 0
    %1736 = vmatpush1.bf16.msra.mxu0 %v294
    %1737 = vmatprep.subr.bf16.mxu0 0
    %1738 = vmatpush1.bf16.msra.mxu0 %v295
    %1739 = vmatprep.subr.bf16.mxu0 0
    %1740 = vmatpush1.bf16.msra.mxu0 %v296
    %1741 = vmatprep.subr.bf16.mxu0 0
    %1742 = vmatpush1.bf16.msra.mxu0 %v297
    %1743 = vmatprep.subr.bf16.mxu0 0
    %1744 = vmatpush1.bf16.msra.mxu0 %v298
    %1745 = vmatprep.subr.bf16.mxu0 0
    %1746 = vmatpush1.bf16.msra.mxu0 %v299
    %1747 = vmatprep.subr.bf16.mxu0 0
    %1748 = vmatpush1.bf16.msra.mxu0 %v300
    %1749 = vmatprep.subr.bf16.mxu0 0
    %1750 = vmatpush1.bf16.msra.mxu0 %v301
    %1751 = vmatprep.subr.bf16.mxu0 0
    %1752 = vmatpush1.bf16.msra.mxu0 %v302
    %1753 = vmatprep.subr.bf16.mxu0 0
    %1754 = vmatpush1.bf16.msra.mxu0 %v303
    %1755 = vmatprep.subr.bf16.mxu0 0
    %1756 = vmatpush1.bf16.msra.mxu0 %v304
    %1757 = vmatprep.subr.bf16.mxu0 0
    %1758 = vmatpush1.bf16.msra.mxu0 %v305
    %1759 = vmatprep.subr.bf16.mxu0 0
    %1760 = vmatpush1.bf16.msra.mxu0 %v306
    %1761 = vmatprep.subr.bf16.mxu0 0
    %1762 = vmatpush1.bf16.msra.mxu0 %v307
    %1763 = vmatprep.subr.bf16.mxu0 0
    %1764 = vmatpush1.bf16.msra.mxu0 %v308
    %1765 = vmatprep.mubr.bf16.mxu0 %v1732
    %1766 = vmatmul.mubr.bf16.gmra.mrb[0].mxu0 %v1731
    %v1767 = vpop.f32.mrb[0].mxu0
    %v1768 = vadd.f32 0.0, %v1767
    %v1769 = vpop.f32.mrb[0].mxu0
    %v1770 = vpop.f32.mrb[0].mxu0
    %v1771 = vpop.f32.mrb[0].mxu0
    %1772 = vdwg.mxu0
    %v1773 = vadd.f32 %v50, %v1768
    %v1775 = vshrl.u32 %v1731, 16
    %v1778 = vshrl.u32 %v1732, 16
    %1782 = vmatprep.subr.bf16.mxu0 0
    %1783 = vmatpush1.bf16.msra.mxu0 %v471
    %1784 = vmatprep.subr.bf16.mxu0 0
    %1785 = vmatpush1.bf16.msra.mxu0 %v472
    %1786 = vmatprep.subr.bf16.mxu0 0
    %1787 = vmatpush1.bf16.msra.mxu0 %v473
    %1788 = vmatprep.subr.bf16.mxu0 0
    %1789 = vmatpush1.bf16.msra.mxu0 %v474
    %1790 = vmatprep.subr.bf16.mxu0 0
    %1791 = vmatpush1.bf16.msra.mxu0 %v475
    %1792 = vmatprep.subr.bf16.mxu0 0
    %1793 = vmatpush1.bf16.msra.mxu0 %v476
    %1794 = vmatprep.subr.bf16.mxu0 0
    %1795 = vmatpush1.bf16.msra.mxu0 %v477
    %1796 = vmatprep.subr.bf16.mxu0 0
    %1797 = vmatpush1.bf16.msra.mxu0 %v478
    %1798 = vmatprep.subr.bf16.mxu0 0
    %1799 = vmatpush1.bf16.msra.mxu0 %v479
    %1800 = vmatprep.subr.bf16.mxu0 0
    %1801 = vmatpush1.bf16.msra.mxu0 %v480
    %1802 = vmatprep.subr.bf16.mxu0 0
    %1803 = vmatpush1.bf16.msra.mxu0 %v481
    %1804 = vmatprep.subr.bf16.mxu0 0
    %1805 = vmatpush1.bf16.msra.mxu0 %v482
    %1806 = vmatprep.subr.bf16.mxu0 0
    %1807 = vmatpush1.bf16.msra.mxu0 %v483
    %1808 = vmatprep.subr.bf16.mxu0 0
    %1809 = vmatpush1.bf16.msra.mxu0 %v484
    %1810 = vmatprep.subr.bf16.mxu0 0
    %1811 = vmatpush1.bf16.msra.mxu0 %v485
    %1812 = vmatprep.subr.bf16.mxu0 0
    %1813 = vmatpush1.bf16.msra.mxu0 %v486
    %1814 = vmatprep.mubr.bf16.mxu0 %v1778
    %1815 = vmatmul.mubr.bf16.gmra.mrb[0].mxu0 %v1775
    %v1816 = vpop.f32.mrb[0].mxu0
    %v1817 = vadd.f32 0.0, %v1816
    %v1818 = vpop.f32.mrb[0].mxu0
    %v1819 = vpop.f32.mrb[0].mxu0
    %v1820 = vpop.f32.mrb[0].mxu0
    %1821 = vdwg.mxu0
    %v1822 = vadd.f32 %v1773, %v1817
    %v1825 = vrot.slane %v1731, 1
    %v1826 = vrot.slane %v1732, 1
    %1829 = vmatprep.subr.bf16.mxu0 0
    %1830 = vmatpush1.bf16.msra.mxu0 %v647
    %1831 = vmatprep.subr.bf16.mxu0 0
    %1832 = vmatpush1.bf16.msra.mxu0 %v648
    %1833 = vmatprep.subr.bf16.mxu0 0
    %1834 = vmatpush1.bf16.msra.mxu0 %v649
    %1835 = vmatprep.subr.bf16.mxu0 0
    %1836 = vmatpush1.bf16.msra.mxu0 %v650
    %1837 = vmatprep.subr.bf16.mxu0 0
    %1838 = vmatpush1.bf16.msra.mxu0 %v651
    %1839 = vmatprep.subr.bf16.mxu0 0
    %1840 = vmatpush1.bf16.msra.mxu0 %v652
    %1841 = vmatprep.subr.bf16.mxu0 0
    %1842 = vmatpush1.bf16.msra.mxu0 %v653
    %1843 = vmatprep.subr.bf16.mxu0 0
    %1844 = vmatpush1.bf16.msra.mxu0 %v654
    %1845 = vmatprep.subr.bf16.mxu0 0
    %1846 = vmatpush1.bf16.msra.mxu0 %v655
    %1847 = vmatprep.subr.bf16.mxu0 0
    %1848 = vmatpush1.bf16.msra.mxu0 %v656
    %1849 = vmatprep.subr.bf16.mxu0 0
    %1850 = vmatpush1.bf16.msra.mxu0 %v657
    %1851 = vmatprep.subr.bf16.mxu0 0
    %1852 = vmatpush1.bf16.msra.mxu0 %v658
    %1853 = vmatprep.subr.bf16.mxu0 0
    %1854 = vmatpush1.bf16.msra.mxu0 %v659
    %1855 = vmatprep.subr.bf16.mxu0 0
    %1856 = vmatpush1.bf16.msra.mxu0 %v660
    %1857 = vmatprep.subr.bf16.mxu0 0
    %1858 = vmatpush1.bf16.msra.mxu0 %v661
    %1859 = vmatprep.subr.bf16.mxu0 0
    %1860 = vmatpush1.bf16.msra.mxu0 %v662
    %1861 = vmatprep.mubr.bf16.mxu0 %v1826
    %1862 = vmatmul.mubr.bf16.gmra.mrb[0].mxu0 %v1825
    %v1863 = vpop.f32.mrb[0].mxu0
    %v1864 = vadd.f32 0.0, %v1863
    %v1865 = vpop.f32.mrb[0].mxu0
    %v1866 = vpop.f32.mrb[0].mxu0
    %v1867 = vpop.f32.mrb[0].mxu0
    %1868 = vdwg.mxu0
    %v1869 = vadd.f32 %v1822, %v1864
    %v1870 = vrot.slane %v1775, 1
    %v1871 = vrot.slane %v1778, 1
    %1874 = vmatprep.subr.bf16.mxu0 0
    %1875 = vmatpush1.bf16.msra.mxu0 %v821
    %1876 = vmatprep.subr.bf16.mxu0 0
    %1877 = vmatpush1.bf16.msra.mxu0 %v822
    %1878 = vmatprep.subr.bf16.mxu0 0
    %1879 = vmatpush1.bf16.msra.mxu0 %v823
    %1880 = vmatprep.subr.bf16.mxu0 0
    %1881 = vmatpush1.bf16.msra.mxu0 %v824
    %1882 = vmatprep.subr.bf16.mxu0 0
    %1883 = vmatpush1.bf16.msra.mxu0 %v825
    %1884 = vmatprep.subr.bf16.mxu0 0
    %1885 = vmatpush1.bf16.msra.mxu0 %v826
    %1886 = vmatprep.subr.bf16.mxu0 0
    %1887 = vmatpush1.bf16.msra.mxu0 %v827
    %1888 = vmatprep.subr.bf16.mxu0 0
    %1889 = vmatpush1.bf16.msra.mxu0 %v828
    %1890 = vmatprep.subr.bf16.mxu0 0
    %1891 = vmatpush1.bf16.msra.mxu0 %v829
    %1892 = vmatprep.subr.bf16.mxu0 0
    %1893 = vmatpush1.bf16.msra.mxu0 %v830
    %1894 = vmatprep.subr.bf16.mxu0 0
    %1895 = vmatpush1.bf16.msra.mxu0 %v831
    %1896 = vmatprep.subr.bf16.mxu0 0
    %1897 = vmatpush1.bf16.msra.mxu0 %v832
    %1898 = vmatprep.subr.bf16.mxu0 0
    %1899 = vmatpush1.bf16.msra.mxu0 %v833
    %1900 = vmatprep.subr.bf16.mxu0 0
    %1901 = vmatpush1.bf16.msra.mxu0 %v834
    %1902 = vmatprep.subr.bf16.mxu0 0
    %1903 = vmatpush1.bf16.msra.mxu0 %v835
    %1904 = vmatprep.subr.bf16.mxu0 0
    %1905 = vmatpush1.bf16.msra.mxu0 %v836
    %1906 = vmatprep.mubr.bf16.mxu0 %v1871
    %1907 = vmatmul.mubr.bf16.gmra.mrb[0].mxu0 %v1870
    %v1908 = vpop.f32.mrb[0].mxu0
    %v1909 = vadd.f32 0.0, %v1908
    %v1910 = vpop.f32.mrb[0].mxu0
    %v1911 = vpop.f32.mrb[0].mxu0
    %v1912 = vpop.f32.mrb[0].mxu0
    %1913 = vdwg.mxu0
    %v1914 = vadd.f32 %v1869, %v1909
    %v1915 = vrot.slane %v1731, 2
    %v1916 = vrot.slane %v1732, 2
    %1919 = vmatprep.subr.bf16.mxu0 0
    %1920 = vmatpush1.bf16.msra.mxu0 %v995
    %1921 = vmatprep.subr.bf16.mxu0 0
    %1922 = vmatpush1.bf16.msra.mxu0 %v996
    %1923 = vmatprep.subr.bf16.mxu0 0
    %1924 = vmatpush1.bf16.msra.mxu0 %v997
    %1925 = vmatprep.subr.bf16.mxu0 0
    %1926 = vmatpush1.bf16.msra.mxu0 %v998
    %1927 = vmatprep.subr.bf16.mxu0 0
    %1928 = vmatpush1.bf16.msra.mxu0 %v999
    %1929 = vmatprep.subr.bf16.mxu0 0
    %1930 = vmatpush1.bf16.msra.mxu0 %v1000
    %1931 = vmatprep.subr.bf16.mxu0 0
    %1932 = vmatpush1.bf16.msra.mxu0 %v1001
    %1933 = vmatprep.subr.bf16.mxu0 0
    %1934 = vmatpush1.bf16.msra.mxu0 %v1002
    %1935 = vmatprep.subr.bf16.mxu0 0
    %1936 = vmatpush1.bf16.msra.mxu0 %v1003
    %1937 = vmatprep.subr.bf16.mxu0 0
    %1938 = vmatpush1.bf16.msra.mxu0 %v1004
    %1939 = vmatprep.subr.bf16.mxu0 0
    %1940 = vmatpush1.bf16.msra.mxu0 %v1005
    %1941 = vmatprep.subr.bf16.mxu0 0
    %1942 = vmatpush1.bf16.msra.mxu0 %v1006
    %1943 = vmatprep.subr.bf16.mxu0 0
    %1944 = vmatpush1.bf16.msra.mxu0 %v1007
    %1945 = vmatprep.subr.bf16.mxu0 0
    %1946 = vmatpush1.bf16.msra.mxu0 %v1008
    %1947 = vmatprep.subr.bf16.mxu0 0
    %1948 = vmatpush1.bf16.msra.mxu0 %v1009
    %1949 = vmatprep.subr.bf16.mxu0 0
    %1950 = vmatpush1.bf16.msra.mxu0 %v1010
    %1951 = vmatprep.mubr.bf16.mxu0 %v1916
    %1952 = vmatmul.mubr.bf16.gmra.mrb[0].mxu0 %v1915
    %v1953 = vpop.f32.mrb[0].mxu0
    %v1954 = vadd.f32 0.0, %v1953
    %v1955 = vpop.f32.mrb[0].mxu0
    %v1956 = vpop.f32.mrb[0].mxu0
    %v1957 = vpop.f32.mrb[0].mxu0
    %1958 = vdwg.mxu0
    %v1959 = vadd.f32 %v1914, %v1954
    %v1960 = vrot.slane %v1775, 2
    %v1961 = vrot.slane %v1778, 2
    %1964 = vmatprep.subr.bf16.mxu0 0
    %1965 = vmatpush1.bf16.msra.mxu0 %v1169
    %1966 = vmatprep.subr.bf16.mxu0 0
    %1967 = vmatpush1.bf16.msra.mxu0 %v1170
    %1968 = vmatprep.subr.bf16.mxu0 0
    %1969 = vmatpush1.bf16.msra.mxu0 %v1171
    %1970 = vmatprep.subr.bf16.mxu0 0
    %1971 = vmatpush1.bf16.msra.mxu0 %v1172
    %1972 = vmatprep.subr.bf16.mxu0 0
    %1973 = vmatpush1.bf16.msra.mxu0 %v1173
    %1974 = vmatprep.subr.bf16.mxu0 0
    %1975 = vmatpush1.bf16.msra.mxu0 %v1174
    %1976 = vmatprep.subr.bf16.mxu0 0
    %1977 = vmatpush1.bf16.msra.mxu0 %v1175
    %1978 = vmatprep.subr.bf16.mxu0 0
    %1979 = vmatpush1.bf16.msra.mxu0 %v1176
    %1980 = vmatprep.subr.bf16.mxu0 0
    %1981 = vmatpush1.bf16.msra.mxu0 %v1177
    %1982 = vmatprep.subr.bf16.mxu0 0
    %1983 = vmatpush1.bf16.msra.mxu0 %v1178
    %1984 = vmatprep.subr.bf16.mxu0 0
    %1985 = vmatpush1.bf16.msra.mxu0 %v1179
    %1986 = vmatprep.subr.bf16.mxu0 0
    %1987 = vmatpush1.bf16.msra.mxu0 %v1180
    %1988 = vmatprep.subr.bf16.mxu0 0
    %1989 = vmatpush1.bf16.msra.mxu0 %v1181
    %1990 = vmatprep.subr.bf16.mxu0 0
    %1991 = vmatpush1.bf16.msra.mxu0 %v1182
    %1992 = vmatprep.subr.bf16.mxu0 0
    %1993 = vmatpush1.bf16.msra.mxu0 %v1183
    %1994 = vmatprep.subr.bf16.mxu0 0
    %1995 = vmatpush1.bf16.msra.mxu0 %v1184
    %1996 = vmatprep.mubr.bf16.mxu0 %v1961
    %1997 = vmatmul.mubr.bf16.gmra.mrb[0].mxu0 %v1960
    %v1998 = vpop.f32.mrb[0].mxu0
    %v1999 = vadd.f32 0.0, %v1998
    %v2000 = vpop.f32.mrb[0].mxu0
    %v2001 = vpop.f32.mrb[0].mxu0
    %v2002 = vpop.f32.mrb[0].mxu0
    %2003 = vdwg.mxu0
    %v2004 = vadd.f32 %v1959, %v1999
    %v2005 = vrot.slane %v1731, 3
    %v2006 = vrot.slane %v1732, 3
    %2009 = vmatprep.subr.bf16.mxu0 0
    %2010 = vmatpush1.bf16.msra.mxu0 %v1343
    %2011 = vmatprep.subr.bf16.mxu0 0
    %2012 = vmatpush1.bf16.msra.mxu0 %v1344
    %2013 = vmatprep.subr.bf16.mxu0 0
    %2014 = vmatpush1.bf16.msra.mxu0 %v1345
    %2015 = vmatprep.subr.bf16.mxu0 0
    %2016 = vmatpush1.bf16.msra.mxu0 %v1346
    %2017 = vmatprep.subr.bf16.mxu0 0
    %2018 = vmatpush1.bf16.msra.mxu0 %v1347
    %2019 = vmatprep.subr.bf16.mxu0 0
    %2020 = vmatpush1.bf16.msra.mxu0 %v1348
    %2021 = vmatprep.subr.bf16.mxu0 0
    %2022 = vmatpush1.bf16.msra.mxu0 %v1349
    %2023 = vmatprep.subr.bf16.mxu0 0
    %2024 = vmatpush1.bf16.msra.mxu0 %v1350
    %2025 = vmatprep.subr.bf16.mxu0 0
    %2026 = vmatpush1.bf16.msra.mxu0 %v1351
    %2027 = vmatprep.subr.bf16.mxu0 0
    %2028 = vmatpush1.bf16.msra.mxu0 %v1352
    %2029 = vmatprep.subr.bf16.mxu0 0
    %2030 = vmatpush1.bf16.msra.mxu0 %v1353
    %2031 = vmatprep.subr.bf16.mxu0 0
    %2032 = vmatpush1.bf16.msra.mxu0 %v1354
    %2033 = vmatprep.subr.bf16.mxu0 0
    %2034 = vmatpush1.bf16.msra.mxu0 %v1355
    %2035 = vmatprep.subr.bf16.mxu0 0
    %2036 = vmatpush1.bf16.msra.mxu0 %v1356
    %2037 = vmatprep.subr.bf16.mxu0 0
    %2038 = vmatpush1.bf16.msra.mxu0 %v1357
    %2039 = vmatprep.subr.bf16.mxu0 0
    %2040 = vmatpush1.bf16.msra.mxu0 %v1358
    %2041 = vmatprep.mubr.bf16.mxu0 %v2006
    %2042 = vmatmul.mubr.bf16.gmra.mrb[0].mxu0 %v2005
    %v2043 = vpop.f32.mrb[0].mxu0
    %v2044 = vadd.f32 0.0, %v2043
    %v2045 = vpop.f32.mrb[0].mxu0
    %v2046 = vpop.f32.mrb[0].mxu0
    %v2047 = vpop.f32.mrb[0].mxu0
    %2048 = vdwg.mxu0
    %v2049 = vadd.f32 %v2004, %v2044
    %v2050 = vrot.slane %v1775, 3
    %v2051 = vrot.slane %v1778, 3
    %2054 = vmatprep.subr.bf16.mxu0 0
    %2055 = vmatpush1.bf16.msra.mxu0 %v1517
    %2056 = vmatprep.subr.bf16.mxu0 0
    %2057 = vmatpush1.bf16.msra.mxu0 %v1518
    %2058 = vmatprep.subr.bf16.mxu0 0
    %2059 = vmatpush1.bf16.msra.mxu0 %v1519
    %2060 = vmatprep.subr.bf16.mxu0 0
    %2061 = vmatpush1.bf16.msra.mxu0 %v1520
    %2062 = vmatprep.subr.bf16.mxu0 0
    %2063 = vmatpush1.bf16.msra.mxu0 %v1521
    %2064 = vmatprep.subr.bf16.mxu0 0
    %2065 = vmatpush1.bf16.msra.mxu0 %v1522
    %2066 = vmatprep.subr.bf16.mxu0 0
    %2067 = vmatpush1.bf16.msra.mxu0 %v1523
    %2068 = vmatprep.subr.bf16.mxu0 0
    %2069 = vmatpush1.bf16.msra.mxu0 %v1524
    %2070 = vmatprep.subr.bf16.mxu0 0
    %2071 = vmatpush1.bf16.msra.mxu0 %v1525
    %2072 = vmatprep.subr.bf16.mxu0 0
    %2073 = vmatpush1.bf16.msra.mxu0 %v1526
    %2074 = vmatprep.subr.bf16.mxu0 0
    %2075 = vmatpush1.bf16.msra.mxu0 %v1527
    %2076 = vmatprep.subr.bf16.mxu0 0
    %2077 = vmatpush1.bf16.msra.mxu0 %v1528
    %2078 = vmatprep.subr.bf16.mxu0 0
    %2079 = vmatpush1.bf16.msra.mxu0 %v1529
    %2080 = vmatprep.subr.bf16.mxu0 0
    %2081 = vmatpush1.bf16.msra.mxu0 %v1530
    %2082 = vmatprep.subr.bf16.mxu0 0
    %2083 = vmatpush1.bf16.msra.mxu0 %v1531
    %2084 = vmatprep.subr.bf16.mxu0 0
    %2085 = vmatpush1.bf16.msra.mxu0 %v1532
    %2086 = vmatprep.mubr.bf16.mxu0 %v2051
    %2087 = vmatmul.mubr.bf16.gmra.mrb[0].mxu0 %v2050
    %v2088 = vpop.f32.mrb[0].mxu0
    %v2089 = vadd.f32 0.0, %v2088
    %v2090 = vpop.f32.mrb[0].mxu0
    %v2091 = vpop.f32.mrb[0].mxu0
    %v2092 = vpop.f32.mrb[0].mxu0
    %2093 = vdwg.mxu0
    %v2094 = vadd.f32 %v2049, %v2089
    %v2095 = vmax.f32 %v2094, 0.0
    %s2096 = scalar_lea.vmem %s0, 256
    %v2097 = vld [vmem:[%s2096] sm:$0xff]
    %v2098 = vld [vmem:[%s2096 + $0x8] sm:$0xff]
    %v2099 = vld [vmem:[%s2096 + $0x10] sm:$0xff]
    %v2100 = vld [vmem:[%s2096 + $0x18] sm:$0xff]
    %v2101 = vld [vmem:[%s2096 + $0x20] sm:$0xff]
    %v2102 = vld [vmem:[%s2096 + $0x28] sm:$0xff]
    %v2103 = vld [vmem:[%s2096 + $0x30] sm:$0xff]
    %v2104 = vld [vmem:[%s2096 + $0x38] sm:$0xff]
    %v2105 = vld [vmem:[%s2096 + $0x40] sm:$0xff]
    %v2106 = vld [vmem:[%s2096 + $0x48] sm:$0xff]
    %v2107 = vld [vmem:[%s2096 + $0x50] sm:$0xff]
    %v2108 = vld [vmem:[%s2096 + $0x58] sm:$0xff]
    %v2109 = vld [vmem:[%s2096 + $0x60] sm:$0xff]
    %v2110 = vld [vmem:[%s2096 + $0x68] sm:$0xff]
    %v2111 = vld [vmem:[%s2096 + $0x70] sm:$0xff]
    %v2112 = vld [vmem:[%s2096 + $0x78] sm:$0xff]
    %v2129 = vunpack.c.l.b16 %v2097
    %v2130 = vunpack.c.h.b16 %v2097
    %v2131 = vunpack.c.l.b16 %v2098
    %v2132 = vunpack.c.h.b16 %v2098
    %v2133 = vunpack.c.l.b16 %v2099
    %v2134 = vunpack.c.h.b16 %v2099
    %v2135 = vunpack.c.l.b16 %v2100
    %v2136 = vunpack.c.h.b16 %v2100
    %v2137 = vunpack.c.l.b16 %v2101
    %v2138 = vunpack.c.h.b16 %v2101
    %v2139 = vunpack.c.l.b16 %v2102
    %v2140 = vunpack.c.h.b16 %v2102
    %v2141 = vunpack.c.l.b16 %v2103
    %v2142 = vunpack.c.h.b16 %v2103
    %v2143 = vunpack.c.l.b16 %v2104
    %v2144 = vunpack.c.h.b16 %v2104
    %v2145 = vunpack.c.l.b16 %v2105
    %v2146 = vunpack.c.h.b16 %v2105
    %v2147 = vunpack.c.l.b16 %v2106
    %v2148 = vunpack.c.h.b16 %v2106
    %v2149 = vunpack.c.l.b16 %v2107
    %v2150 = vunpack.c.h.b16 %v2107
    %v2151 = vunpack.c.l.b16 %v2108
    %v2152 = vunpack.c.h.b16 %v2108
    %v2153 = vunpack.c.l.b16 %v2109
    %v2154 = vunpack.c.h.b16 %v2109
    %v2155 = vunpack.c.l.b16 %v2110
    %v2156 = vunpack.c.h.b16 %v2110
    %v2157 = vunpack.c.l.b16 %v2111
    %v2158 = vunpack.c.h.b16 %v2111
    %v2159 = vunpack.c.l.b16 %v2112
    %v2160 = vunpack.c.h.b16 %v2112
    %v2161 = vpack.c.b16 %v2131, %v2129
    %v2162 = vpack.c.b16 %v2132, %v2130
    %v2163 = vpack.c.b16 %v2135, %v2133
    %v2164 = vpack.c.b16 %v2136, %v2134
    %v2165 = vpack.c.b16 %v2139, %v2137
    %v2166 = vpack.c.b16 %v2140, %v2138
    %v2167 = vpack.c.b16 %v2143, %v2141
    %v2168 = vpack.c.b16 %v2144, %v2142
    %v2169 = vpack.c.b16 %v2147, %v2145
    %v2170 = vpack.c.b16 %v2148, %v2146
    %v2171 = vpack.c.b16 %v2151, %v2149
    %v2172 = vpack.c.b16 %v2152, %v2150
    %v2173 = vpack.c.b16 %v2155, %v2153
    %v2174 = vpack.c.b16 %v2156, %v2154
    %v2175 = vpack.c.b16 %v2159, %v2157
    %v2176 = vpack.c.b16 %v2160, %v2158
    %2193 = vmatprep.subr.bf16.mxu0 %v2162
    %2194 = vmatpush1.bf16.msra.mxu0 %v2161
    %2195 = vmatprep.subr.bf16.mxu0 %v2164
    %2196 = vmatpush1.bf16.msra.mxu0 %v2163
    %2197 = vmatprep.subr.bf16.mxu0 %v2166
    %2198 = vmatpush1.bf16.msra.mxu0 %v2165
    %2199 = vmatprep.subr.bf16.mxu0 %v2168
    %2200 = vmatpush1.bf16.msra.mxu0 %v2167
    %2201 = vmatprep.subr.bf16.mxu0 %v2170
    %2202 = vmatpush1.bf16.msra.mxu0 %v2169
    %2203 = vmatprep.subr.bf16.mxu0 %v2172
    %2204 = vmatpush1.bf16.msra.mxu0 %v2171
    %2205 = vmatprep.subr.bf16.mxu0 %v2174
    %2206 = vmatpush1.bf16.msra.mxu0 %v2173
    %2207 = vmatprep.subr.bf16.mxu0 %v2176
    %2208 = vmatpush1.bf16.msra.mxu0 %v2175
    %2209 = vmatprep.subr.bf16.mxu0 0
    %2210 = vmatpush1.bf16.msra.mxu0 0
    %2211 = vmatprep.subr.bf16.mxu0 0
    %2212 = vmatpush1.bf16.msra.mxu0 0
    %2213 = vmatprep.subr.bf16.mxu0 0
    %2214 = vmatpush1.bf16.msra.mxu0 0
    %2215 = vmatprep.subr.bf16.mxu0 0
    %2216 = vmatpush1.bf16.msra.mxu0 0
    %2217 = vmatprep.subr.bf16.mxu0 0
    %2218 = vmatpush1.bf16.msra.mxu0 0
    %2219 = vmatprep.subr.bf16.mxu0 0
    %2220 = vmatpush1.bf16.msra.mxu0 0
    %2221 = vmatprep.subr.bf16.mxu0 0
    %2222 = vmatpush1.bf16.msra.mxu0 0
    %2223 = vmatprep.subr.bf16.mxu0 0
    %2224 = vmatpush1.bf16.msra.mxu0 0
    %2225 = vmatprep.mubr.bf16.mxu0 0
    %2226 = vmatmul.mubr.bf16.gmra.mrb[0].mxu0 %v48
    %v2227 = vpop.f32.mrb[0].mxu0
    %v2228 = vadd.f32 %v70, %v2227
    %v2229 = vpop.f32.mrb[0].mxu0
    %v2230 = vadd.f32 %v70, %v2229
    %v2231 = vpop.f32.mrb[0].mxu0
    %v2232 = vpop.f32.mrb[0].mxu0
    %2233 = vdwg.mxu0
    %v2234 = vmax.f32 %v2228, 0.0
    %v2235 = vmax.f32 %v2230, 0.0
    %v2236 = vpack.c.bf16 %v2234, %v2234
    %v2237 = vpack.c.bf16 %v2235, %v2235
    %2238 = vmatprep.subr.bf16.mxu0 0
    %2239 = vmatpush1.bf16.msra.mxu0 %v293
    %2240 = vmatprep.subr.bf16.mxu0 0
    %2241 = vmatpush1.bf16.msra.mxu0 %v294
    %2242 = vmatprep.subr.bf16.mxu0 0
    %2243 = vmatpush1.bf16.msra.mxu0 %v295
    %2244 = vmatprep.subr.bf16.mxu0 0
    %2245 = vmatpush1.bf16.msra.mxu0 %v296
    %2246 = vmatprep.subr.bf16.mxu0 0
    %2247 = vmatpush1.bf16.msra.mxu0 %v297
    %2248 = vmatprep.subr.bf16.mxu0 0
    %2249 = vmatpush1.bf16.msra.mxu0 %v298
    %2250 = vmatprep.subr.bf16.mxu0 0
    %2251 = vmatpush1.bf16.msra.mxu0 %v299
    %2252 = vmatprep.subr.bf16.mxu0 0
    %2253 = vmatpush1.bf16.msra.mxu0 %v300
    %2254 = vmatprep.subr.bf16.mxu0 0
    %2255 = vmatpush1.bf16.msra.mxu0 %v301
    %2256 = vmatprep.subr.bf16.mxu0 0
    %2257 = vmatpush1.bf16.msra.mxu0 %v302
    %2258 = vmatprep.subr.bf16.mxu0 0
    %2259 = vmatpush1.bf16.msra.mxu0 %v303
    %2260 = vmatprep.subr.bf16.mxu0 0
    %2261 = vmatpush1.bf16.msra.mxu0 %v304
    %2262 = vmatprep.subr.bf16.mxu0 0
    %2263 = vmatpush1.bf16.msra.mxu0 %v305
    %2264 = vmatprep.subr.bf16.mxu0 0
    %2265 = vmatpush1.bf16.msra.mxu0 %v306
    %2266 = vmatprep.subr.bf16.mxu0 0
    %2267 = vmatpush1.bf16.msra.mxu0 %v307
    %2268 = vmatprep.subr.bf16.mxu0 0
    %2269 = vmatpush1.bf16.msra.mxu0 %v308
    %2270 = vmatprep.mubr.bf16.mxu0 %v2237
    %2271 = vmatmul.mubr.bf16.gmra.mrb[0].mxu0 %v2236
    %v2272 = vpop.f32.mrb[0].mxu0
    %v2273 = vadd.f32 0.0, %v2272
    %v2274 = vpop.f32.mrb[0].mxu0
    %v2275 = vpop.f32.mrb[0].mxu0
    %v2276 = vpop.f32.mrb[0].mxu0
    %2277 = vdwg.mxu0
    %v2278 = vadd.f32 %v50, %v2273
    %v2280 = vshrl.u32 %v2236, 16
    %v2283 = vshrl.u32 %v2237, 16
    %2287 = vmatprep.subr.bf16.mxu0 0
    %2288 = vmatpush1.bf16.msra.mxu0 %v471
    %2289 = vmatprep.subr.bf16.mxu0 0
    %2290 = vmatpush1.bf16.msra.mxu0 %v472
    %2291 = vmatprep.subr.bf16.mxu0 0
    %2292 = vmatpush1.bf16.msra.mxu0 %v473
    %2293 = vmatprep.subr.bf16.mxu0 0
    %2294 = vmatpush1.bf16.msra.mxu0 %v474
    %2295 = vmatprep.subr.bf16.mxu0 0
    %2296 = vmatpush1.bf16.msra.mxu0 %v475
    %2297 = vmatprep.subr.bf16.mxu0 0
    %2298 = vmatpush1.bf16.msra.mxu0 %v476
    %2299 = vmatprep.subr.bf16.mxu0 0
    %2300 = vmatpush1.bf16.msra.mxu0 %v477
    %2301 = vmatprep.subr.bf16.mxu0 0
    %2302 = vmatpush1.bf16.msra.mxu0 %v478
    %2303 = vmatprep.subr.bf16.mxu0 0
    %2304 = vmatpush1.bf16.msra.mxu0 %v479
    %2305 = vmatprep.subr.bf16.mxu0 0
    %2306 = vmatpush1.bf16.msra.mxu0 %v480
    %2307 = vmatprep.subr.bf16.mxu0 0
    %2308 = vmatpush1.bf16.msra.mxu0 %v481
    %2309 = vmatprep.subr.bf16.mxu0 0
    %2310 = vmatpush1.bf16.msra.mxu0 %v482
    %2311 = vmatprep.subr.bf16.mxu0 0
    %2312 = vmatpush1.bf16.msra.mxu0 %v483
    %2313 = vmatprep.subr.bf16.mxu0 0
    %2314 = vmatpush1.bf16.msra.mxu0 %v484
    %2315 = vmatprep.subr.bf16.mxu0 0
    %2316 = vmatpush1.bf16.msra.mxu0 %v485
    %2317 = vmatprep.subr.bf16.mxu0 0
    %2318 = vmatpush1.bf16.msra.mxu0 %v486
    %2319 = vmatprep.mubr.bf16.mxu0 %v2283
    %2320 = vmatmul.mubr.bf16.gmra.mrb[0].mxu0 %v2280
    %v2321 = vpop.f32.mrb[0].mxu0
    %v2322 = vadd.f32 0.0, %v2321
    %v2323 = vpop.f32.mrb[0].mxu0
    %v2324 = vpop.f32.mrb[0].mxu0
    %v2325 = vpop.f32.mrb[0].mxu0
    %2326 = vdwg.mxu0
    %v2327 = vadd.f32 %v2278, %v2322
    %v2330 = vrot.slane %v2236, 1
    %v2331 = vrot.slane %v2237, 1
    %2334 = vmatprep.subr.bf16.mxu0 0
    %2335 = vmatpush1.bf16.msra.mxu0 %v647
    %2336 = vmatprep.subr.bf16.mxu0 0
    %2337 = vmatpush1.bf16.msra.mxu0 %v648
    %2338 = vmatprep.subr.bf16.mxu0 0
    %2339 = vmatpush1.bf16.msra.mxu0 %v649
    %2340 = vmatprep.subr.bf16.mxu0 0
    %2341 = vmatpush1.bf16.msra.mxu0 %v650
    %2342 = vmatprep.subr.bf16.mxu0 0
    %2343 = vmatpush1.bf16.msra.mxu0 %v651
    %2344 = vmatprep.subr.bf16.mxu0 0
    %2345 = vmatpush1.bf16.msra.mxu0 %v652
    %2346 = vmatprep.subr.bf16.mxu0 0
    %2347 = vmatpush1.bf16.msra.mxu0 %v653
    %2348 = vmatprep.subr.bf16.mxu0 0
    %2349 = vmatpush1.bf16.msra.mxu0 %v654
    %2350 = vmatprep.subr.bf16.mxu0 0
    %2351 = vmatpush1.bf16.msra.mxu0 %v655
    %2352 = vmatprep.subr.bf16.mxu0 0
    %2353 = vmatpush1.bf16.msra.mxu0 %v656
    %2354 = vmatprep.subr.bf16.mxu0 0
    %2355 = vmatpush1.bf16.msra.mxu0 %v657
    %2356 = vmatprep.subr.bf16.mxu0 0
    %2357 = vmatpush1.bf16.msra.mxu0 %v658
    %2358 = vmatprep.subr.bf16.mxu0 0
    %2359 = vmatpush1.bf16.msra.mxu0 %v659
    %2360 = vmatprep.subr.bf16.mxu0 0
    %2361 = vmatpush1.bf16.msra.mxu0 %v660
    %2362 = vmatprep.subr.bf16.mxu0 0
    %2363 = vmatpush1.bf16.msra.mxu0 %v661
    %2364 = vmatprep.subr.bf16.mxu0 0
    %2365 = vmatpush1.bf16.msra.mxu0 %v662
    %2366 = vmatprep.mubr.bf16.mxu0 %v2331
    %2367 = vmatmul.mubr.bf16.gmra.mrb[0].mxu0 %v2330
    %v2368 = vpop.f32.mrb[0].mxu0
    %v2369 = vadd.f32 0.0, %v2368
    %v2370 = vpop.f32.mrb[0].mxu0
    %v2371 = vpop.f32.mrb[0].mxu0
    %v2372 = vpop.f32.mrb[0].mxu0
    %2373 = vdwg.mxu0
    %v2374 = vadd.f32 %v2327, %v2369
    %v2375 = vrot.slane %v2280, 1
    %v2376 = vrot.slane %v2283, 1
    %2379 = vmatprep.subr.bf16.mxu0 0
    %2380 = vmatpush1.bf16.msra.mxu0 %v821
    %2381 = vmatprep.subr.bf16.mxu0 0
    %2382 = vmatpush1.bf16.msra.mxu0 %v822
    %2383 = vmatprep.subr.bf16.mxu0 0
    %2384 = vmatpush1.bf16.msra.mxu0 %v823
    %2385 = vmatprep.subr.bf16.mxu0 0
    %2386 = vmatpush1.bf16.msra.mxu0 %v824
    %2387 = vmatprep.subr.bf16.mxu0 0
    %2388 = vmatpush1.bf16.msra.mxu0 %v825
    %2389 = vmatprep.subr.bf16.mxu0 0
    %2390 = vmatpush1.bf16.msra.mxu0 %v826
    %2391 = vmatprep.subr.bf16.mxu0 0
    %2392 = vmatpush1.bf16.msra.mxu0 %v827
    %2393 = vmatprep.subr.bf16.mxu0 0
    %2394 = vmatpush1.bf16.msra.mxu0 %v828
    %2395 = vmatprep.subr.bf16.mxu0 0
    %2396 = vmatpush1.bf16.msra.mxu0 %v829
    %2397 = vmatprep.subr.bf16.mxu0 0
    %2398 = vmatpush1.bf16.msra.mxu0 %v830
    %2399 = vmatprep.subr.bf16.mxu0 0
    %2400 = vmatpush1.bf16.msra.mxu0 %v831
    %2401 = vmatprep.subr.bf16.mxu0 0
    %2402 = vmatpush1.bf16.msra.mxu0 %v832
    %2403 = vmatprep.subr.bf16.mxu0 0
    %2404 = vmatpush1.bf16.msra.mxu0 %v833
    %2405 = vmatprep.subr.bf16.mxu0 0
    %2406 = vmatpush1.bf16.msra.mxu0 %v834
    %2407 = vmatprep.subr.bf16.mxu0 0
    %2408 = vmatpush1.bf16.msra.mxu0 %v835
    %2409 = vmatprep.subr.bf16.mxu0 0
    %2410 = vmatpush1.bf16.msra.mxu0 %v836
    %2411 = vmatprep.mubr.bf16.mxu0 %v2376
    %2412 = vmatmul.mubr.bf16.gmra.mrb[0].mxu0 %v2375
    %v2413 = vpop.f32.mrb[0].mxu0
    %v2414 = vadd.f32 0.0, %v2413
    %v2415 = vpop.f32.mrb[0].mxu0
    %v2416 = vpop.f32.mrb[0].mxu0
    %v2417 = vpop.f32.mrb[0].mxu0
    %2418 = vdwg.mxu0
    %v2419 = vadd.f32 %v2374, %v2414
    %v2420 = vrot.slane %v2236, 2
    %v2421 = vrot.slane %v2237, 2
    %2424 = vmatprep.subr.bf16.mxu0 0
    %2425 = vmatpush1.bf16.msra.mxu0 %v995
    %2426 = vmatprep.subr.bf16.mxu0 0
    %2427 = vmatpush1.bf16.msra.mxu0 %v996
    %2428 = vmatprep.subr.bf16.mxu0 0
    %2429 = vmatpush1.bf16.msra.mxu0 %v997
    %2430 = vmatprep.subr.bf16.mxu0 0
    %2431 = vmatpush1.bf16.msra.mxu0 %v998
    %2432 = vmatprep.subr.bf16.mxu0 0
    %2433 = vmatpush1.bf16.msra.mxu0 %v999
    %2434 = vmatprep.subr.bf16.mxu0 0
    %2435 = vmatpush1.bf16.msra.mxu0 %v1000
    %2436 = vmatprep.subr.bf16.mxu0 0
    %2437 = vmatpush1.bf16.msra.mxu0 %v1001
    %2438 = vmatprep.subr.bf16.mxu0 0
    %2439 = vmatpush1.bf16.msra.mxu0 %v1002
    %2440 = vmatprep.subr.bf16.mxu0 0
    %2441 = vmatpush1.bf16.msra.mxu0 %v1003
    %2442 = vmatprep.subr.bf16.mxu0 0
    %2443 = vmatpush1.bf16.msra.mxu0 %v1004
    %2444 = vmatprep.subr.bf16.mxu0 0
    %2445 = vmatpush1.bf16.msra.mxu0 %v1005
    %2446 = vmatprep.subr.bf16.mxu0 0
    %2447 = vmatpush1.bf16.msra.mxu0 %v1006
    %2448 = vmatprep.subr.bf16.mxu0 0
    %2449 = vmatpush1.bf16.msra.mxu0 %v1007
    %2450 = vmatprep.subr.bf16.mxu0 0
    %2451 = vmatpush1.bf16.msra.mxu0 %v1008
    %2452 = vmatprep.subr.bf16.mxu0 0
    %2453 = vmatpush1.bf16.msra.mxu0 %v1009
    %2454 = vmatprep.subr.bf16.mxu0 0
    %2455 = vmatpush1.bf16.msra.mxu0 %v1010
    %2456 = vmatprep.mubr.bf16.mxu0 %v2421
    %2457 = vmatmul.mubr.bf16.gmra.mrb[0].mxu0 %v2420
    %v2458 = vpop.f32.mrb[0].mxu0
    %v2459 = vadd.f32 0.0, %v2458
    %v2460 = vpop.f32.mrb[0].mxu0
    %v2461 = vpop.f32.mrb[0].mxu0
    %v2462 = vpop.f32.mrb[0].mxu0
    %2463 = vdwg.mxu0
    %v2464 = vadd.f32 %v2419, %v2459
    %v2465 = vrot.slane %v2280, 2
    %v2466 = vrot.slane %v2283, 2
    %2469 = vmatprep.subr.bf16.mxu0 0
    %2470 = vmatpush1.bf16.msra.mxu0 %v1169
    %2471 = vmatprep.subr.bf16.mxu0 0
    %2472 = vmatpush1.bf16.msra.mxu0 %v1170
    %2473 = vmatprep.subr.bf16.mxu0 0
    %2474 = vmatpush1.bf16.msra.mxu0 %v1171
    %2475 = vmatprep.subr.bf16.mxu0 0
    %2476 = vmatpush1.bf16.msra.mxu0 %v1172
    %2477 = vmatprep.subr.bf16.mxu0 0
    %2478 = vmatpush1.bf16.msra.mxu0 %v1173
    %2479 = vmatprep.subr.bf16.mxu0 0
    %2480 = vmatpush1.bf16.msra.mxu0 %v1174
    %2481 = vmatprep.subr.bf16.mxu0 0
    %2482 = vmatpush1.bf16.msra.mxu0 %v1175
    %2483 = vmatprep.subr.bf16.mxu0 0
    %2484 = vmatpush1.bf16.msra.mxu0 %v1176
    %2485 = vmatprep.subr.bf16.mxu0 0
    %2486 = vmatpush1.bf16.msra.mxu0 %v1177
    %2487 = vmatprep.subr.bf16.mxu0 0
    %2488 = vmatpush1.bf16.msra.mxu0 %v1178
    %2489 = vmatprep.subr.bf16.mxu0 0
    %2490 = vmatpush1.bf16.msra.mxu0 %v1179
    %2491 = vmatprep.subr.bf16.mxu0 0
    %2492 = vmatpush1.bf16.msra.mxu0 %v1180
    %2493 = vmatprep.subr.bf16.mxu0 0
    %2494 = vmatpush1.bf16.msra.mxu0 %v1181
    %2495 = vmatprep.subr.bf16.mxu0 0
    %2496 = vmatpush1.bf16.msra.mxu0 %v1182
    %2497 = vmatprep.subr.bf16.mxu0 0
    %2498 = vmatpush1.bf16.msra.mxu0 %v1183
    %2499 = vmatprep.subr.bf16.mxu0 0
    %2500 = vmatpush1.bf16.msra.mxu0 %v1184
    %2501 = vmatprep.mubr.bf16.mxu0 %v2466
    %2502 = vmatmul.mubr.bf16.gmra.mrb[0].mxu0 %v2465
    %v2503 = vpop.f32.mrb[0].mxu0
    %v2504 = vadd.f32 0.0, %v2503
    %v2505 = vpop.f32.mrb[0].mxu0
    %v2506 = vpop.f32.mrb[0].mxu0
    %v2507 = vpop.f32.mrb[0].mxu0
    %2508 = vdwg.mxu0
    %v2509 = vadd.f32 %v2464, %v2504
    %v2510 = vrot.slane %v2236, 3
    %v2511 = vrot.slane %v2237, 3
    %2514 = vmatprep.subr.bf16.mxu0 0
    %2515 = vmatpush1.bf16.msra.mxu0 %v1343
    %2516 = vmatprep.subr.bf16.mxu0 0
    %2517 = vmatpush1.bf16.msra.mxu0 %v1344
    %2518 = vmatprep.subr.bf16.mxu0 0
    %2519 = vmatpush1.bf16.msra.mxu0 %v1345
    %2520 = vmatprep.subr.bf16.mxu0 0
    %2521 = vmatpush1.bf16.msra.mxu0 %v1346
    %2522 = vmatprep.subr.bf16.mxu0 0
    %2523 = vmatpush1.bf16.msra.mxu0 %v1347
    %2524 = vmatprep.subr.bf16.mxu0 0
    %2525 = vmatpush1.bf16.msra.mxu0 %v1348
    %2526 = vmatprep.subr.bf16.mxu0 0
    %2527 = vmatpush1.bf16.msra.mxu0 %v1349
    %2528 = vmatprep.subr.bf16.mxu0 0
    %2529 = vmatpush1.bf16.msra.mxu0 %v1350
    %2530 = vmatprep.subr.bf16.mxu0 0
    %2531 = vmatpush1.bf16.msra.mxu0 %v1351
    %2532 = vmatprep.subr.bf16.mxu0 0
    %2533 = vmatpush1.bf16.msra.mxu0 %v1352
    %2534 = vmatprep.subr.bf16.mxu0 0
    %2535 = vmatpush1.bf16.msra.mxu0 %v1353
    %2536 = vmatprep.subr.bf16.mxu0 0
    %2537 = vmatpush1.bf16.msra.mxu0 %v1354
    %2538 = vmatprep.subr.bf16.mxu0 0
    %2539 = vmatpush1.bf16.msra.mxu0 %v1355
    %2540 = vmatprep.subr.bf16.mxu0 0
    %2541 = vmatpush1.bf16.msra.mxu0 %v1356
    %2542 = vmatprep.subr.bf16.mxu0 0
    %2543 = vmatpush1.bf16.msra.mxu0 %v1357
    %2544 = vmatprep.subr.bf16.mxu0 0
    %2545 = vmatpush1.bf16.msra.mxu0 %v1358
    %2546 = vmatprep.mubr.bf16.mxu0 %v2511
    %2547 = vmatmul.mubr.bf16.gmra.mrb[0].mxu0 %v2510
    %v2548 = vpop.f32.mrb[0].mxu0
    %v2549 = vadd.f32 0.0, %v2548
    %v2550 = vpop.f32.mrb[0].mxu0
    %v2551 = vpop.f32.mrb[0].mxu0
    %v2552 = vpop.f32.mrb[0].mxu0
    %2553 = vdwg.mxu0
    %v2554 = vadd.f32 %v2509, %v2549
    %v2555 = vrot.slane %v2280, 3
    %v2556 = vrot.slane %v2283, 3
    %2559 = vmatprep.subr.bf16.mxu0 0
    %2560 = vmatpush1.bf16.msra.mxu0 %v1517
    %2561 = vmatprep.subr.bf16.mxu0 0
    %2562 = vmatpush1.bf16.msra.mxu0 %v1518
    %2563 = vmatprep.subr.bf16.mxu0 0
    %2564 = vmatpush1.bf16.msra.mxu0 %v1519
    %2565 = vmatprep.subr.bf16.mxu0 0
    %2566 = vmatpush1.bf16.msra.mxu0 %v1520
    %2567 = vmatprep.subr.bf16.mxu0 0
    %2568 = vmatpush1.bf16.msra.mxu0 %v1521
    %2569 = vmatprep.subr.bf16.mxu0 0
    %2570 = vmatpush1.bf16.msra.mxu0 %v1522
    %2571 = vmatprep.subr.bf16.mxu0 0
    %2572 = vmatpush1.bf16.msra.mxu0 %v1523
    %2573 = vmatprep.subr.bf16.mxu0 0
    %2574 = vmatpush1.bf16.msra.mxu0 %v1524
    %2575 = vmatprep.subr.bf16.mxu0 0
    %2576 = vmatpush1.bf16.msra.mxu0 %v1525
    %2577 = vmatprep.subr.bf16.mxu0 0
    %2578 = vmatpush1.bf16.msra.mxu0 %v1526
    %2579 = vmatprep.subr.bf16.mxu0 0
    %2580 = vmatpush1.bf16.msra.mxu0 %v1527
    %2581 = vmatprep.subr.bf16.mxu0 0
    %2582 = vmatpush1.bf16.msra.mxu0 %v1528
    %2583 = vmatprep.subr.bf16.mxu0 0
    %2584 = vmatpush1.bf16.msra.mxu0 %v1529
    %2585 = vmatprep.subr.bf16.mxu0 0
    %2586 = vmatpush1.bf16.msra.mxu0 %v1530
    %2587 = vmatprep.subr.bf16.mxu0 0
    %2588 = vmatpush1.bf16.msra.mxu0 %v1531
    %2589 = vmatprep.subr.bf16.mxu0 0
    %2590 = vmatpush1.bf16.msra.mxu0 %v1532
    %2591 = vmatprep.mubr.bf16.mxu0 %v2556
    %2592 = vmatmul.mubr.bf16.gmra.mrb[0].mxu0 %v2555
    %v2593 = vpop.f32.mrb[0].mxu0
    %v2594 = vadd.f32 0.0, %v2593
    %v2595 = vpop.f32.mrb[0].mxu0
    %v2596 = vpop.f32.mrb[0].mxu0
    %v2597 = vpop.f32.mrb[0].mxu0
    %2598 = vdwg.mxu0
    %v2599 = vadd.f32 %v2554, %v2594
    %v2600 = vmax.f32 %v2599, 0.0
    %s2601 = scalar_lea.vmem %s0, 384
    %v2602 = vld [vmem:[%s2601] sm:$0xff]
    %v2603 = vld [vmem:[%s2601 + $0x8] sm:$0xff]
    %v2604 = vld [vmem:[%s2601 + $0x10] sm:$0xff]
    %v2605 = vld [vmem:[%s2601 + $0x18] sm:$0xff]
    %v2606 = vld [vmem:[%s2601 + $0x20] sm:$0xff]
    %v2607 = vld [vmem:[%s2601 + $0x28] sm:$0xff]
    %v2608 = vld [vmem:[%s2601 + $0x30] sm:$0xff]
    %v2609 = vld [vmem:[%s2601 + $0x38] sm:$0xff]
    %v2610 = vld [vmem:[%s2601 + $0x40] sm:$0xff]
    %v2611 = vld [vmem:[%s2601 + $0x48] sm:$0xff]
    %v2612 = vld [vmem:[%s2601 + $0x50] sm:$0xff]
    %v2613 = vld [vmem:[%s2601 + $0x58] sm:$0xff]
    %v2614 = vld [vmem:[%s2601 + $0x60] sm:$0xff]
    %v2615 = vld [vmem:[%s2601 + $0x68] sm:$0xff]
    %v2616 = vld [vmem:[%s2601 + $0x70] sm:$0xff]
    %v2617 = vld [vmem:[%s2601 + $0x78] sm:$0xff]
    %v2634 = vunpack.c.l.b16 %v2602
    %v2635 = vunpack.c.h.b16 %v2602
    %v2636 = vunpack.c.l.b16 %v2603
    %v2637 = vunpack.c.h.b16 %v2603
    %v2638 = vunpack.c.l.b16 %v2604
    %v2639 = vunpack.c.h.b16 %v2604
    %v2640 = vunpack.c.l.b16 %v2605
    %v2641 = vunpack.c.h.b16 %v2605
    %v2642 = vunpack.c.l.b16 %v2606
    %v2643 = vunpack.c.h.b16 %v2606
    %v2644 = vunpack.c.l.b16 %v2607
    %v2645 = vunpack.c.h.b16 %v2607
    %v2646 = vunpack.c.l.b16 %v2608
    %v2647 = vunpack.c.h.b16 %v2608
    %v2648 = vunpack.c.l.b16 %v2609
    %v2649 = vunpack.c.h.b16 %v2609
    %v2650 = vunpack.c.l.b16 %v2610
    %v2651 = vunpack.c.h.b16 %v2610
    %v2652 = vunpack.c.l.b16 %v2611
    %v2653 = vunpack.c.h.b16 %v2611
    %v2654 = vunpack.c.l.b16 %v2612
    %v2655 = vunpack.c.h.b16 %v2612
    %v2656 = vunpack.c.l.b16 %v2613
    %v2657 = vunpack.c.h.b16 %v2613
    %v2658 = vunpack.c.l.b16 %v2614
    %v2659 = vunpack.c.h.b16 %v2614
    %v2660 = vunpack.c.l.b16 %v2615
    %v2661 = vunpack.c.h.b16 %v2615
    %v2662 = vunpack.c.l.b16 %v2616
    %v2663 = vunpack.c.h.b16 %v2616
    %v2664 = vunpack.c.l.b16 %v2617
    %v2665 = vunpack.c.h.b16 %v2617
    %v2666 = vpack.c.b16 %v2636, %v2634
    %v2667 = vpack.c.b16 %v2637, %v2635
    %v2668 = vpack.c.b16 %v2640, %v2638
    %v2669 = vpack.c.b16 %v2641, %v2639
    %v2670 = vpack.c.b16 %v2644, %v2642
    %v2671 = vpack.c.b16 %v2645, %v2643
    %v2672 = vpack.c.b16 %v2648, %v2646
    %v2673 = vpack.c.b16 %v2649, %v2647
    %v2674 = vpack.c.b16 %v2652, %v2650
    %v2675 = vpack.c.b16 %v2653, %v2651
    %v2676 = vpack.c.b16 %v2656, %v2654
    %v2677 = vpack.c.b16 %v2657, %v2655
    %v2678 = vpack.c.b16 %v2660, %v2658
    %v2679 = vpack.c.b16 %v2661, %v2659
    %v2680 = vpack.c.b16 %v2664, %v2662
    %v2681 = vpack.c.b16 %v2665, %v2663
    %2698 = vmatprep.subr.bf16.mxu0 %v2667
    %2699 = vmatpush1.bf16.msra.mxu0 %v2666
    %2700 = vmatprep.subr.bf16.mxu0 %v2669
    %2701 = vmatpush1.bf16.msra.mxu0 %v2668
    %2702 = vmatprep.subr.bf16.mxu0 %v2671
    %2703 = vmatpush1.bf16.msra.mxu0 %v2670
    %2704 = vmatprep.subr.bf16.mxu0 %v2673
    %2705 = vmatpush1.bf16.msra.mxu0 %v2672
    %2706 = vmatprep.subr.bf16.mxu0 %v2675
    %2707 = vmatpush1.bf16.msra.mxu0 %v2674
    %2708 = vmatprep.subr.bf16.mxu0 %v2677
    %2709 = vmatpush1.bf16.msra.mxu0 %v2676
    %2710 = vmatprep.subr.bf16.mxu0 %v2679
    %2711 = vmatpush1.bf16.msra.mxu0 %v2678
    %2712 = vmatprep.subr.bf16.mxu0 %v2681
    %2713 = vmatpush1.bf16.msra.mxu0 %v2680
    %2714 = vmatprep.subr.bf16.mxu0 0
    %2715 = vmatpush1.bf16.msra.mxu0 0
    %2716 = vmatprep.subr.bf16.mxu0 0
    %2717 = vmatpush1.bf16.msra.mxu0 0
    %2718 = vmatprep.subr.bf16.mxu0 0
    %2719 = vmatpush1.bf16.msra.mxu0 0
    %2720 = vmatprep.subr.bf16.mxu0 0
    %2721 = vmatpush1.bf16.msra.mxu0 0
    %2722 = vmatprep.subr.bf16.mxu0 0
    %2723 = vmatpush1.bf16.msra.mxu0 0
    %2724 = vmatprep.subr.bf16.mxu0 0
    %2725 = vmatpush1.bf16.msra.mxu0 0
    %2726 = vmatprep.subr.bf16.mxu0 0
    %2727 = vmatpush1.bf16.msra.mxu0 0
    %2728 = vmatprep.subr.bf16.mxu0 0
    %2729 = vmatpush1.bf16.msra.mxu0 0
    %2730 = vmatprep.mubr.bf16.mxu0 0
    %2731 = vmatmul.mubr.bf16.gmra.mrb[0].mxu0 %v48
    %v2732 = vpop.f32.mrb[0].mxu0
    %v2733 = vadd.f32 %v70, %v2732
    %v2734 = vpop.f32.mrb[0].mxu0
    %v2735 = vadd.f32 %v70, %v2734
    %v2736 = vpop.f32.mrb[0].mxu0
    %v2737 = vpop.f32.mrb[0].mxu0
    %2738 = vdwg.mxu0
    %v2739 = vmax.f32 %v2733, 0.0
    %v2740 = vmax.f32 %v2735, 0.0
    %v2741 = vpack.c.bf16 %v2739, %v2739
    %v2742 = vpack.c.bf16 %v2740, %v2740
    %2743 = vmatprep.subr.bf16.mxu0 0
    %2744 = vmatpush1.bf16.msra.mxu0 %v293
    %2745 = vmatprep.subr.bf16.mxu0 0
    %2746 = vmatpush1.bf16.msra.mxu0 %v294
    %2747 = vmatprep.subr.bf16.mxu0 0
    %2748 = vmatpush1.bf16.msra.mxu0 %v295
    %2749 = vmatprep.subr.bf16.mxu0 0
    %2750 = vmatpush1.bf16.msra.mxu0 %v296
    %2751 = vmatprep.subr.bf16.mxu0 0
    %2752 = vmatpush1.bf16.msra.mxu0 %v297
    %2753 = vmatprep.subr.bf16.mxu0 0
    %2754 = vmatpush1.bf16.msra.mxu0 %v298
    %2755 = vmatprep.subr.bf16.mxu0 0
    %2756 = vmatpush1.bf16.msra.mxu0 %v299
    %2757 = vmatprep.subr.bf16.mxu0 0
    %2758 = vmatpush1.bf16.msra.mxu0 %v300
    %2759 = vmatprep.subr.bf16.mxu0 0
    %2760 = vmatpush1.bf16.msra.mxu0 %v301
    %2761 = vmatprep.subr.bf16.mxu0 0
    %2762 = vmatpush1.bf16.msra.mxu0 %v302
    %2763 = vmatprep.subr.bf16.mxu0 0
    %2764 = vmatpush1.bf16.msra.mxu0 %v303
    %2765 = vmatprep.subr.bf16.mxu0 0
    %2766 = vmatpush1.bf16.msra.mxu0 %v304
    %2767 = vmatprep.subr.bf16.mxu0 0
    %2768 = vmatpush1.bf16.msra.mxu0 %v305
    %2769 = vmatprep.subr.bf16.mxu0 0
    %2770 = vmatpush1.bf16.msra.mxu0 %v306
    %2771 = vmatprep.subr.bf16.mxu0 0
    %2772 = vmatpush1.bf16.msra.mxu0 %v307
    %2773 = vmatprep.subr.bf16.mxu0 0
    %2774 = vmatpush1.bf16.msra.mxu0 %v308
    %2775 = vmatprep.mubr.bf16.mxu0 %v2742
    %2776 = vmatmul.mubr.bf16.gmra.mrb[0].mxu0 %v2741
    %v2777 = vpop.f32.mrb[0].mxu0
    %v2778 = vadd.f32 0.0, %v2777
    %v2779 = vpop.f32.mrb[0].mxu0
    %v2780 = vpop.f32.mrb[0].mxu0
    %v2781 = vpop.f32.mrb[0].mxu0
    %2782 = vdwg.mxu0
    %v2783 = vadd.f32 %v50, %v2778
    %v2785 = vshrl.u32 %v2741, 16
    %v2788 = vshrl.u32 %v2742, 16
    %2792 = vmatprep.subr.bf16.mxu0 0
    %2793 = vmatpush1.bf16.msra.mxu0 %v471
    %2794 = vmatprep.subr.bf16.mxu0 0
    %2795 = vmatpush1.bf16.msra.mxu0 %v472
    %2796 = vmatprep.subr.bf16.mxu0 0
    %2797 = vmatpush1.bf16.msra.mxu0 %v473
    %2798 = vmatprep.subr.bf16.mxu0 0
    %2799 = vmatpush1.bf16.msra.mxu0 %v474
    %2800 = vmatprep.subr.bf16.mxu0 0
    %2801 = vmatpush1.bf16.msra.mxu0 %v475
    %2802 = vmatprep.subr.bf16.mxu0 0
    %2803 = vmatpush1.bf16.msra.mxu0 %v476
    %2804 = vmatprep.subr.bf16.mxu0 0
    %2805 = vmatpush1.bf16.msra.mxu0 %v477
    %2806 = vmatprep.subr.bf16.mxu0 0
    %2807 = vmatpush1.bf16.msra.mxu0 %v478
    %2808 = vmatprep.subr.bf16.mxu0 0
    %2809 = vmatpush1.bf16.msra.mxu0 %v479
    %2810 = vmatprep.subr.bf16.mxu0 0
    %2811 = vmatpush1.bf16.msra.mxu0 %v480
    %2812 = vmatprep.subr.bf16.mxu0 0
    %2813 = vmatpush1.bf16.msra.mxu0 %v481
    %2814 = vmatprep.subr.bf16.mxu0 0
    %2815 = vmatpush1.bf16.msra.mxu0 %v482
    %2816 = vmatprep.subr.bf16.mxu0 0
    %2817 = vmatpush1.bf16.msra.mxu0 %v483
    %2818 = vmatprep.subr.bf16.mxu0 0
    %2819 = vmatpush1.bf16.msra.mxu0 %v484
    %2820 = vmatprep.subr.bf16.mxu0 0
    %2821 = vmatpush1.bf16.msra.mxu0 %v485
    %2822 = vmatprep.subr.bf16.mxu0 0
    %2823 = vmatpush1.bf16.msra.mxu0 %v486
    %2824 = vmatprep.mubr.bf16.mxu0 %v2788
    %2825 = vmatmul.mubr.bf16.gmra.mrb[0].mxu0 %v2785
    %v2826 = vpop.f32.mrb[0].mxu0
    %v2827 = vadd.f32 0.0, %v2826
    %v2828 = vpop.f32.mrb[0].mxu0
    %v2829 = vpop.f32.mrb[0].mxu0
    %v2830 = vpop.f32.mrb[0].mxu0
    %2831 = vdwg.mxu0
    %v2832 = vadd.f32 %v2783, %v2827
    %v2835 = vrot.slane %v2741, 1
    %v2836 = vrot.slane %v2742, 1
    %2839 = vmatprep.subr.bf16.mxu0 0
    %2840 = vmatpush1.bf16.msra.mxu0 %v647
    %2841 = vmatprep.subr.bf16.mxu0 0
    %2842 = vmatpush1.bf16.msra.mxu0 %v648
    %2843 = vmatprep.subr.bf16.mxu0 0
    %2844 = vmatpush1.bf16.msra.mxu0 %v649
    %2845 = vmatprep.subr.bf16.mxu0 0
    %2846 = vmatpush1.bf16.msra.mxu0 %v650
    %2847 = vmatprep.subr.bf16.mxu0 0
    %2848 = vmatpush1.bf16.msra.mxu0 %v651
    %2849 = vmatprep.subr.bf16.mxu0 0
    %2850 = vmatpush1.bf16.msra.mxu0 %v652
    %2851 = vmatprep.subr.bf16.mxu0 0
    %2852 = vmatpush1.bf16.msra.mxu0 %v653
    %2853 = vmatprep.subr.bf16.mxu0 0
    %2854 = vmatpush1.bf16.msra.mxu0 %v654
    %2855 = vmatprep.subr.bf16.mxu0 0
    %2856 = vmatpush1.bf16.msra.mxu0 %v655
    %2857 = vmatprep.subr.bf16.mxu0 0
    %2858 = vmatpush1.bf16.msra.mxu0 %v656
    %2859 = vmatprep.subr.bf16.mxu0 0
    %2860 = vmatpush1.bf16.msra.mxu0 %v657
    %2861 = vmatprep.subr.bf16.mxu0 0
    %2862 = vmatpush1.bf16.msra.mxu0 %v658
    %2863 = vmatprep.subr.bf16.mxu0 0
    %2864 = vmatpush1.bf16.msra.mxu0 %v659
    %2865 = vmatprep.subr.bf16.mxu0 0
    %2866 = vmatpush1.bf16.msra.mxu0 %v660
    %2867 = vmatprep.subr.bf16.mxu0 0
    %2868 = vmatpush1.bf16.msra.mxu0 %v661
    %2869 = vmatprep.subr.bf16.mxu0 0
    %2870 = vmatpush1.bf16.msra.mxu0 %v662
    %2871 = vmatprep.mubr.bf16.mxu0 %v2836
    %2872 = vmatmul.mubr.bf16.gmra.mrb[0].mxu0 %v2835
    %v2873 = vpop.f32.mrb[0].mxu0
    %v2874 = vadd.f32 0.0, %v2873
    %v2875 = vpop.f32.mrb[0].mxu0
    %v2876 = vpop.f32.mrb[0].mxu0
    %v2877 = vpop.f32.mrb[0].mxu0
    %2878 = vdwg.mxu0
    %v2879 = vadd.f32 %v2832, %v2874
    %v2880 = vrot.slane %v2785, 1
    %v2881 = vrot.slane %v2788, 1
    %2884 = vmatprep.subr.bf16.mxu0 0
    %2885 = vmatpush1.bf16.msra.mxu0 %v821
    %2886 = vmatprep.subr.bf16.mxu0 0
    %2887 = vmatpush1.bf16.msra.mxu0 %v822
    %2888 = vmatprep.subr.bf16.mxu0 0
    %2889 = vmatpush1.bf16.msra.mxu0 %v823
    %2890 = vmatprep.subr.bf16.mxu0 0
    %2891 = vmatpush1.bf16.msra.mxu0 %v824
    %2892 = vmatprep.subr.bf16.mxu0 0
    %2893 = vmatpush1.bf16.msra.mxu0 %v825
    %2894 = vmatprep.subr.bf16.mxu0 0
    %2895 = vmatpush1.bf16.msra.mxu0 %v826
    %2896 = vmatprep.subr.bf16.mxu0 0
    %2897 = vmatpush1.bf16.msra.mxu0 %v827
    %2898 = vmatprep.subr.bf16.mxu0 0
    %2899 = vmatpush1.bf16.msra.mxu0 %v828
    %2900 = vmatprep.subr.bf16.mxu0 0
    %2901 = vmatpush1.bf16.msra.mxu0 %v829
    %2902 = vmatprep.subr.bf16.mxu0 0
    %2903 = vmatpush1.bf16.msra.mxu0 %v830
    %2904 = vmatprep.subr.bf16.mxu0 0
    %2905 = vmatpush1.bf16.msra.mxu0 %v831
    %2906 = vmatprep.subr.bf16.mxu0 0
    %2907 = vmatpush1.bf16.msra.mxu0 %v832
    %2908 = vmatprep.subr.bf16.mxu0 0
    %2909 = vmatpush1.bf16.msra.mxu0 %v833
    %2910 = vmatprep.subr.bf16.mxu0 0
    %2911 = vmatpush1.bf16.msra.mxu0 %v834
    %2912 = vmatprep.subr.bf16.mxu0 0
    %2913 = vmatpush1.bf16.msra.mxu0 %v835
    %2914 = vmatprep.subr.bf16.mxu0 0
    %2915 = vmatpush1.bf16.msra.mxu0 %v836
    %2916 = vmatprep.mubr.bf16.mxu0 %v2881
    %2917 = vmatmul.mubr.bf16.gmra.mrb[0].mxu0 %v2880
    %v2918 = vpop.f32.mrb[0].mxu0
    %v2919 = vadd.f32 0.0, %v2918
    %v2920 = vpop.f32.mrb[0].mxu0
    %v2921 = vpop.f32.mrb[0].mxu0
    %v2922 = vpop.f32.mrb[0].mxu0
    %2923 = vdwg.mxu0
    %v2924 = vadd.f32 %v2879, %v2919
    %v2925 = vrot.slane %v2741, 2
    %v2926 = vrot.slane %v2742, 2
    %2929 = vmatprep.subr.bf16.mxu0 0
    %2930 = vmatpush1.bf16.msra.mxu0 %v995
    %2931 = vmatprep.subr.bf16.mxu0 0
    %2932 = vmatpush1.bf16.msra.mxu0 %v996
    %2933 = vmatprep.subr.bf16.mxu0 0
    %2934 = vmatpush1.bf16.msra.mxu0 %v997
    %2935 = vmatprep.subr.bf16.mxu0 0
    %2936 = vmatpush1.bf16.msra.mxu0 %v998
    %2937 = vmatprep.subr.bf16.mxu0 0
    %2938 = vmatpush1.bf16.msra.mxu0 %v999
    %2939 = vmatprep.subr.bf16.mxu0 0
    %2940 = vmatpush1.bf16.msra.mxu0 %v1000
    %2941 = vmatprep.subr.bf16.mxu0 0
    %2942 = vmatpush1.bf16.msra.mxu0 %v1001
    %2943 = vmatprep.subr.bf16.mxu0 0
    %2944 = vmatpush1.bf16.msra.mxu0 %v1002
    %2945 = vmatprep.subr.bf16.mxu0 0
    %2946 = vmatpush1.bf16.msra.mxu0 %v1003
    %2947 = vmatprep.subr.bf16.mxu0 0
    %2948 = vmatpush1.bf16.msra.mxu0 %v1004
    %2949 = vmatprep.subr.bf16.mxu0 0
    %2950 = vmatpush1.bf16.msra.mxu0 %v1005
    %2951 = vmatprep.subr.bf16.mxu0 0
    %2952 = vmatpush1.bf16.msra.mxu0 %v1006
    %2953 = vmatprep.subr.bf16.mxu0 0
    %2954 = vmatpush1.bf16.msra.mxu0 %v1007
    %2955 = vmatprep.subr.bf16.mxu0 0
    %2956 = vmatpush1.bf16.msra.mxu0 %v1008
    %2957 = vmatprep.subr.bf16.mxu0 0
    %2958 = vmatpush1.bf16.msra.mxu0 %v1009
    %2959 = vmatprep.subr.bf16.mxu0 0
    %2960 = vmatpush1.bf16.msra.mxu0 %v1010
    %2961 = vmatprep.mubr.bf16.mxu0 %v2926
    %2962 = vmatmul.mubr.bf16.gmra.mrb[0].mxu0 %v2925
    %v2963 = vpop.f32.mrb[0].mxu0
    %v2964 = vadd.f32 0.0, %v2963
    %v2965 = vpop.f32.mrb[0].mxu0
    %v2966 = vpop.f32.mrb[0].mxu0
    %v2967 = vpop.f32.mrb[0].mxu0
    %2968 = vdwg.mxu0
    %v2969 = vadd.f32 %v2924, %v2964
    %v2970 = vrot.slane %v2785, 2
    %v2971 = vrot.slane %v2788, 2
    %2974 = vmatprep.subr.bf16.mxu0 0
    %2975 = vmatpush1.bf16.msra.mxu0 %v1169
    %2976 = vmatprep.subr.bf16.mxu0 0
    %2977 = vmatpush1.bf16.msra.mxu0 %v1170
    %2978 = vmatprep.subr.bf16.mxu0 0
    %2979 = vmatpush1.bf16.msra.mxu0 %v1171
    %2980 = vmatprep.subr.bf16.mxu0 0
    %2981 = vmatpush1.bf16.msra.mxu0 %v1172
    %2982 = vmatprep.subr.bf16.mxu0 0
    %2983 = vmatpush1.bf16.msra.mxu0 %v1173
    %2984 = vmatprep.subr.bf16.mxu0 0
    %2985 = vmatpush1.bf16.msra.mxu0 %v1174
    %2986 = vmatprep.subr.bf16.mxu0 0
    %2987 = vmatpush1.bf16.msra.mxu0 %v1175
    %2988 = vmatprep.subr.bf16.mxu0 0
    %2989 = vmatpush1.bf16.msra.mxu0 %v1176
    %2990 = vmatprep.subr.bf16.mxu0 0
    %2991 = vmatpush1.bf16.msra.mxu0 %v1177
    %2992 = vmatprep.subr.bf16.mxu0 0
    %2993 = vmatpush1.bf16.msra.mxu0 %v1178
    %2994 = vmatprep.subr.bf16.mxu0 0
    %2995 = vmatpush1.bf16.msra.mxu0 %v1179
    %2996 = vmatprep.subr.bf16.mxu0 0
    %2997 = vmatpush1.bf16.msra.mxu0 %v1180
    %2998 = vmatprep.subr.bf16.mxu0 0
    %2999 = vmatpush1.bf16.msra.mxu0 %v1181
    %3000 = vmatprep.subr.bf16.mxu0 0
    %3001 = vmatpush1.bf16.msra.mxu0 %v1182
    %3002 = vmatprep.subr.bf16.mxu0 0
    %3003 = vmatpush1.bf16.msra.mxu0 %v1183
    %3004 = vmatprep.subr.bf16.mxu0 0
    %3005 = vmatpush1.bf16.msra.mxu0 %v1184
    %3006 = vmatprep.mubr.bf16.mxu0 %v2971
    %3007 = vmatmul.mubr.bf16.gmra.mrb[0].mxu0 %v2970
    %v3008 = vpop.f32.mrb[0].mxu0
    %v3009 = vadd.f32 0.0, %v3008
    %v3010 = vpop.f32.mrb[0].mxu0
    %v3011 = vpop.f32.mrb[0].mxu0
    %v3012 = vpop.f32.mrb[0].mxu0
    %3013 = vdwg.mxu0
    %v3014 = vadd.f32 %v2969, %v3009
    %v3015 = vrot.slane %v2741, 3
    %v3016 = vrot.slane %v2742, 3
    %3019 = vmatprep.subr.bf16.mxu0 0
    %3020 = vmatpush1.bf16.msra.mxu0 %v1343
    %3021 = vmatprep.subr.bf16.mxu0 0
    %3022 = vmatpush1.bf16.msra.mxu0 %v1344
    %3023 = vmatprep.subr.bf16.mxu0 0
    %3024 = vmatpush1.bf16.msra.mxu0 %v1345
    %3025 = vmatprep.subr.bf16.mxu0 0
    %3026 = vmatpush1.bf16.msra.mxu0 %v1346
    %3027 = vmatprep.subr.bf16.mxu0 0
    %3028 = vmatpush1.bf16.msra.mxu0 %v1347
    %3029 = vmatprep.subr.bf16.mxu0 0
    %3030 = vmatpush1.bf16.msra.mxu0 %v1348
    %3031 = vmatprep.subr.bf16.mxu0 0
    %3032 = vmatpush1.bf16.msra.mxu0 %v1349
    %3033 = vmatprep.subr.bf16.mxu0 0
    %3034 = vmatpush1.bf16.msra.mxu0 %v1350
    %3035 = vmatprep.subr.bf16.mxu0 0
    %3036 = vmatpush1.bf16.msra.mxu0 %v1351
    %3037 = vmatprep.subr.bf16.mxu0 0
    %3038 = vmatpush1.bf16.msra.mxu0 %v1352
    %3039 = vmatprep.subr.bf16.mxu0 0
    %3040 = vmatpush1.bf16.msra.mxu0 %v1353
    %3041 = vmatprep.subr.bf16.mxu0 0
    %3042 = vmatpush1.bf16.msra.mxu0 %v1354
    %3043 = vmatprep.subr.bf16.mxu0 0
    %3044 = vmatpush1.bf16.msra.mxu0 %v1355
    %3045 = vmatprep.subr.bf16.mxu0 0
    %3046 = vmatpush1.bf16.msra.mxu0 %v1356
    %3047 = vmatprep.subr.bf16.mxu0 0
    %3048 = vmatpush1.bf16.msra.mxu0 %v1357
    %3049 = vmatprep.subr.bf16.mxu0 0
    %3050 = vmatpush1.bf16.msra.mxu0 %v1358
    %3051 = vmatprep.mubr.bf16.mxu0 %v3016
    %3052 = vmatmul.mubr.bf16.gmra.mrb[0].mxu0 %v3015
    %v3053 = vpop.f32.mrb[0].mxu0
    %v3054 = vadd.f32 0.0, %v3053
    %v3055 = vpop.f32.mrb[0].mxu0
    %v3056 = vpop.f32.mrb[0].mxu0
    %v3057 = vpop.f32.mrb[0].mxu0
    %3058 = vdwg.mxu0
    %v3059 = vadd.f32 %v3014, %v3054
    %v3060 = vrot.slane %v2785, 3
    %v3061 = vrot.slane %v2788, 3
    %3064 = vmatprep.subr.bf16.mxu0 0
    %3065 = vmatpush1.bf16.msra.mxu0 %v1517
    %3066 = vmatprep.subr.bf16.mxu0 0
    %3067 = vmatpush1.bf16.msra.mxu0 %v1518
    %3068 = vmatprep.subr.bf16.mxu0 0
    %3069 = vmatpush1.bf16.msra.mxu0 %v1519
    %3070 = vmatprep.subr.bf16.mxu0 0
    %3071 = vmatpush1.bf16.msra.mxu0 %v1520
    %3072 = vmatprep.subr.bf16.mxu0 0
    %3073 = vmatpush1.bf16.msra.mxu0 %v1521
    %3074 = vmatprep.subr.bf16.mxu0 0
    %3075 = vmatpush1.bf16.msra.mxu0 %v1522
    %3076 = vmatprep.subr.bf16.mxu0 0
    %3077 = vmatpush1.bf16.msra.mxu0 %v1523
    %3078 = vmatprep.subr.bf16.mxu0 0
    %3079 = vmatpush1.bf16.msra.mxu0 %v1524
    %3080 = vmatprep.subr.bf16.mxu0 0
    %3081 = vmatpush1.bf16.msra.mxu0 %v1525
    %3082 = vmatprep.subr.bf16.mxu0 0
    %3083 = vmatpush1.bf16.msra.mxu0 %v1526
    %3084 = vmatprep.subr.bf16.mxu0 0
    %3085 = vmatpush1.bf16.msra.mxu0 %v1527
    %3086 = vmatprep.subr.bf16.mxu0 0
    %3087 = vmatpush1.bf16.msra.mxu0 %v1528
    %3088 = vmatprep.subr.bf16.mxu0 0
    %3089 = vmatpush1.bf16.msra.mxu0 %v1529
    %3090 = vmatprep.subr.bf16.mxu0 0
    %3091 = vmatpush1.bf16.msra.mxu0 %v1530
    %3092 = vmatprep.subr.bf16.mxu0 0
    %3093 = vmatpush1.bf16.msra.mxu0 %v1531
    %3094 = vmatprep.subr.bf16.mxu0 0
    %3095 = vmatpush1.bf16.msra.mxu0 %v1532
    %3096 = vmatprep.mubr.bf16.mxu0 %v3061
    %3097 = vmatmul.mubr.bf16.gmra.mrb[0].mxu0 %v3060
    %v3098 = vpop.f32.mrb[0].mxu0
    %v3099 = vadd.f32 0.0, %v3098
    %v3100 = vpop.f32.mrb[0].mxu0
    %v3101 = vpop.f32.mrb[0].mxu0
    %v3102 = vpop.f32.mrb[0].mxu0
    %3103 = vdwg.mxu0
    %v3104 = vadd.f32 %v3059, %v3099
    %v3105 = vmax.f32 %v3104, 0.0
    %v3107 = vlaneseq
    %v3108 = vshrl.u32 %v3107, 7
    %v3109 = vsub.s32 0, %v3108
    %v3110 = vrot.slane %v2095, %v3109
    %v3113 = vlaneseq
    %v3114 = vshrl.u32 %v3113, 7
    %v3115 = vsub.s32 0, %v3114
    %v3116 = vrot.slane %v2600, %v3115
    %v3119 = vlaneseq
    %v3120 = vshrl.u32 %v3119, 7
    %v3121 = vsub.s32 0, %v3120
    %v3122 = vrot.slane %v3105, %v3121
    %vm3124 = vcmask 1040384
    %v3125 = vsel %vm3124, %v1590, %v3110
    %vm3126 = vcmask 1041408
    %v3127 = vsel %vm3126, %v3125, %v3116
    %vm3128 = vcmask 1042432
    %v3129 = vsel %vm3128, %v3127, %v3122
    %v3130 = vpack.c.bf16 %v3129, %v3129
    %v3131 = vld [vmem:[%s5] sm:$0xf]
    %v3132 = vld [vmem:[%s5 + $0x4] sm:$0xf]
    %v3133 = vld [vmem:[%s5 + $0x8] sm:$0xf]
    %v3134 = vld [vmem:[%s5 + $0xc] sm:$0xf]
    %v3135 = vld [vmem:[%s5 + $0x10] sm:$0xf]
    %v3136 = vld [vmem:[%s5 + $0x14] sm:$0xf]
    %v3137 = vld [vmem:[%s5 + $0x18] sm:$0xf]
    %v3138 = vld [vmem:[%s5 + $0x1c] sm:$0xf]
    %v3139 = vld [vmem:[%s5 + $0x20] sm:$0xf]
    %v3140 = vld [vmem:[%s5 + $0x24] sm:$0xf]
    %v3141 = vld [vmem:[%s5 + $0x28] sm:$0xf]
    %v3142 = vld [vmem:[%s5 + $0x2c] sm:$0xf]
    %v3143 = vld [vmem:[%s5 + $0x30] sm:$0xf]
    %v3144 = vld [vmem:[%s5 + $0x34] sm:$0xf]
    %v3145 = vld [vmem:[%s5 + $0x38] sm:$0xf]
    %v3146 = vld [vmem:[%s5 + $0x3c] sm:$0xf]
    %v3147 = vld [vmem:[%s6] sm:$0x1]
    %v3149 = vlaneseq
    %v3150 = vshrl.u32 %v3149, 7
    %v3151 = vsub.s32 0, %v3150
    %v3152 = vrot.slane %v3147, %v3151
    %v3170 = vunpack.c.l.b16 %v3131
    %v3171 = vunpack.c.l.b16 %v3132
    %v3172 = vunpack.c.l.b16 %v3133
    %v3173 = vunpack.c.l.b16 %v3134
    %v3174 = vunpack.c.l.b16 %v3135
    %v3175 = vunpack.c.l.b16 %v3136
    %v3176 = vunpack.c.l.b16 %v3137
    %v3177 = vunpack.c.l.b16 %v3138
    %v3178 = vunpack.c.l.b16 %v3139
    %v3179 = vunpack.c.l.b16 %v3140
    %v3180 = vunpack.c.l.b16 %v3141
    %v3181 = vunpack.c.l.b16 %v3142
    %v3182 = vunpack.c.l.b16 %v3143
    %v3183 = vunpack.c.l.b16 %v3144
    %v3184 = vunpack.c.l.b16 %v3145
    %v3185 = vunpack.c.l.b16 %v3146
    %v3186 = vpack.c.b16 %v3171, %v3170
    %v3187 = vpack.c.b16 %v3173, %v3172
    %v3188 = vpack.c.b16 %v3175, %v3174
    %v3189 = vpack.c.b16 %v3177, %v3176
    %v3190 = vpack.c.b16 %v3179, %v3178
    %v3191 = vpack.c.b16 %v3181, %v3180
    %v3192 = vpack.c.b16 %v3183, %v3182
    %v3193 = vpack.c.b16 %v3185, %v3184
    %3202 = vmatprep.subr.bf16.mxu0 0
    %3203 = vmatpush1.bf16.msra.mxu0 %v3186
    %3204 = vmatprep.subr.bf16.mxu0 0
    %3205 = vmatpush1.bf16.msra.mxu0 %v3187
    %3206 = vmatprep.subr.bf16.mxu0 0
    %3207 = vmatpush1.bf16.msra.mxu0 %v3188
    %3208 = vmatprep.subr.bf16.mxu0 0
    %3209 = vmatpush1.bf16.msra.mxu0 %v3189
    %3210 = vmatprep.subr.bf16.mxu0 0
    %3211 = vmatpush1.bf16.msra.mxu0 %v3190
    %3212 = vmatprep.subr.bf16.mxu0 0
    %3213 = vmatpush1.bf16.msra.mxu0 %v3191
    %3214 = vmatprep.subr.bf16.mxu0 0
    %3215 = vmatpush1.bf16.msra.mxu0 %v3192
    %3216 = vmatprep.subr.bf16.mxu0 0
    %3217 = vmatpush1.bf16.msra.mxu0 %v3193
    %3218 = vmatprep.subr.bf16.mxu0 0
    %3219 = vmatpush1.bf16.msra.mxu0 0
    %3220 = vmatprep.subr.bf16.mxu0 0
    %3221 = vmatpush1.bf16.msra.mxu0 0
    %3222 = vmatprep.subr.bf16.mxu0 0
    %3223 = vmatpush1.bf16.msra.mxu0 0
    %3224 = vmatprep.subr.bf16.mxu0 0
    %3225 = vmatpush1.bf16.msra.mxu0 0
    %3226 = vmatprep.subr.bf16.mxu0 0
    %3227 = vmatpush1.bf16.msra.mxu0 0
    %3228 = vmatprep.subr.bf16.mxu0 0
    %3229 = vmatpush1.bf16.msra.mxu0 0
    %3230 = vmatprep.subr.bf16.mxu0 0
    %3231 = vmatpush1.bf16.msra.mxu0 0
    %3232 = vmatprep.subr.bf16.mxu0 0
    %3233 = vmatpush1.bf16.msra.mxu0 0
    %3234 = vmatprep.mubr.bf16.mxu0 0
    %3235 = vmatmul.mubr.bf16.gmra.mrb[0].mxu0 %v3130
    %v3236 = vpop.f32.mrb[0].mxu0
    %v3237 = vadd.f32 %v3152, %v3236
    %v3238 = vpop.f32.mrb[0].mxu0
    %v3239 = vpop.f32.mrb[0].mxu0
    %v3240 = vpop.f32.mrb[0].mxu0
    %3241 = vdwg.mxu0
    %v3242 = vmax.f32 %v3237, 0.0
    %v3243 = vpack.c.bf16 %v3242, %v3242
    %v3244 = vld [vmem:[%s7] sm:$0xff]
    %v3245 = vld [vmem:[%s7 + $0x8] sm:$0xff]
    %v3246 = vld [vmem:[%s7 + $0x10] sm:$0xff]
    %v3247 = vld [vmem:[%s7 + $0x18] sm:$0xff]
    %v3248 = vld [vmem:[%s7 + $0x20] sm:$0xff]
    %v3249 = vld [vmem:[%s7 + $0x28] sm:$0xff]
    %v3250 = vld [vmem:[%s7 + $0x30] sm:$0xff]
    %v3251 = vld [vmem:[%s7 + $0x38] sm:$0xff]
    %v3252 = vld [vmem:[%s7 + $0x40] sm:$0xff]
    %v3253 = vld [vmem:[%s7 + $0x48] sm:$0xff]
    %v3254 = vld [vmem:[%s7 + $0x50] sm:$0xff]
    %v3255 = vld [vmem:[%s7 + $0x58] sm:$0xff]
    %v3256 = vld [vmem:[%s7 + $0x60] sm:$0xff]
    %v3257 = vld [vmem:[%s7 + $0x68] sm:$0xff]
    %v3258 = vld [vmem:[%s7 + $0x70] sm:$0xff]
    %v3259 = vld [vmem:[%s7 + $0x78] sm:$0xff]
    %v3260 = vld [vmem:[%s7 + $0x80] sm:$0xff]
    %v3261 = vld [vmem:[%s7 + $0x88] sm:$0xff]
    %v3262 = vld [vmem:[%s7 + $0x90] sm:$0xff]
    %v3263 = vld [vmem:[%s7 + $0x98] sm:$0xff]
    %v3264 = vld [vmem:[%s7 + $0xa0] sm:$0xff]
    %v3265 = vld [vmem:[%s7 + $0xa8] sm:$0xff]
    %v3266 = vld [vmem:[%s7 + $0xb0] sm:$0xff]
    %v3267 = vld [vmem:[%s7 + $0xb8] sm:$0xff]
    %v3268 = vld [vmem:[%s7 + $0xc0] sm:$0xff]
    %v3269 = vld [vmem:[%s7 + $0xc8] sm:$0xff]
    %v3270 = vld [vmem:[%s7 + $0xd0] sm:$0xff]
    %v3271 = vld [vmem:[%s7 + $0xd8] sm:$0xff]
    %v3272 = vld [vmem:[%s7 + $0xe0] sm:$0xff]
    %v3273 = vld [vmem:[%s7 + $0xe8] sm:$0xff]
    %v3274 = vld [vmem:[%s7 + $0xf0] sm:$0xff]
    %v3275 = vld [vmem:[%s7 + $0xf8] sm:$0xff]
    %v3276 = vld [vmem:[%s7 + $0x100] sm:$0xff]
    %v3277 = vld [vmem:[%s7 + $0x108] sm:$0xff]
    %v3278 = vld [vmem:[%s7 + $0x110] sm:$0xff]
    %v3279 = vld [vmem:[%s7 + $0x118] sm:$0xff]
    %v3280 = vld [vmem:[%s7 + $0x120] sm:$0xff]
    %v3281 = vld [vmem:[%s7 + $0x128] sm:$0xff]
    %v3282 = vld [vmem:[%s7 + $0x130] sm:$0xff]
    %v3283 = vld [vmem:[%s7 + $0x138] sm:$0xff]
    %v3284 = vld [vmem:[%s7 + $0x140] sm:$0xff]
    %v3285 = vld [vmem:[%s7 + $0x148] sm:$0xff]
    %v3286 = vld [vmem:[%s7 + $0x150] sm:$0xff]
    %v3287 = vld [vmem:[%s7 + $0x158] sm:$0xff]
    %v3288 = vld [vmem:[%s7 + $0x160] sm:$0xff]
    %v3289 = vld [vmem:[%s7 + $0x168] sm:$0xff]
    %v3290 = vld [vmem:[%s7 + $0x170] sm:$0xff]
    %v3291 = vld [vmem:[%s7 + $0x178] sm:$0xff]
    %v3292 = vld [vmem:[%s7 + $0x180] sm:$0xff]
    %v3293 = vld [vmem:[%s7 + $0x188] sm:$0xff]
    %v3294 = vld [vmem:[%s7 + $0x190] sm:$0xff]
    %v3295 = vld [vmem:[%s7 + $0x198] sm:$0xff]
    %v3296 = vld [vmem:[%s7 + $0x1a0] sm:$0xff]
    %v3297 = vld [vmem:[%s7 + $0x1a8] sm:$0xff]
    %v3298 = vld [vmem:[%s7 + $0x1b0] sm:$0xff]
    %v3299 = vld [vmem:[%s7 + $0x1b8] sm:$0xff]
    %v3300 = vld [vmem:[%s7 + $0x1c0] sm:$0xff]
    %v3301 = vld [vmem:[%s7 + $0x1c8] sm:$0xff]
    %v3302 = vld [vmem:[%s7 + $0x1d0] sm:$0xff]
    %v3303 = vld [vmem:[%s7 + $0x1d8] sm:$0xff]
    %v3304 = vld [vmem:[%s7 + $0x1e0] sm:$0xff]
    %v3305 = vld [vmem:[%s7 + $0x1e8] sm:$0xff]
    %v3306 = vld [vmem:[%s7 + $0x1f0] sm:$0xff]
    %v3307 = vld [vmem:[%s7 + $0x1f8] sm:$0xff]
    %v3308 = vld [vmem:[%s8] sm:$0xff]
    %v3310 = vlaneseq
    %v3311 = vshrl.u32 %v3310, 7
    %v3312 = vsub.s32 0, %v3311
    %v3313 = vrot.slane %v3308, %v3312
    %v3314 = vlaneseq
    %v3315 = vshrl.u32 %v3314, 7
    %v3316 = vsub.s32 1, %v3315
    %v3317 = vrot.slane %v3308, %v3316
    %v3318 = vlaneseq
    %v3319 = vshrl.u32 %v3318, 7
    %v3320 = vsub.s32 2, %v3319
    %v3321 = vrot.slane %v3308, %v3320
    %v3322 = vlaneseq
    %v3323 = vshrl.u32 %v3322, 7
    %v3324 = vsub.s32 3, %v3323
    %v3325 = vrot.slane %v3308, %v3324
    %v3326 = vlaneseq
    %v3327 = vshrl.u32 %v3326, 7
    %v3328 = vsub.s32 4, %v3327
    %v3329 = vrot.slane %v3308, %v3328
    %v3330 = vlaneseq
    %v3331 = vshrl.u32 %v3330, 7
    %v3332 = vsub.s32 5, %v3331
    %v3333 = vrot.slane %v3308, %v3332
    %v3334 = vlaneseq
    %v3335 = vshrl.u32 %v3334, 7
    %v3336 = vsub.s32 6, %v3335
    %v3337 = vrot.slane %v3308, %v3336
    %v3338 = vlaneseq
    %v3339 = vshrl.u32 %v3338, 7
    %v3340 = vsub.s32 7, %v3339
    %v3341 = vrot.slane %v3308, %v3340
    %v3414 = vunpack.c.l.b16 %v3244
    %v3415 = vunpack.c.h.b16 %v3244
    %v3416 = vunpack.c.l.b16 %v3245
    %v3417 = vunpack.c.h.b16 %v3245
    %v3418 = vunpack.c.l.b16 %v3246
    %v3419 = vunpack.c.h.b16 %v3246
    %v3420 = vunpack.c.l.b16 %v3247
    %v3421 = vunpack.c.h.b16 %v3247
    %v3422 = vunpack.c.l.b16 %v3248
    %v3423 = vunpack.c.h.b16 %v3248
    %v3424 = vunpack.c.l.b16 %v3249
    %v3425 = vunpack.c.h.b16 %v3249
    %v3426 = vunpack.c.l.b16 %v3250
    %v3427 = vunpack.c.h.b16 %v3250
    %v3428 = vunpack.c.l.b16 %v3251
    %v3429 = vunpack.c.h.b16 %v3251
    %v3430 = vunpack.c.l.b16 %v3252
    %v3431 = vunpack.c.h.b16 %v3252
    %v3432 = vunpack.c.l.b16 %v3253
    %v3433 = vunpack.c.h.b16 %v3253
    %v3434 = vunpack.c.l.b16 %v3254
    %v3435 = vunpack.c.h.b16 %v3254
    %v3436 = vunpack.c.l.b16 %v3255
    %v3437 = vunpack.c.h.b16 %v3255
    %v3438 = vunpack.c.l.b16 %v3256
    %v3439 = vunpack.c.h.b16 %v3256
    %v3440 = vunpack.c.l.b16 %v3257
    %v3441 = vunpack.c.h.b16 %v3257
    %v3442 = vunpack.c.l.b16 %v3258
    %v3443 = vunpack.c.h.b16 %v3258
    %v3444 = vunpack.c.l.b16 %v3259
    %v3445 = vunpack.c.h.b16 %v3259
    %v3446 = vunpack.c.l.b16 %v3260
    %v3447 = vunpack.c.h.b16 %v3260
    %v3448 = vunpack.c.l.b16 %v3261
    %v3449 = vunpack.c.h.b16 %v3261
    %v3450 = vunpack.c.l.b16 %v3262
    %v3451 = vunpack.c.h.b16 %v3262
    %v3452 = vunpack.c.l.b16 %v3263
    %v3453 = vunpack.c.h.b16 %v3263
    %v3454 = vunpack.c.l.b16 %v3264
    %v3455 = vunpack.c.h.b16 %v3264
    %v3456 = vunpack.c.l.b16 %v3265
    %v3457 = vunpack.c.h.b16 %v3265
    %v3458 = vunpack.c.l.b16 %v3266
    %v3459 = vunpack.c.h.b16 %v3266
    %v3460 = vunpack.c.l.b16 %v3267
    %v3461 = vunpack.c.h.b16 %v3267
    %v3462 = vunpack.c.l.b16 %v3268
    %v3463 = vunpack.c.h.b16 %v3268
    %v3464 = vunpack.c.l.b16 %v3269
    %v3465 = vunpack.c.h.b16 %v3269
    %v3466 = vunpack.c.l.b16 %v3270
    %v3467 = vunpack.c.h.b16 %v3270
    %v3468 = vunpack.c.l.b16 %v3271
    %v3469 = vunpack.c.h.b16 %v3271
    %v3470 = vunpack.c.l.b16 %v3272
    %v3471 = vunpack.c.h.b16 %v3272
    %v3472 = vunpack.c.l.b16 %v3273
    %v3473 = vunpack.c.h.b16 %v3273
    %v3474 = vunpack.c.l.b16 %v3274
    %v3475 = vunpack.c.h.b16 %v3274
    %v3476 = vunpack.c.l.b16 %v3275
    %v3477 = vunpack.c.h.b16 %v3275
    %v3478 = vunpack.c.l.b16 %v3276
    %v3479 = vunpack.c.h.b16 %v3276
    %v3480 = vunpack.c.l.b16 %v3277
    %v3481 = vunpack.c.h.b16 %v3277
    %v3482 = vunpack.c.l.b16 %v3278
    %v3483 = vunpack.c.h.b16 %v3278
    %v3484 = vunpack.c.l.b16 %v3279
    %v3485 = vunpack.c.h.b16 %v3279
    %v3486 = vunpack.c.l.b16 %v3280
    %v3487 = vunpack.c.h.b16 %v3280
    %v3488 = vunpack.c.l.b16 %v3281
    %v3489 = vunpack.c.h.b16 %v3281
    %v3490 = vunpack.c.l.b16 %v3282
    %v3491 = vunpack.c.h.b16 %v3282
    %v3492 = vunpack.c.l.b16 %v3283
    %v3493 = vunpack.c.h.b16 %v3283
    %v3494 = vunpack.c.l.b16 %v3284
    %v3495 = vunpack.c.h.b16 %v3284
    %v3496 = vunpack.c.l.b16 %v3285
    %v3497 = vunpack.c.h.b16 %v3285
    %v3498 = vunpack.c.l.b16 %v3286
    %v3499 = vunpack.c.h.b16 %v3286
    %v3500 = vunpack.c.l.b16 %v3287
    %v3501 = vunpack.c.h.b16 %v3287
    %v3502 = vunpack.c.l.b16 %v3288
    %v3503 = vunpack.c.h.b16 %v3288
    %v3504 = vunpack.c.l.b16 %v3289
    %v3505 = vunpack.c.h.b16 %v3289
    %v3506 = vunpack.c.l.b16 %v3290
    %v3507 = vunpack.c.h.b16 %v3290
    %v3508 = vunpack.c.l.b16 %v3291
    %v3509 = vunpack.c.h.b16 %v3291
    %v3510 = vunpack.c.l.b16 %v3292
    %v3511 = vunpack.c.h.b16 %v3292
    %v3512 = vunpack.c.l.b16 %v3293
    %v3513 = vunpack.c.h.b16 %v3293
    %v3514 = vunpack.c.l.b16 %v3294
    %v3515 = vunpack.c.h.b16 %v3294
    %v3516 = vunpack.c.l.b16 %v3295
    %v3517 = vunpack.c.h.b16 %v3295
    %v3518 = vunpack.c.l.b16 %v3296
    %v3519 = vunpack.c.h.b16 %v3296
    %v3520 = vunpack.c.l.b16 %v3297
    %v3521 = vunpack.c.h.b16 %v3297
    %v3522 = vunpack.c.l.b16 %v3298
    %v3523 = vunpack.c.h.b16 %v3298
    %v3524 = vunpack.c.l.b16 %v3299
    %v3525 = vunpack.c.h.b16 %v3299
    %v3526 = vunpack.c.l.b16 %v3300
    %v3527 = vunpack.c.h.b16 %v3300
    %v3528 = vunpack.c.l.b16 %v3301
    %v3529 = vunpack.c.h.b16 %v3301
    %v3530 = vunpack.c.l.b16 %v3302
    %v3531 = vunpack.c.h.b16 %v3302
    %v3532 = vunpack.c.l.b16 %v3303
    %v3533 = vunpack.c.h.b16 %v3303
    %v3534 = vunpack.c.l.b16 %v3304
    %v3535 = vunpack.c.h.b16 %v3304
    %v3536 = vunpack.c.l.b16 %v3305
    %v3537 = vunpack.c.h.b16 %v3305
    %v3538 = vunpack.c.l.b16 %v3306
    %v3539 = vunpack.c.h.b16 %v3306
    %v3540 = vunpack.c.l.b16 %v3307
    %v3541 = vunpack.c.h.b16 %v3307
    %v3542 = vpack.c.b16 %v3422, %v3414
    %v3543 = vpack.c.b16 %v3423, %v3415
    %v3544 = vpack.c.b16 %v3424, %v3416
    %v3545 = vpack.c.b16 %v3425, %v3417
    %v3546 = vpack.c.b16 %v3426, %v3418
    %v3547 = vpack.c.b16 %v3427, %v3419
    %v3548 = vpack.c.b16 %v3428, %v3420
    %v3549 = vpack.c.b16 %v3429, %v3421
    %v3550 = vpack.c.b16 %v3438, %v3430
    %v3551 = vpack.c.b16 %v3439, %v3431
    %v3552 = vpack.c.b16 %v3440, %v3432
    %v3553 = vpack.c.b16 %v3441, %v3433
    %v3554 = vpack.c.b16 %v3442, %v3434
    %v3555 = vpack.c.b16 %v3443, %v3435
    %v3556 = vpack.c.b16 %v3444, %v3436
    %v3557 = vpack.c.b16 %v3445, %v3437
    %v3558 = vpack.c.b16 %v3454, %v3446
    %v3559 = vpack.c.b16 %v3455, %v3447
    %v3560 = vpack.c.b16 %v3456, %v3448
    %v3561 = vpack.c.b16 %v3457, %v3449
    %v3562 = vpack.c.b16 %v3458, %v3450
    %v3563 = vpack.c.b16 %v3459, %v3451
    %v3564 = vpack.c.b16 %v3460, %v3452
    %v3565 = vpack.c.b16 %v3461, %v3453
    %v3566 = vpack.c.b16 %v3470, %v3462
    %v3567 = vpack.c.b16 %v3471, %v3463
    %v3568 = vpack.c.b16 %v3472, %v3464
    %v3569 = vpack.c.b16 %v3473, %v3465
    %v3570 = vpack.c.b16 %v3474, %v3466
    %v3571 = vpack.c.b16 %v3475, %v3467
    %v3572 = vpack.c.b16 %v3476, %v3468
    %v3573 = vpack.c.b16 %v3477, %v3469
    %v3574 = vpack.c.b16 %v3486, %v3478
    %v3575 = vpack.c.b16 %v3487, %v3479
    %v3576 = vpack.c.b16 %v3488, %v3480
    %v3577 = vpack.c.b16 %v3489, %v3481
    %v3578 = vpack.c.b16 %v3490, %v3482
    %v3579 = vpack.c.b16 %v3491, %v3483
    %v3580 = vpack.c.b16 %v3492, %v3484
    %v3581 = vpack.c.b16 %v3493, %v3485
    %v3582 = vpack.c.b16 %v3502, %v3494
    %v3583 = vpack.c.b16 %v3503, %v3495
    %v3584 = vpack.c.b16 %v3504, %v3496
    %v3585 = vpack.c.b16 %v3505, %v3497
    %v3586 = vpack.c.b16 %v3506, %v3498
    %v3587 = vpack.c.b16 %v3507, %v3499
    %v3588 = vpack.c.b16 %v3508, %v3500
    %v3589 = vpack.c.b16 %v3509, %v3501
    %v3590 = vpack.c.b16 %v3518, %v3510
    %v3591 = vpack.c.b16 %v3519, %v3511
    %v3592 = vpack.c.b16 %v3520, %v3512
    %v3593 = vpack.c.b16 %v3521, %v3513
    %v3594 = vpack.c.b16 %v3522, %v3514
    %v3595 = vpack.c.b16 %v3523, %v3515
    %v3596 = vpack.c.b16 %v3524, %v3516
    %v3597 = vpack.c.b16 %v3525, %v3517
    %v3598 = vpack.c.b16 %v3534, %v3526
    %v3599 = vpack.c.b16 %v3535, %v3527
    %v3600 = vpack.c.b16 %v3536, %v3528
    %v3601 = vpack.c.b16 %v3537, %v3529
    %v3602 = vpack.c.b16 %v3538, %v3530
    %v3603 = vpack.c.b16 %v3539, %v3531
    %v3604 = vpack.c.b16 %v3540, %v3532
    %v3605 = vpack.c.b16 %v3541, %v3533
    %3670 = vmatprep.subr.bf16.mxu0 %v3543
    %3671 = vmatpush1.bf16.msra.mxu0 %v3542
    %3672 = vmatprep.subr.bf16.mxu0 %v3551
    %3673 = vmatpush1.bf16.msra.mxu0 %v3550
    %3674 = vmatprep.subr.bf16.mxu0 %v3559
    %3675 = vmatpush1.bf16.msra.mxu0 %v3558
    %3676 = vmatprep.subr.bf16.mxu0 %v3567
    %3677 = vmatpush1.bf16.msra.mxu0 %v3566
    %3678 = vmatprep.subr.bf16.mxu0 %v3575
    %3679 = vmatpush1.bf16.msra.mxu0 %v3574
    %3680 = vmatprep.subr.bf16.mxu0 %v3583
    %3681 = vmatpush1.bf16.msra.mxu0 %v3582
    %3682 = vmatprep.subr.bf16.mxu0 %v3591
    %3683 = vmatpush1.bf16.msra.mxu0 %v3590
    %3684 = vmatprep.subr.bf16.mxu0 %v3599
    %3685 = vmatpush1.bf16.msra.mxu0 %v3598
    %3686 = vmatprep.subr.bf16.mxu0 0
    %3687 = vmatpush1.bf16.msra.mxu0 0
    %3688 = vmatprep.subr.bf16.mxu0 0
    %3689 = vmatpush1.bf16.msra.mxu0 0
    %3690 = vmatprep.subr.bf16.mxu0 0
    %3691 = vmatpush1.bf16.msra.mxu0 0
    %3692 = vmatprep.subr.bf16.mxu0 0
    %3693 = vmatpush1.bf16.msra.mxu0 0
    %3694 = vmatprep.subr.bf16.mxu0 0
    %3695 = vmatpush1.bf16.msra.mxu0 0
    %3696 = vmatprep.subr.bf16.mxu0 0
    %3697 = vmatpush1.bf16.msra.mxu0 0
    %3698 = vmatprep.subr.bf16.mxu0 0
    %3699 = vmatpush1.bf16.msra.mxu0 0
    %3700 = vmatprep.subr.bf16.mxu0 0
    %3701 = vmatpush1.bf16.msra.mxu0 0
    %3702 = vmatprep.mubr.bf16.mxu0 0
    %3703 = vmatmul.mubr.bf16.gmra.mrb[0].mxu0 %v3243
    %v3704 = vpop.f32.mrb[0].mxu0
    %v3705 = vadd.f32 %v3313, %v3704
    %v3706 = vpop.f32.mrb[0].mxu0
    %v3707 = vadd.f32 %v3317, %v3706
    %v3708 = vpop.f32.mrb[0].mxu0
    %v3709 = vpop.f32.mrb[0].mxu0
    %3710 = vdwg.mxu0
    %3711 = vmatprep.subr.bf16.mxu0 %v3545
    %3712 = vmatpush1.bf16.msra.mxu0 %v3544
    %3713 = vmatprep.subr.bf16.mxu0 %v3553
    %3714 = vmatpush1.bf16.msra.mxu0 %v3552
    %3715 = vmatprep.subr.bf16.mxu0 %v3561
    %3716 = vmatpush1.bf16.msra.mxu0 %v3560
    %3717 = vmatprep.subr.bf16.mxu0 %v3569
    %3718 = vmatpush1.bf16.msra.mxu0 %v3568
    %3719 = vmatprep.subr.bf16.mxu0 %v3577
    %3720 = vmatpush1.bf16.msra.mxu0 %v3576
    %3721 = vmatprep.subr.bf16.mxu0 %v3585
    %3722 = vmatpush1.bf16.msra.mxu0 %v3584
    %3723 = vmatprep.subr.bf16.mxu0 %v3593
    %3724 = vmatpush1.bf16.msra.mxu0 %v3592
    %3725 = vmatprep.subr.bf16.mxu0 %v3601
    %3726 = vmatpush1.bf16.msra.mxu0 %v3600
    %3727 = vmatprep.subr.bf16.mxu0 0
    %3728 = vmatpush1.bf16.msra.mxu0 0
    %3729 = vmatprep.subr.bf16.mxu0 0
    %3730 = vmatpush1.bf16.msra.mxu0 0
    %3731 = vmatprep.subr.bf16.mxu0 0
    %3732 = vmatpush1.bf16.msra.mxu0 0
    %3733 = vmatprep.subr.bf16.mxu0 0
    %3734 = vmatpush1.bf16.msra.mxu0 0
    %3735 = vmatprep.subr.bf16.mxu0 0
    %3736 = vmatpush1.bf16.msra.mxu0 0
    %3737 = vmatprep.subr.bf16.mxu0 0
    %3738 = vmatpush1.bf16.msra.mxu0 0
    %3739 = vmatprep.subr.bf16.mxu0 0
    %3740 = vmatpush1.bf16.msra.mxu0 0
    %3741 = vmatprep.subr.bf16.mxu0 0
    %3742 = vmatpush1.bf16.msra.mxu0 0
    %3743 = vmatprep.mubr.bf16.mxu0 0
    %3744 = vmatmul.mubr.bf16.gmra.mrb[0].mxu0 %v3243
    %v3745 = vpop.f32.mrb[0].mxu0
    %v3746 = vadd.f32 %v3321, %v3745
    %v3747 = vpop.f32.mrb[0].mxu0
    %v3748 = vadd.f32 %v3325, %v3747
    %v3749 = vpop.f32.mrb[0].mxu0
    %v3750 = vpop.f32.mrb[0].mxu0
    %3751 = vdwg.mxu0
    %3752 = vmatprep.subr.bf16.mxu0 %v3547
    %3753 = vmatpush1.bf16.msra.mxu0 %v3546
    %3754 = vmatprep.subr.bf16.mxu0 %v3555
    %3755 = vmatpush1.bf16.msra.mxu0 %v3554
    %3756 = vmatprep.subr.bf16.mxu0 %v3563
    %3757 = vmatpush1.bf16.msra.mxu0 %v3562
    %3758 = vmatprep.subr.bf16.mxu0 %v3571
    %3759 = vmatpush1.bf16.msra.mxu0 %v3570
    %3760 = vmatprep.subr.bf16.mxu0 %v3579
    %3761 = vmatpush1.bf16.msra.mxu0 %v3578
    %3762 = vmatprep.subr.bf16.mxu0 %v3587
    %3763 = vmatpush1.bf16.msra.mxu0 %v3586
    %3764 = vmatprep.subr.bf16.mxu0 %v3595
    %3765 = vmatpush1.bf16.msra.mxu0 %v3594
    %3766 = vmatprep.subr.bf16.mxu0 %v3603
    %3767 = vmatpush1.bf16.msra.mxu0 %v3602
    %3768 = vmatprep.subr.bf16.mxu0 0
    %3769 = vmatpush1.bf16.msra.mxu0 0
    %3770 = vmatprep.subr.bf16.mxu0 0
    %3771 = vmatpush1.bf16.msra.mxu0 0
    %3772 = vmatprep.subr.bf16.mxu0 0
    %3773 = vmatpush1.bf16.msra.mxu0 0
    %3774 = vmatprep.subr.bf16.mxu0 0
    %3775 = vmatpush1.bf16.msra.mxu0 0
    %3776 = vmatprep.subr.bf16.mxu0 0
    %3777 = vmatpush1.bf16.msra.mxu0 0
    %3778 = vmatprep.subr.bf16.mxu0 0
    %3779 = vmatpush1.bf16.msra.mxu0 0
    %3780 = vmatprep.subr.bf16.mxu0 0
    %3781 = vmatpush1.bf16.msra.mxu0 0
    %3782 = vmatprep.subr.bf16.mxu0 0
    %3783 = vmatpush1.bf16.msra.mxu0 0
    %3784 = vmatprep.mubr.bf16.mxu0 0
    %3785 = vmatmul.mubr.bf16.gmra.mrb[0].mxu0 %v3243
    %v3786 = vpop.f32.mrb[0].mxu0
    %v3787 = vadd.f32 %v3329, %v3786
    %v3788 = vpop.f32.mrb[0].mxu0
    %v3789 = vadd.f32 %v3333, %v3788
    %v3790 = vpop.f32.mrb[0].mxu0
    %v3791 = vpop.f32.mrb[0].mxu0
    %3792 = vdwg.mxu0
    %3793 = vmatprep.subr.bf16.mxu0 %v3549
    %3794 = vmatpush1.bf16.msra.mxu0 %v3548
    %3795 = vmatprep.subr.bf16.mxu0 %v3557
    %3796 = vmatpush1.bf16.msra.mxu0 %v3556
    %3797 = vmatprep.subr.bf16.mxu0 %v3565
    %3798 = vmatpush1.bf16.msra.mxu0 %v3564
    %3799 = vmatprep.subr.bf16.mxu0 %v3573
    %3800 = vmatpush1.bf16.msra.mxu0 %v3572
    %3801 = vmatprep.subr.bf16.mxu0 %v3581
    %3802 = vmatpush1.bf16.msra.mxu0 %v3580
    %3803 = vmatprep.subr.bf16.mxu0 %v3589
    %3804 = vmatpush1.bf16.msra.mxu0 %v3588
    %3805 = vmatprep.subr.bf16.mxu0 %v3597
    %3806 = vmatpush1.bf16.msra.mxu0 %v3596
    %3807 = vmatprep.subr.bf16.mxu0 %v3605
    %3808 = vmatpush1.bf16.msra.mxu0 %v3604
    %3809 = vmatprep.subr.bf16.mxu0 0
    %3810 = vmatpush1.bf16.msra.mxu0 0
    %3811 = vmatprep.subr.bf16.mxu0 0
    %3812 = vmatpush1.bf16.msra.mxu0 0
    %3813 = vmatprep.subr.bf16.mxu0 0
    %3814 = vmatpush1.bf16.msra.mxu0 0
    %3815 = vmatprep.subr.bf16.mxu0 0
    %3816 = vmatpush1.bf16.msra.mxu0 0
    %3817 = vmatprep.subr.bf16.mxu0 0
    %3818 = vmatpush1.bf16.msra.mxu0 0
    %3819 = vmatprep.subr.bf16.mxu0 0
    %3820 = vmatpush1.bf16.msra.mxu0 0
    %3821 = vmatprep.subr.bf16.mxu0 0
    %3822 = vmatpush1.bf16.msra.mxu0 0
    %3823 = vmatprep.subr.bf16.mxu0 0
    %3824 = vmatpush1.bf16.msra.mxu0 0
    %3825 = vmatprep.mubr.bf16.mxu0 0
    %3826 = vmatmul.mubr.bf16.gmra.mrb[0].mxu0 %v3243
    %v3827 = vpop.f32.mrb[0].mxu0
    %v3828 = vadd.f32 %v3337, %v3827
    %v3829 = vpop.f32.mrb[0].mxu0
    %v3830 = vadd.f32 %v3341, %v3829
    %v3831 = vpop.f32.mrb[0].mxu0
    %v3832 = vpop.f32.mrb[0].mxu0
    %3833 = vdwg.mxu0
    %v3834 = vpack.c.bf16 %v3705, %v3705
    %v3835 = vpack.c.bf16 %v3707, %v3707
    %v3836 = vpack.c.bf16 %v3746, %v3746
    %v3837 = vpack.c.bf16 %v3748, %v3748
    %v3838 = vpack.c.bf16 %v3787, %v3787
    %v3839 = vpack.c.bf16 %v3789, %v3789
    %v3840 = vpack.c.bf16 %v3828, %v3828
    %v3841 = vpack.c.bf16 %v3830, %v3830
    %v3842 = vld [vmem:[%s9] sm:$0xf]
    %v3843 = vld [vmem:[%s9 + $0x4] sm:$0xf]
    %v3844 = vld [vmem:[%s9 + $0x8] sm:$0xf]
    %v3845 = vld [vmem:[%s9 + $0xc] sm:$0xf]
    %v3846 = vld [vmem:[%s9 + $0x10] sm:$0xf]
    %v3847 = vld [vmem:[%s9 + $0x14] sm:$0xf]
    %v3848 = vld [vmem:[%s9 + $0x18] sm:$0xf]
    %v3849 = vld [vmem:[%s9 + $0x1c] sm:$0xf]
    %v3850 = vld [vmem:[%s9 + $0x20] sm:$0xf]
    %v3851 = vld [vmem:[%s9 + $0x24] sm:$0xf]
    %v3852 = vld [vmem:[%s9 + $0x28] sm:$0xf]
    %v3853 = vld [vmem:[%s9 + $0x2c] sm:$0xf]
    %v3854 = vld [vmem:[%s9 + $0x30] sm:$0xf]
    %v3855 = vld [vmem:[%s9 + $0x34] sm:$0xf]
    %v3856 = vld [vmem:[%s9 + $0x38] sm:$0xf]
    %v3857 = vld [vmem:[%s9 + $0x3c] sm:$0xf]
    %v3858 = vld [vmem:[%s9 + $0x40] sm:$0xf]
    %v3859 = vld [vmem:[%s9 + $0x44] sm:$0xf]
    %v3860 = vld [vmem:[%s9 + $0x48] sm:$0xf]
    %v3861 = vld [vmem:[%s9 + $0x4c] sm:$0xf]
    %v3862 = vld [vmem:[%s9 + $0x50] sm:$0xf]
    %v3863 = vld [vmem:[%s9 + $0x54] sm:$0xf]
    %v3864 = vld [vmem:[%s9 + $0x58] sm:$0xf]
    %v3865 = vld [vmem:[%s9 + $0x5c] sm:$0xf]
    %v3866 = vld [vmem:[%s9 + $0x60] sm:$0xf]
    %v3867 = vld [vmem:[%s9 + $0x64] sm:$0xf]
    %v3868 = vld [vmem:[%s9 + $0x68] sm:$0xf]
    %v3869 = vld [vmem:[%s9 + $0x6c] sm:$0xf]
    %v3870 = vld [vmem:[%s9 + $0x70] sm:$0xf]
    %v3871 = vld [vmem:[%s9 + $0x74] sm:$0xf]
    %v3872 = vld [vmem:[%s9 + $0x78] sm:$0xf]
    %v3873 = vld [vmem:[%s9 + $0x7c] sm:$0xf]
    %v3874 = vld [vmem:[%s9 + $0x80] sm:$0xf]
    %v3875 = vld [vmem:[%s9 + $0x84] sm:$0xf]
    %v3876 = vld [vmem:[%s9 + $0x88] sm:$0xf]
    %v3877 = vld [vmem:[%s9 + $0x8c] sm:$0xf]
    %v3878 = vld [vmem:[%s9 + $0x90] sm:$0xf]
    %v3879 = vld [vmem:[%s9 + $0x94] sm:$0xf]
    %v3880 = vld [vmem:[%s9 + $0x98] sm:$0xf]
    %v3881 = vld [vmem:[%s9 + $0x9c] sm:$0xf]
    %v3882 = vld [vmem:[%s9 + $0xa0] sm:$0xf]
    %v3883 = vld [vmem:[%s9 + $0xa4] sm:$0xf]
    %v3884 = vld [vmem:[%s9 + $0xa8] sm:$0xf]
    %v3885 = vld [vmem:[%s9 + $0xac] sm:$0xf]
    %v3886 = vld [vmem:[%s9 + $0xb0] sm:$0xf]
    %v3887 = vld [vmem:[%s9 + $0xb4] sm:$0xf]
    %v3888 = vld [vmem:[%s9 + $0xb8] sm:$0xf]
    %v3889 = vld [vmem:[%s9 + $0xbc] sm:$0xf]
    %v3890 = vld [vmem:[%s9 + $0xc0] sm:$0xf]
    %v3891 = vld [vmem:[%s9 + $0xc4] sm:$0xf]
    %v3892 = vld [vmem:[%s9 + $0xc8] sm:$0xf]
    %v3893 = vld [vmem:[%s9 + $0xcc] sm:$0xf]
    %v3894 = vld [vmem:[%s9 + $0xd0] sm:$0xf]
    %v3895 = vld [vmem:[%s9 + $0xd4] sm:$0xf]
    %v3896 = vld [vmem:[%s9 + $0xd8] sm:$0xf]
    %v3897 = vld [vmem:[%s9 + $0xdc] sm:$0xf]
    %v3898 = vld [vmem:[%s9 + $0xe0] sm:$0xf]
    %v3899 = vld [vmem:[%s9 + $0xe4] sm:$0xf]
    %v3900 = vld [vmem:[%s9 + $0xe8] sm:$0xf]
    %v3901 = vld [vmem:[%s9 + $0xec] sm:$0xf]
    %v3902 = vld [vmem:[%s9 + $0xf0] sm:$0xf]
    %v3903 = vld [vmem:[%s9 + $0xf4] sm:$0xf]
    %v3904 = vld [vmem:[%s9 + $0xf8] sm:$0xf]
    %v3905 = vld [vmem:[%s9 + $0xfc] sm:$0xf]
    %v3906 = vld [vmem:[%s9 + $0x100] sm:$0xf]
    %v3907 = vld [vmem:[%s9 + $0x104] sm:$0xf]
    %v3908 = vld [vmem:[%s9 + $0x108] sm:$0xf]
    %v3909 = vld [vmem:[%s9 + $0x10c] sm:$0xf]
    %v3910 = vld [vmem:[%s9 + $0x110] sm:$0xf]
    %v3911 = vld [vmem:[%s9 + $0x114] sm:$0xf]
    %v3912 = vld [vmem:[%s9 + $0x118] sm:$0xf]
    %v3913 = vld [vmem:[%s9 + $0x11c] sm:$0xf]
    %v3914 = vld [vmem:[%s9 + $0x120] sm:$0xf]
    %v3915 = vld [vmem:[%s9 + $0x124] sm:$0xf]
    %v3916 = vld [vmem:[%s9 + $0x128] sm:$0xf]
    %v3917 = vld [vmem:[%s9 + $0x12c] sm:$0xf]
    %v3918 = vld [vmem:[%s9 + $0x130] sm:$0xf]
    %v3919 = vld [vmem:[%s9 + $0x134] sm:$0xf]
    %v3920 = vld [vmem:[%s9 + $0x138] sm:$0xf]
    %v3921 = vld [vmem:[%s9 + $0x13c] sm:$0xf]
    %v3922 = vld [vmem:[%s9 + $0x140] sm:$0xf]
    %v3923 = vld [vmem:[%s9 + $0x144] sm:$0xf]
    %v3924 = vld [vmem:[%s9 + $0x148] sm:$0xf]
    %v3925 = vld [vmem:[%s9 + $0x14c] sm:$0xf]
    %v3926 = vld [vmem:[%s9 + $0x150] sm:$0xf]
    %v3927 = vld [vmem:[%s9 + $0x154] sm:$0xf]
    %v3928 = vld [vmem:[%s9 + $0x158] sm:$0xf]
    %v3929 = vld [vmem:[%s9 + $0x15c] sm:$0xf]
    %v3930 = vld [vmem:[%s9 + $0x160] sm:$0xf]
    %v3931 = vld [vmem:[%s9 + $0x164] sm:$0xf]
    %v3932 = vld [vmem:[%s9 + $0x168] sm:$0xf]
    %v3933 = vld [vmem:[%s9 + $0x16c] sm:$0xf]
    %v3934 = vld [vmem:[%s9 + $0x170] sm:$0xf]
    %v3935 = vld [vmem:[%s9 + $0x174] sm:$0xf]
    %v3936 = vld [vmem:[%s9 + $0x178] sm:$0xf]
    %v3937 = vld [vmem:[%s9 + $0x17c] sm:$0xf]
    %v3938 = vld [vmem:[%s9 + $0x180] sm:$0xf]
    %v3939 = vld [vmem:[%s9 + $0x184] sm:$0xf]
    %v3940 = vld [vmem:[%s9 + $0x188] sm:$0xf]
    %v3941 = vld [vmem:[%s9 + $0x18c] sm:$0xf]
    %v3942 = vld [vmem:[%s9 + $0x190] sm:$0xf]
    %v3943 = vld [vmem:[%s9 + $0x194] sm:$0xf]
    %v3944 = vld [vmem:[%s9 + $0x198] sm:$0xf]
    %v3945 = vld [vmem:[%s9 + $0x19c] sm:$0xf]
    %v3946 = vld [vmem:[%s9 + $0x1a0] sm:$0xf]
    %v3947 = vld [vmem:[%s9 + $0x1a4] sm:$0xf]
    %v3948 = vld [vmem:[%s9 + $0x1a8] sm:$0xf]
    %v3949 = vld [vmem:[%s9 + $0x1ac] sm:$0xf]
    %v3950 = vld [vmem:[%s9 + $0x1b0] sm:$0xf]
    %v3951 = vld [vmem:[%s9 + $0x1b4] sm:$0xf]
    %v3952 = vld [vmem:[%s9 + $0x1b8] sm:$0xf]
    %v3953 = vld [vmem:[%s9 + $0x1bc] sm:$0xf]
    %v3954 = vld [vmem:[%s9 + $0x1c0] sm:$0xf]
    %v3955 = vld [vmem:[%s9 + $0x1c4] sm:$0xf]
    %v3956 = vld [vmem:[%s9 + $0x1c8] sm:$0xf]
    %v3957 = vld [vmem:[%s9 + $0x1cc] sm:$0xf]
    %v3958 = vld [vmem:[%s9 + $0x1d0] sm:$0xf]
    %v3959 = vld [vmem:[%s9 + $0x1d4] sm:$0xf]
    %v3960 = vld [vmem:[%s9 + $0x1d8] sm:$0xf]
    %v3961 = vld [vmem:[%s9 + $0x1dc] sm:$0xf]
    %v3962 = vld [vmem:[%s9 + $0x1e0] sm:$0xf]
    %v3963 = vld [vmem:[%s9 + $0x1e4] sm:$0xf]
    %v3964 = vld [vmem:[%s9 + $0x1e8] sm:$0xf]
    %v3965 = vld [vmem:[%s9 + $0x1ec] sm:$0xf]
    %v3966 = vld [vmem:[%s9 + $0x1f0] sm:$0xf]
    %v3967 = vld [vmem:[%s9 + $0x1f4] sm:$0xf]
    %v3968 = vld [vmem:[%s9 + $0x1f8] sm:$0xf]
    %v3969 = vld [vmem:[%s9 + $0x1fc] sm:$0xf]
    %v3970 = vld [vmem:[%s10] sm:$0x1]
    %v3972 = vlaneseq
    %v3973 = vshrl.u32 %v3972, 7
    %v3974 = vsub.s32 0, %v3973
    %v3975 = vrot.slane %v3970, %v3974
    %v4105 = vunpack.c.l.b16 %v3842
    %v4106 = vunpack.c.l.b16 %v3843
    %v4107 = vunpack.c.l.b16 %v3844
    %v4108 = vunpack.c.l.b16 %v3845
    %v4109 = vunpack.c.l.b16 %v3846
    %v4110 = vunpack.c.l.b16 %v3847
    %v4111 = vunpack.c.l.b16 %v3848
    %v4112 = vunpack.c.l.b16 %v3849
    %v4113 = vunpack.c.l.b16 %v3850
    %v4114 = vunpack.c.l.b16 %v3851
    %v4115 = vunpack.c.l.b16 %v3852
    %v4116 = vunpack.c.l.b16 %v3853
    %v4117 = vunpack.c.l.b16 %v3854
    %v4118 = vunpack.c.l.b16 %v3855
    %v4119 = vunpack.c.l.b16 %v3856
    %v4120 = vunpack.c.l.b16 %v3857
    %v4121 = vunpack.c.l.b16 %v3858
    %v4122 = vunpack.c.l.b16 %v3859
    %v4123 = vunpack.c.l.b16 %v3860
    %v4124 = vunpack.c.l.b16 %v3861
    %v4125 = vunpack.c.l.b16 %v3862
    %v4126 = vunpack.c.l.b16 %v3863
    %v4127 = vunpack.c.l.b16 %v3864
    %v4128 = vunpack.c.l.b16 %v3865
    %v4129 = vunpack.c.l.b16 %v3866
    %v4130 = vunpack.c.l.b16 %v3867
    %v4131 = vunpack.c.l.b16 %v3868
    %v4132 = vunpack.c.l.b16 %v3869
    %v4133 = vunpack.c.l.b16 %v3870
    %v4134 = vunpack.c.l.b16 %v3871
    %v4135 = vunpack.c.l.b16 %v3872
    %v4136 = vunpack.c.l.b16 %v3873
    %v4137 = vunpack.c.l.b16 %v3874
    %v4138 = vunpack.c.l.b16 %v3875
    %v4139 = vunpack.c.l.b16 %v3876
    %v4140 = vunpack.c.l.b16 %v3877
    %v4141 = vunpack.c.l.b16 %v3878
    %v4142 = vunpack.c.l.b16 %v3879
    %v4143 = vunpack.c.l.b16 %v3880
    %v4144 = vunpack.c.l.b16 %v3881
    %v4145 = vunpack.c.l.b16 %v3882
    %v4146 = vunpack.c.l.b16 %v3883
    %v4147 = vunpack.c.l.b16 %v3884
    %v4148 = vunpack.c.l.b16 %v3885
    %v4149 = vunpack.c.l.b16 %v3886
    %v4150 = vunpack.c.l.b16 %v3887
    %v4151 = vunpack.c.l.b16 %v3888
    %v4152 = vunpack.c.l.b16 %v3889
    %v4153 = vunpack.c.l.b16 %v3890
    %v4154 = vunpack.c.l.b16 %v3891
    %v4155 = vunpack.c.l.b16 %v3892
    %v4156 = vunpack.c.l.b16 %v3893
    %v4157 = vunpack.c.l.b16 %v3894
    %v4158 = vunpack.c.l.b16 %v3895
    %v4159 = vunpack.c.l.b16 %v3896
    %v4160 = vunpack.c.l.b16 %v3897
    %v4161 = vunpack.c.l.b16 %v3898
    %v4162 = vunpack.c.l.b16 %v3899
    %v4163 = vunpack.c.l.b16 %v3900
    %v4164 = vunpack.c.l.b16 %v3901
    %v4165 = vunpack.c.l.b16 %v3902
    %v4166 = vunpack.c.l.b16 %v3903
    %v4167 = vunpack.c.l.b16 %v3904
    %v4168 = vunpack.c.l.b16 %v3905
    %v4169 = vunpack.c.l.b16 %v3906
    %v4170 = vunpack.c.l.b16 %v3907
    %v4171 = vunpack.c.l.b16 %v3908
    %v4172 = vunpack.c.l.b16 %v3909
    %v4173 = vunpack.c.l.b16 %v3910
    %v4174 = vunpack.c.l.b16 %v3911
    %v4175 = vunpack.c.l.b16 %v3912
    %v4176 = vunpack.c.l.b16 %v3913
    %v4177 = vunpack.c.l.b16 %v3914
    %v4178 = vunpack.c.l.b16 %v3915
    %v4179 = vunpack.c.l.b16 %v3916
    %v4180 = vunpack.c.l.b16 %v3917
    %v4181 = vunpack.c.l.b16 %v3918
    %v4182 = vunpack.c.l.b16 %v3919
    %v4183 = vunpack.c.l.b16 %v3920
    %v4184 = vunpack.c.l.b16 %v3921
    %v4185 = vunpack.c.l.b16 %v3922
    %v4186 = vunpack.c.l.b16 %v3923
    %v4187 = vunpack.c.l.b16 %v3924
    %v4188 = vunpack.c.l.b16 %v3925
    %v4189 = vunpack.c.l.b16 %v3926
    %v4190 = vunpack.c.l.b16 %v3927
    %v4191 = vunpack.c.l.b16 %v3928
    %v4192 = vunpack.c.l.b16 %v3929
    %v4193 = vunpack.c.l.b16 %v3930
    %v4194 = vunpack.c.l.b16 %v3931
    %v4195 = vunpack.c.l.b16 %v3932
    %v4196 = vunpack.c.l.b16 %v3933
    %v4197 = vunpack.c.l.b16 %v3934
    %v4198 = vunpack.c.l.b16 %v3935
    %v4199 = vunpack.c.l.b16 %v3936
    %v4200 = vunpack.c.l.b16 %v3937
    %v4201 = vunpack.c.l.b16 %v3938
    %v4202 = vunpack.c.l.b16 %v3939
    %v4203 = vunpack.c.l.b16 %v3940
    %v4204 = vunpack.c.l.b16 %v3941
    %v4205 = vunpack.c.l.b16 %v3942
    %v4206 = vunpack.c.l.b16 %v3943
    %v4207 = vunpack.c.l.b16 %v3944
    %v4208 = vunpack.c.l.b16 %v3945
    %v4209 = vunpack.c.l.b16 %v3946
    %v4210 = vunpack.c.l.b16 %v3947
    %v4211 = vunpack.c.l.b16 %v3948
    %v4212 = vunpack.c.l.b16 %v3949
    %v4213 = vunpack.c.l.b16 %v3950
    %v4214 = vunpack.c.l.b16 %v3951
    %v4215 = vunpack.c.l.b16 %v3952
    %v4216 = vunpack.c.l.b16 %v3953
    %v4217 = vunpack.c.l.b16 %v3954
    %v4218 = vunpack.c.l.b16 %v3955
    %v4219 = vunpack.c.l.b16 %v3956
    %v4220 = vunpack.c.l.b16 %v3957
    %v4221 = vunpack.c.l.b16 %v3958
    %v4222 = vunpack.c.l.b16 %v3959
    %v4223 = vunpack.c.l.b16 %v3960
    %v4224 = vunpack.c.l.b16 %v3961
    %v4225 = vunpack.c.l.b16 %v3962
    %v4226 = vunpack.c.l.b16 %v3963
    %v4227 = vunpack.c.l.b16 %v3964
    %v4228 = vunpack.c.l.b16 %v3965
    %v4229 = vunpack.c.l.b16 %v3966
    %v4230 = vunpack.c.l.b16 %v3967
    %v4231 = vunpack.c.l.b16 %v3968
    %v4232 = vunpack.c.l.b16 %v3969
    %v4233 = vpack.c.b16 %v4106, %v4105
    %v4234 = vpack.c.b16 %v4108, %v4107
    %v4235 = vpack.c.b16 %v4110, %v4109
    %v4236 = vpack.c.b16 %v4112, %v4111
    %v4237 = vpack.c.b16 %v4114, %v4113
    %v4238 = vpack.c.b16 %v4116, %v4115
    %v4239 = vpack.c.b16 %v4118, %v4117
    %v4240 = vpack.c.b16 %v4120, %v4119
    %v4241 = vpack.c.b16 %v4122, %v4121
    %v4242 = vpack.c.b16 %v4124, %v4123
    %v4243 = vpack.c.b16 %v4126, %v4125
    %v4244 = vpack.c.b16 %v4128, %v4127
    %v4245 = vpack.c.b16 %v4130, %v4129
    %v4246 = vpack.c.b16 %v4132, %v4131
    %v4247 = vpack.c.b16 %v4134, %v4133
    %v4248 = vpack.c.b16 %v4136, %v4135
    %v4249 = vpack.c.b16 %v4138, %v4137
    %v4250 = vpack.c.b16 %v4140, %v4139
    %v4251 = vpack.c.b16 %v4142, %v4141
    %v4252 = vpack.c.b16 %v4144, %v4143
    %v4253 = vpack.c.b16 %v4146, %v4145
    %v4254 = vpack.c.b16 %v4148, %v4147
    %v4255 = vpack.c.b16 %v4150, %v4149
    %v4256 = vpack.c.b16 %v4152, %v4151
    %v4257 = vpack.c.b16 %v4154, %v4153
    %v4258 = vpack.c.b16 %v4156, %v4155
    %v4259 = vpack.c.b16 %v4158, %v4157
    %v4260 = vpack.c.b16 %v4160, %v4159
    %v4261 = vpack.c.b16 %v4162, %v4161
    %v4262 = vpack.c.b16 %v4164, %v4163
    %v4263 = vpack.c.b16 %v4166, %v4165
    %v4264 = vpack.c.b16 %v4168, %v4167
    %v4265 = vpack.c.b16 %v4170, %v4169
    %v4266 = vpack.c.b16 %v4172, %v4171
    %v4267 = vpack.c.b16 %v4174, %v4173
    %v4268 = vpack.c.b16 %v4176, %v4175
    %v4269 = vpack.c.b16 %v4178, %v4177
    %v4270 = vpack.c.b16 %v4180, %v4179
    %v4271 = vpack.c.b16 %v4182, %v4181
    %v4272 = vpack.c.b16 %v4184, %v4183
    %v4273 = vpack.c.b16 %v4186, %v4185
    %v4274 = vpack.c.b16 %v4188, %v4187
    %v4275 = vpack.c.b16 %v4190, %v4189
    %v4276 = vpack.c.b16 %v4192, %v4191
    %v4277 = vpack.c.b16 %v4194, %v4193
    %v4278 = vpack.c.b16 %v4196, %v4195
    %v4279 = vpack.c.b16 %v4198, %v4197
    %v4280 = vpack.c.b16 %v4200, %v4199
    %v4281 = vpack.c.b16 %v4202, %v4201
    %v4282 = vpack.c.b16 %v4204, %v4203
    %v4283 = vpack.c.b16 %v4206, %v4205
    %v4284 = vpack.c.b16 %v4208, %v4207
    %v4285 = vpack.c.b16 %v4210, %v4209
    %v4286 = vpack.c.b16 %v4212, %v4211
    %v4287 = vpack.c.b16 %v4214, %v4213
    %v4288 = vpack.c.b16 %v4216, %v4215
    %v4289 = vpack.c.b16 %v4218, %v4217
    %v4290 = vpack.c.b16 %v4220, %v4219
    %v4291 = vpack.c.b16 %v4222, %v4221
    %v4292 = vpack.c.b16 %v4224, %v4223
    %v4293 = vpack.c.b16 %v4226, %v4225
    %v4294 = vpack.c.b16 %v4228, %v4227
    %v4295 = vpack.c.b16 %v4230, %v4229
    %v4296 = vpack.c.b16 %v4232, %v4231
    %4361 = vmatprep.subr.bf16.mxu0 0
    %4362 = vmatpush1.bf16.msra.mxu0 %v4233
    %4363 = vmatprep.subr.bf16.mxu0 0
    %4364 = vmatpush1.bf16.msra.mxu0 %v4234
    %4365 = vmatprep.subr.bf16.mxu0 0
    %4366 = vmatpush1.bf16.msra.mxu0 %v4235
    %4367 = vmatprep.subr.bf16.mxu0 0
    %4368 = vmatpush1.bf16.msra.mxu0 %v4236
    %4369 = vmatprep.subr.bf16.mxu0 0
    %4370 = vmatpush1.bf16.msra.mxu0 %v4237
    %4371 = vmatprep.subr.bf16.mxu0 0
    %4372 = vmatpush1.bf16.msra.mxu0 %v4238
    %4373 = vmatprep.subr.bf16.mxu0 0
    %4374 = vmatpush1.bf16.msra.mxu0 %v4239
    %4375 = vmatprep.subr.bf16.mxu0 0
    %4376 = vmatpush1.bf16.msra.mxu0 %v4240
    %4377 = vmatprep.subr.bf16.mxu0 0
    %4378 = vmatpush1.bf16.msra.mxu0 %v4241
    %4379 = vmatprep.subr.bf16.mxu0 0
    %4380 = vmatpush1.bf16.msra.mxu0 %v4242
    %4381 = vmatprep.subr.bf16.mxu0 0
    %4382 = vmatpush1.bf16.msra.mxu0 %v4243
    %4383 = vmatprep.subr.bf16.mxu0 0
    %4384 = vmatpush1.bf16.msra.mxu0 %v4244
    %4385 = vmatprep.subr.bf16.mxu0 0
    %4386 = vmatpush1.bf16.msra.mxu0 %v4245
    %4387 = vmatprep.subr.bf16.mxu0 0
    %4388 = vmatpush1.bf16.msra.mxu0 %v4246
    %4389 = vmatprep.subr.bf16.mxu0 0
    %4390 = vmatpush1.bf16.msra.mxu0 %v4247
    %4391 = vmatprep.subr.bf16.mxu0 0
    %4392 = vmatpush1.bf16.msra.mxu0 %v4248
    %4393 = vmatprep.mubr.bf16.mxu0 %v3835
    %4394 = vmatmul.mubr.bf16.gmra.mrb[0].mxu0 %v3834
    %v4395 = vpop.f32.mrb[0].mxu0
    %v4396 = vadd.f32 %v3975, %v4395
    %v4397 = vpop.f32.mrb[0].mxu0
    %v4398 = vpop.f32.mrb[0].mxu0
    %v4399 = vpop.f32.mrb[0].mxu0
    %4400 = vdwg.mxu0
    %4401 = vmatprep.subr.bf16.mxu0 0
    %4402 = vmatpush1.bf16.msra.mxu0 %v4249
    %4403 = vmatprep.subr.bf16.mxu0 0
    %4404 = vmatpush1.bf16.msra.mxu0 %v4250
    %4405 = vmatprep.subr.bf16.mxu0 0
    %4406 = vmatpush1.bf16.msra.mxu0 %v4251
    %4407 = vmatprep.subr.bf16.mxu0 0
    %4408 = vmatpush1.bf16.msra.mxu0 %v4252
    %4409 = vmatprep.subr.bf16.mxu0 0
    %4410 = vmatpush1.bf16.msra.mxu0 %v4253
    %4411 = vmatprep.subr.bf16.mxu0 0
    %4412 = vmatpush1.bf16.msra.mxu0 %v4254
    %4413 = vmatprep.subr.bf16.mxu0 0
    %4414 = vmatpush1.bf16.msra.mxu0 %v4255
    %4415 = vmatprep.subr.bf16.mxu0 0
    %4416 = vmatpush1.bf16.msra.mxu0 %v4256
    %4417 = vmatprep.subr.bf16.mxu0 0
    %4418 = vmatpush1.bf16.msra.mxu0 %v4257
    %4419 = vmatprep.subr.bf16.mxu0 0
    %4420 = vmatpush1.bf16.msra.mxu0 %v4258
    %4421 = vmatprep.subr.bf16.mxu0 0
    %4422 = vmatpush1.bf16.msra.mxu0 %v4259
    %4423 = vmatprep.subr.bf16.mxu0 0
    %4424 = vmatpush1.bf16.msra.mxu0 %v4260
    %4425 = vmatprep.subr.bf16.mxu0 0
    %4426 = vmatpush1.bf16.msra.mxu0 %v4261
    %4427 = vmatprep.subr.bf16.mxu0 0
    %4428 = vmatpush1.bf16.msra.mxu0 %v4262
    %4429 = vmatprep.subr.bf16.mxu0 0
    %4430 = vmatpush1.bf16.msra.mxu0 %v4263
    %4431 = vmatprep.subr.bf16.mxu0 0
    %4432 = vmatpush1.bf16.msra.mxu0 %v4264
    %4433 = vmatprep.mubr.bf16.mxu0 %v3837
    %4434 = vmatmul.mubr.bf16.gmra.mrb[0].mxu0 %v3836
    %v4435 = vpop.f32.mrb[0].mxu0
    %v4436 = vadd.f32 %v4396, %v4435
    %v4437 = vpop.f32.mrb[0].mxu0
    %v4438 = vpop.f32.mrb[0].mxu0
    %v4439 = vpop.f32.mrb[0].mxu0
    %4440 = vdwg.mxu0
    %4441 = vmatprep.subr.bf16.mxu0 0
    %4442 = vmatpush1.bf16.msra.mxu0 %v4265
    %4443 = vmatprep.subr.bf16.mxu0 0
    %4444 = vmatpush1.bf16.msra.mxu0 %v4266
    %4445 = vmatprep.subr.bf16.mxu0 0
    %4446 = vmatpush1.bf16.msra.mxu0 %v4267
    %4447 = vmatprep.subr.bf16.mxu0 0
    %4448 = vmatpush1.bf16.msra.mxu0 %v4268
    %4449 = vmatprep.subr.bf16.mxu0 0
    %4450 = vmatpush1.bf16.msra.mxu0 %v4269
    %4451 = vmatprep.subr.bf16.mxu0 0
    %4452 = vmatpush1.bf16.msra.mxu0 %v4270
    %4453 = vmatprep.subr.bf16.mxu0 0
    %4454 = vmatpush1.bf16.msra.mxu0 %v4271
    %4455 = vmatprep.subr.bf16.mxu0 0
    %4456 = vmatpush1.bf16.msra.mxu0 %v4272
    %4457 = vmatprep.subr.bf16.mxu0 0
    %4458 = vmatpush1.bf16.msra.mxu0 %v4273
    %4459 = vmatprep.subr.bf16.mxu0 0
    %4460 = vmatpush1.bf16.msra.mxu0 %v4274
    %4461 = vmatprep.subr.bf16.mxu0 0
    %4462 = vmatpush1.bf16.msra.mxu0 %v4275
    %4463 = vmatprep.subr.bf16.mxu0 0
    %4464 = vmatpush1.bf16.msra.mxu0 %v4276
    %4465 = vmatprep.subr.bf16.mxu0 0
    %4466 = vmatpush1.bf16.msra.mxu0 %v4277
    %4467 = vmatprep.subr.bf16.mxu0 0
    %4468 = vmatpush1.bf16.msra.mxu0 %v4278
    %4469 = vmatprep.subr.bf16.mxu0 0
    %4470 = vmatpush1.bf16.msra.mxu0 %v4279
    %4471 = vmatprep.subr.bf16.mxu0 0
    %4472 = vmatpush1.bf16.msra.mxu0 %v4280
    %4473 = vmatprep.mubr.bf16.mxu0 %v3839
    %4474 = vmatmul.mubr.bf16.gmra.mrb[0].mxu0 %v3838
    %v4475 = vpop.f32.mrb[0].mxu0
    %v4476 = vadd.f32 %v4436, %v4475
    %v4477 = vpop.f32.mrb[0].mxu0
    %v4478 = vpop.f32.mrb[0].mxu0
    %v4479 = vpop.f32.mrb[0].mxu0
    %4480 = vdwg.mxu0
    %4481 = vmatprep.subr.bf16.mxu0 0
    %4482 = vmatpush1.bf16.msra.mxu0 %v4281
    %4483 = vmatprep.subr.bf16.mxu0 0
    %4484 = vmatpush1.bf16.msra.mxu0 %v4282
    %4485 = vmatprep.subr.bf16.mxu0 0
    %4486 = vmatpush1.bf16.msra.mxu0 %v4283
    %4487 = vmatprep.subr.bf16.mxu0 0
    %4488 = vmatpush1.bf16.msra.mxu0 %v4284
    %4489 = vmatprep.subr.bf16.mxu0 0
    %4490 = vmatpush1.bf16.msra.mxu0 %v4285
    %4491 = vmatprep.subr.bf16.mxu0 0
    %4492 = vmatpush1.bf16.msra.mxu0 %v4286
    %4493 = vmatprep.subr.bf16.mxu0 0
    %4494 = vmatpush1.bf16.msra.mxu0 %v4287
    %4495 = vmatprep.subr.bf16.mxu0 0
    %4496 = vmatpush1.bf16.msra.mxu0 %v4288
    %4497 = vmatprep.subr.bf16.mxu0 0
    %4498 = vmatpush1.bf16.msra.mxu0 %v4289
    %4499 = vmatprep.subr.bf16.mxu0 0
    %4500 = vmatpush1.bf16.msra.mxu0 %v4290
    %4501 = vmatprep.subr.bf16.mxu0 0
    %4502 = vmatpush1.bf16.msra.mxu0 %v4291
    %4503 = vmatprep.subr.bf16.mxu0 0
    %4504 = vmatpush1.bf16.msra.mxu0 %v4292
    %4505 = vmatprep.subr.bf16.mxu0 0
    %4506 = vmatpush1.bf16.msra.mxu0 %v4293
    %4507 = vmatprep.subr.bf16.mxu0 0
    %4508 = vmatpush1.bf16.msra.mxu0 %v4294
    %4509 = vmatprep.subr.bf16.mxu0 0
    %4510 = vmatpush1.bf16.msra.mxu0 %v4295
    %4511 = vmatprep.subr.bf16.mxu0 0
    %4512 = vmatpush1.bf16.msra.mxu0 %v4296
    %4513 = vmatprep.mubr.bf16.mxu0 %v3841
    %4514 = vmatmul.mubr.bf16.gmra.mrb[0].mxu0 %v3840
    %v4515 = vpop.f32.mrb[0].mxu0
    %v4516 = vadd.f32 %v4476, %v4515
    %v4517 = vpop.f32.mrb[0].mxu0
    %v4518 = vpop.f32.mrb[0].mxu0
    %v4519 = vpop.f32.mrb[0].mxu0
    %4520 = vdwg.mxu0
    %v4521 = vmax.f32 %v4516, 0.0
    %v4522 = vpack.c.bf16 %v4521, %v4521
    %v4523 = vld [vmem:[%s11] sm:$0xf]
    %v4524 = vld [vmem:[%s11 + $0x4] sm:$0xf]
    %v4525 = vld [vmem:[%s11 + $0x8] sm:$0xf]
    %v4526 = vld [vmem:[%s11 + $0xc] sm:$0xf]
    %v4527 = vld [vmem:[%s11 + $0x10] sm:$0xf]
    %v4528 = vld [vmem:[%s11 + $0x14] sm:$0xf]
    %v4529 = vld [vmem:[%s11 + $0x18] sm:$0xf]
    %v4530 = vld [vmem:[%s11 + $0x1c] sm:$0xf]
    %v4531 = vld [vmem:[%s11 + $0x20] sm:$0xf]
    %v4532 = vld [vmem:[%s11 + $0x24] sm:$0xf]
    %v4533 = vld [vmem:[%s11 + $0x28] sm:$0xf]
    %v4534 = vld [vmem:[%s11 + $0x2c] sm:$0xf]
    %v4535 = vld [vmem:[%s11 + $0x30] sm:$0xf]
    %v4536 = vld [vmem:[%s11 + $0x34] sm:$0xf]
    %v4537 = vld [vmem:[%s11 + $0x38] sm:$0xf]
    %v4538 = vld [vmem:[%s11 + $0x3c] sm:$0xf]
    %v4539 = vld [vmem:[%s12] sm:$0x1]
    %v4541 = vlaneseq
    %v4542 = vshrl.u32 %v4541, 7
    %v4543 = vsub.s32 0, %v4542
    %v4544 = vrot.slane %v4539, %v4543
    %v4562 = vunpack.c.l.b16 %v4523
    %v4563 = vunpack.c.l.b16 %v4524
    %v4564 = vunpack.c.l.b16 %v4525
    %v4565 = vunpack.c.l.b16 %v4526
    %v4566 = vunpack.c.l.b16 %v4527
    %v4567 = vunpack.c.l.b16 %v4528
    %v4568 = vunpack.c.l.b16 %v4529
    %v4569 = vunpack.c.l.b16 %v4530
    %v4570 = vunpack.c.l.b16 %v4531
    %v4571 = vunpack.c.l.b16 %v4532
    %v4572 = vunpack.c.l.b16 %v4533
    %v4573 = vunpack.c.l.b16 %v4534
    %v4574 = vunpack.c.l.b16 %v4535
    %v4575 = vunpack.c.l.b16 %v4536
    %v4576 = vunpack.c.l.b16 %v4537
    %v4577 = vunpack.c.l.b16 %v4538
    %v4578 = vpack.c.b16 %v4563, %v4562
    %v4579 = vpack.c.b16 %v4565, %v4564
    %v4580 = vpack.c.b16 %v4567, %v4566
    %v4581 = vpack.c.b16 %v4569, %v4568
    %v4582 = vpack.c.b16 %v4571, %v4570
    %v4583 = vpack.c.b16 %v4573, %v4572
    %v4584 = vpack.c.b16 %v4575, %v4574
    %v4585 = vpack.c.b16 %v4577, %v4576
    %4594 = vmatprep.subr.bf16.mxu0 0
    %4595 = vmatpush1.bf16.msra.mxu0 %v4578
    %4596 = vmatprep.subr.bf16.mxu0 0
    %4597 = vmatpush1.bf16.msra.mxu0 %v4579
    %4598 = vmatprep.subr.bf16.mxu0 0
    %4599 = vmatpush1.bf16.msra.mxu0 %v4580
    %4600 = vmatprep.subr.bf16.mxu0 0
    %4601 = vmatpush1.bf16.msra.mxu0 %v4581
    %4602 = vmatprep.subr.bf16.mxu0 0
    %4603 = vmatpush1.bf16.msra.mxu0 %v4582
    %4604 = vmatprep.subr.bf16.mxu0 0
    %4605 = vmatpush1.bf16.msra.mxu0 %v4583
    %4606 = vmatprep.subr.bf16.mxu0 0
    %4607 = vmatpush1.bf16.msra.mxu0 %v4584
    %4608 = vmatprep.subr.bf16.mxu0 0
    %4609 = vmatpush1.bf16.msra.mxu0 %v4585
    %4610 = vmatprep.subr.bf16.mxu0 0
    %4611 = vmatpush1.bf16.msra.mxu0 0
    %4612 = vmatprep.subr.bf16.mxu0 0
    %4613 = vmatpush1.bf16.msra.mxu0 0
    %4614 = vmatprep.subr.bf16.mxu0 0
    %4615 = vmatpush1.bf16.msra.mxu0 0
    %4616 = vmatprep.subr.bf16.mxu0 0
    %4617 = vmatpush1.bf16.msra.mxu0 0
    %4618 = vmatprep.subr.bf16.mxu0 0
    %4619 = vmatpush1.bf16.msra.mxu0 0
    %4620 = vmatprep.subr.bf16.mxu0 0
    %4621 = vmatpush1.bf16.msra.mxu0 0
    %4622 = vmatprep.subr.bf16.mxu0 0
    %4623 = vmatpush1.bf16.msra.mxu0 0
    %4624 = vmatprep.subr.bf16.mxu0 0
    %4625 = vmatpush1.bf16.msra.mxu0 0
    %4626 = vmatprep.mubr.bf16.mxu0 0
    %4627 = vmatmul.mubr.bf16.gmra.mrb[0].mxu0 %v4522
    %v4628 = vpop.f32.mrb[0].mxu0
    %v4629 = vadd.f32 %v4544, %v4628
    %v4630 = vpop.f32.mrb[0].mxu0
    %v4631 = vpop.f32.mrb[0].mxu0
    %v4632 = vpop.f32.mrb[0].mxu0
    %4633 = vdwg.mxu0
    %4634 = vst [vmem:[%s13] sm:$0xf] %v4629
    %v4635 = vlaneseq
    %v4636 = vshrl.u32 %v4635, 7
    %vm4637 = vcmp.lt.s32.totalorder %v4636, 2
    %v4638 = vsel %vm4637, 1.0, -1.0
    %v4639 = vlaneseq
    %v4640 = vand.u32 %v4639, 127
    %vm4641 = vcmp.lt.s32.totalorder %v4640, 2
    %v4642 = vsel %vm4641, 1.0, -1.0
    %4643 = vmatprep.subr.mxu0 %v3707
    %4644 = vmatpush1.xpose.msra.mxu0 %v3705
    %4645 = vmatprep.subr.mxu0 0.0
    %4646 = vmatpush1.xpose.msra.mxu0 0.0
    %4647 = vmatprep.subr.mxu0 0.0
    %4648 = vmatpush1.xpose.msra.mxu0 0.0
    %4649 = vmatprep.subr.mxu0 0.0
    %4650 = vmatpush1.xpose.msra.mxu0 0.0
    %4651 = vmatprep.subr.mxu0 0.0
    %4652 = vmatpush1.xpose.msra.mxu0 0.0
    %4653 = vmatprep.subr.mxu0 0.0
    %4654 = vmatpush1.xpose.msra.mxu0 0.0
    %4655 = vmatprep.subr.mxu0 0.0
    %4656 = vmatpush1.xpose.msra.mxu0 0.0
    %4657 = vmatprep.subr.mxu0 0.0
    %4658 = vmatpush1.xpose.msra.mxu0 0.0
    %4659 = vmatprep.subr.mxu0 0.0
    %4660 = vmatpush1.xpose.msra.mxu0 0.0
    %4661 = vmatprep.subr.mxu0 0.0
    %4662 = vmatpush1.xpose.msra.mxu0 0.0
    %4663 = vmatprep.subr.mxu0 0.0
    %4664 = vmatpush1.xpose.msra.mxu0 0.0
    %4665 = vmatprep.subr.mxu0 0.0
    %4666 = vmatpush1.xpose.msra.mxu0 0.0
    %4667 = vmatprep.subr.mxu0 0.0
    %4668 = vmatpush1.xpose.msra.mxu0 0.0
    %4669 = vmatprep.subr.mxu0 0.0
    %4670 = vmatpush1.xpose.msra.mxu0 0.0
    %4671 = vmatprep.subr.mxu0 0.0
    %4672 = vmatpush1.xpose.msra.mxu0 0.0
    %4673 = vmatprep.subr.mxu0 0.0
    %4674 = vmatpush1.xpose.msra.mxu0 0.0
    %4675 = vmatprep.subr.mxu0 0.0
    %4676 = vmatpush1.xpose.msra.mxu0 0.0
    %4677 = vmatprep.subr.mxu0 0.0
    %4678 = vmatpush1.xpose.msra.mxu0 0.0
    %4679 = vmatprep.subr.mxu0 0.0
    %4680 = vmatpush1.xpose.msra.mxu0 0.0
    %4681 = vmatprep.subr.mxu0 0.0
    %4682 = vmatpush1.xpose.msra.mxu0 0.0
    %4683 = vmatprep.subr.mxu0 0.0
    %4684 = vmatpush1.xpose.msra.mxu0 0.0
    %4685 = vmatprep.subr.mxu0 0.0
    %4686 = vmatpush1.xpose.msra.mxu0 0.0
    %4687 = vmatprep.subr.mxu0 0.0
    %4688 = vmatpush1.xpose.msra.mxu0 0.0
    %4689 = vmatprep.subr.mxu0 0.0
    %4690 = vmatpush1.xpose.msra.mxu0 0.0
    %4691 = vmatprep.subr.mxu0 0.0
    %4692 = vmatpush1.xpose.msra.mxu0 0.0
    %4693 = vmatprep.subr.mxu0 0.0
    %4694 = vmatpush1.xpose.msra.mxu0 0.0
    %4695 = vmatprep.subr.mxu0 0.0
    %4696 = vmatpush1.xpose.msra.mxu0 0.0
    %4697 = vmatprep.subr.mxu0 0.0
    %4698 = vmatpush1.xpose.msra.mxu0 0.0
    %4699 = vmatprep.subr.mxu0 0.0
    %4700 = vmatpush1.xpose.msra.mxu0 0.0
    %4701 = vmatprep.subr.mxu0 0.0
    %4702 = vmatpush1.xpose.msra.mxu0 0.0
    %4703 = vmatprep.subr.mxu0 0.0
    %4704 = vmatpush1.xpose.msra.mxu0 0.0
    %4705 = vmatprep.subr.mxu0 0.0
    %4706 = vmatpush1.xpose.msra.mxu0 0.0
    %4707 = vmatprep.mubr.f32.mxu0 %v3707
    %4708 = vmatmul.mubr.f32.gmra.mrb[0].mxu0 %v3705
    %v4709 = vpop.f32.mrb[0].mxu0
    %v4710 = vadd.f32 0.0, %v4709
    %v4711 = vpop.f32.mrb[0].mxu0
    %4712 = vdwg.mxu0
    %4713 = vmatprep.subr.mxu0 %v3748
    %4714 = vmatpush1.xpose.msra.mxu0 %v3746
    %4715 = vmatprep.subr.mxu0 0.0
    %4716 = vmatpush1.xpose.msra.mxu0 0.0
    %4717 = vmatprep.subr.mxu0 0.0
    %4718 = vmatpush1.xpose.msra.mxu0 0.0
    %4719 = vmatprep.subr.mxu0 0.0
    %4720 = vmatpush1.xpose.msra.mxu0 0.0
    %4721 = vmatprep.subr.mxu0 0.0
    %4722 = vmatpush1.xpose.msra.mxu0 0.0
    %4723 = vmatprep.subr.mxu0 0.0
    %4724 = vmatpush1.xpose.msra.mxu0 0.0
    %4725 = vmatprep.subr.mxu0 0.0
    %4726 = vmatpush1.xpose.msra.mxu0 0.0
    %4727 = vmatprep.subr.mxu0 0.0
    %4728 = vmatpush1.xpose.msra.mxu0 0.0
    %4729 = vmatprep.subr.mxu0 0.0
    %4730 = vmatpush1.xpose.msra.mxu0 0.0
    %4731 = vmatprep.subr.mxu0 0.0
    %4732 = vmatpush1.xpose.msra.mxu0 0.0
    %4733 = vmatprep.subr.mxu0 0.0
    %4734 = vmatpush1.xpose.msra.mxu0 0.0
    %4735 = vmatprep.subr.mxu0 0.0
    %4736 = vmatpush1.xpose.msra.mxu0 0.0
    %4737 = vmatprep.subr.mxu0 0.0
    %4738 = vmatpush1.xpose.msra.mxu0 0.0
    %4739 = vmatprep.subr.mxu0 0.0
    %4740 = vmatpush1.xpose.msra.mxu0 0.0
    %4741 = vmatprep.subr.mxu0 0.0
    %4742 = vmatpush1.xpose.msra.mxu0 0.0
    %4743 = vmatprep.subr.mxu0 0.0
    %4744 = vmatpush1.xpose.msra.mxu0 0.0
    %4745 = vmatprep.subr.mxu0 0.0
    %4746 = vmatpush1.xpose.msra.mxu0 0.0
    %4747 = vmatprep.subr.mxu0 0.0
    %4748 = vmatpush1.xpose.msra.mxu0 0.0
    %4749 = vmatprep.subr.mxu0 0.0
    %4750 = vmatpush1.xpose.msra.mxu0 0.0
    %4751 = vmatprep.subr.mxu0 0.0
    %4752 = vmatpush1.xpose.msra.mxu0 0.0
    %4753 = vmatprep.subr.mxu0 0.0
    %4754 = vmatpush1.xpose.msra.mxu0 0.0
    %4755 = vmatprep.subr.mxu0 0.0
    %4756 = vmatpush1.xpose.msra.mxu0 0.0
    %4757 = vmatprep.subr.mxu0 0.0
    %4758 = vmatpush1.xpose.msra.mxu0 0.0
    %4759 = vmatprep.subr.mxu0 0.0
    %4760 = vmatpush1.xpose.msra.mxu0 0.0
    %4761 = vmatprep.subr.mxu0 0.0
    %4762 = vmatpush1.xpose.msra.mxu0 0.0
    %4763 = vmatprep.subr.mxu0 0.0
    %4764 = vmatpush1.xpose.msra.mxu0 0.0
    %4765 = vmatprep.subr.mxu0 0.0
    %4766 = vmatpush1.xpose.msra.mxu0 0.0
    %4767 = vmatprep.subr.mxu0 0.0
    %4768 = vmatpush1.xpose.msra.mxu0 0.0
    %4769 = vmatprep.subr.mxu0 0.0
    %4770 = vmatpush1.xpose.msra.mxu0 0.0
    %4771 = vmatprep.subr.mxu0 0.0
    %4772 = vmatpush1.xpose.msra.mxu0 0.0
    %4773 = vmatprep.subr.mxu0 0.0
    %4774 = vmatpush1.xpose.msra.mxu0 0.0
    %4775 = vmatprep.subr.mxu0 0.0
    %4776 = vmatpush1.xpose.msra.mxu0 0.0
    %4777 = vmatprep.mubr.f32.mxu0 %v3748
    %4778 = vmatmul.mubr.f32.gmra.mrb[0].mxu0 %v3746
    %v4779 = vpop.f32.mrb[0].mxu0
    %v4780 = vadd.f32 %v4710, %v4779
    %v4781 = vpop.f32.mrb[0].mxu0
    %4782 = vdwg.mxu0
    %4783 = vmatprep.subr.mxu0 %v3789
    %4784 = vmatpush1.xpose.msra.mxu0 %v3787
    %4785 = vmatprep.subr.mxu0 0.0
    %4786 = vmatpush1.xpose.msra.mxu0 0.0
    %4787 = vmatprep.subr.mxu0 0.0
    %4788 = vmatpush1.xpose.msra.mxu0 0.0
    %4789 = vmatprep.subr.mxu0 0.0
    %4790 = vmatpush1.xpose.msra.mxu0 0.0
    %4791 = vmatprep.subr.mxu0 0.0
    %4792 = vmatpush1.xpose.msra.mxu0 0.0
    %4793 = vmatprep.subr.mxu0 0.0
    %4794 = vmatpush1.xpose.msra.mxu0 0.0
    %4795 = vmatprep.subr.mxu0 0.0
    %4796 = vmatpush1.xpose.msra.mxu0 0.0
    %4797 = vmatprep.subr.mxu0 0.0
    %4798 = vmatpush1.xpose.msra.mxu0 0.0
    %4799 = vmatprep.subr.mxu0 0.0
    %4800 = vmatpush1.xpose.msra.mxu0 0.0
    %4801 = vmatprep.subr.mxu0 0.0
    %4802 = vmatpush1.xpose.msra.mxu0 0.0
    %4803 = vmatprep.subr.mxu0 0.0
    %4804 = vmatpush1.xpose.msra.mxu0 0.0
    %4805 = vmatprep.subr.mxu0 0.0
    %4806 = vmatpush1.xpose.msra.mxu0 0.0
    %4807 = vmatprep.subr.mxu0 0.0
    %4808 = vmatpush1.xpose.msra.mxu0 0.0
    %4809 = vmatprep.subr.mxu0 0.0
    %4810 = vmatpush1.xpose.msra.mxu0 0.0
    %4811 = vmatprep.subr.mxu0 0.0
    %4812 = vmatpush1.xpose.msra.mxu0 0.0
    %4813 = vmatprep.subr.mxu0 0.0
    %4814 = vmatpush1.xpose.msra.mxu0 0.0
    %4815 = vmatprep.subr.mxu0 0.0
    %4816 = vmatpush1.xpose.msra.mxu0 0.0
    %4817 = vmatprep.subr.mxu0 0.0
    %4818 = vmatpush1.xpose.msra.mxu0 0.0
    %4819 = vmatprep.subr.mxu0 0.0
    %4820 = vmatpush1.xpose.msra.mxu0 0.0
    %4821 = vmatprep.subr.mxu0 0.0
    %4822 = vmatpush1.xpose.msra.mxu0 0.0
    %4823 = vmatprep.subr.mxu0 0.0
    %4824 = vmatpush1.xpose.msra.mxu0 0.0
    %4825 = vmatprep.subr.mxu0 0.0
    %4826 = vmatpush1.xpose.msra.mxu0 0.0
    %4827 = vmatprep.subr.mxu0 0.0
    %4828 = vmatpush1.xpose.msra.mxu0 0.0
    %4829 = vmatprep.subr.mxu0 0.0
    %4830 = vmatpush1.xpose.msra.mxu0 0.0
    %4831 = vmatprep.subr.mxu0 0.0
    %4832 = vmatpush1.xpose.msra.mxu0 0.0
    %4833 = vmatprep.subr.mxu0 0.0
    %4834 = vmatpush1.xpose.msra.mxu0 0.0
    %4835 = vmatprep.subr.mxu0 0.0
    %4836 = vmatpush1.xpose.msra.mxu0 0.0
    %4837 = vmatprep.subr.mxu0 0.0
    %4838 = vmatpush1.xpose.msra.mxu0 0.0
    %4839 = vmatprep.subr.mxu0 0.0
    %4840 = vmatpush1.xpose.msra.mxu0 0.0
    %4841 = vmatprep.subr.mxu0 0.0
    %4842 = vmatpush1.xpose.msra.mxu0 0.0
    %4843 = vmatprep.subr.mxu0 0.0
    %4844 = vmatpush1.xpose.msra.mxu0 0.0
    %4845 = vmatprep.subr.mxu0 0.0
    %4846 = vmatpush1.xpose.msra.mxu0 0.0
    %4847 = vmatprep.mubr.f32.mxu0 %v3789
    %4848 = vmatmul.mubr.f32.gmra.mrb[0].mxu0 %v3787
    %v4849 = vpop.f32.mrb[0].mxu0
    %v4850 = vadd.f32 %v4780, %v4849
    %v4851 = vpop.f32.mrb[0].mxu0
    %4852 = vdwg.mxu0
    %4853 = vmatprep.subr.mxu0 %v3830
    %4854 = vmatpush1.xpose.msra.mxu0 %v3828
    %4855 = vmatprep.subr.mxu0 0.0
    %4856 = vmatpush1.xpose.msra.mxu0 0.0
    %4857 = vmatprep.subr.mxu0 0.0
    %4858 = vmatpush1.xpose.msra.mxu0 0.0
    %4859 = vmatprep.subr.mxu0 0.0
    %4860 = vmatpush1.xpose.msra.mxu0 0.0
    %4861 = vmatprep.subr.mxu0 0.0
    %4862 = vmatpush1.xpose.msra.mxu0 0.0
    %4863 = vmatprep.subr.mxu0 0.0
    %4864 = vmatpush1.xpose.msra.mxu0 0.0
    %4865 = vmatprep.subr.mxu0 0.0
    %4866 = vmatpush1.xpose.msra.mxu0 0.0
    %4867 = vmatprep.subr.mxu0 0.0
    %4868 = vmatpush1.xpose.msra.mxu0 0.0
    %4869 = vmatprep.subr.mxu0 0.0
    %4870 = vmatpush1.xpose.msra.mxu0 0.0
    %4871 = vmatprep.subr.mxu0 0.0
    %4872 = vmatpush1.xpose.msra.mxu0 0.0
    %4873 = vmatprep.subr.mxu0 0.0
    %4874 = vmatpush1.xpose.msra.mxu0 0.0
    %4875 = vmatprep.subr.mxu0 0.0
    %4876 = vmatpush1.xpose.msra.mxu0 0.0
    %4877 = vmatprep.subr.mxu0 0.0
    %4878 = vmatpush1.xpose.msra.mxu0 0.0
    %4879 = vmatprep.subr.mxu0 0.0
    %4880 = vmatpush1.xpose.msra.mxu0 0.0
    %4881 = vmatprep.subr.mxu0 0.0
    %4882 = vmatpush1.xpose.msra.mxu0 0.0
    %4883 = vmatprep.subr.mxu0 0.0
    %4884 = vmatpush1.xpose.msra.mxu0 0.0
    %4885 = vmatprep.subr.mxu0 0.0
    %4886 = vmatpush1.xpose.msra.mxu0 0.0
    %4887 = vmatprep.subr.mxu0 0.0
    %4888 = vmatpush1.xpose.msra.mxu0 0.0
    %4889 = vmatprep.subr.mxu0 0.0
    %4890 = vmatpush1.xpose.msra.mxu0 0.0
    %4891 = vmatprep.subr.mxu0 0.0
    %4892 = vmatpush1.xpose.msra.mxu0 0.0
    %4893 = vmatprep.subr.mxu0 0.0
    %4894 = vmatpush1.xpose.msra.mxu0 0.0
    %4895 = vmatprep.subr.mxu0 0.0
    %4896 = vmatpush1.xpose.msra.mxu0 0.0
    %4897 = vmatprep.subr.mxu0 0.0
    %4898 = vmatpush1.xpose.msra.mxu0 0.0
    %4899 = vmatprep.subr.mxu0 0.0
    %4900 = vmatpush1.xpose.msra.mxu0 0.0
    %4901 = vmatprep.subr.mxu0 0.0
    %4902 = vmatpush1.xpose.msra.mxu0 0.0
    %4903 = vmatprep.subr.mxu0 0.0
    %4904 = vmatpush1.xpose.msra.mxu0 0.0
    %4905 = vmatprep.subr.mxu0 0.0
    %4906 = vmatpush1.xpose.msra.mxu0 0.0
    %4907 = vmatprep.subr.mxu0 0.0
    %4908 = vmatpush1.xpose.msra.mxu0 0.0
    %4909 = vmatprep.subr.mxu0 0.0
    %4910 = vmatpush1.xpose.msra.mxu0 0.0
    %4911 = vmatprep.subr.mxu0 0.0
    %4912 = vmatpush1.xpose.msra.mxu0 0.0
    %4913 = vmatprep.subr.mxu0 0.0
    %4914 = vmatpush1.xpose.msra.mxu0 0.0
    %4915 = vmatprep.subr.mxu0 0.0
    %4916 = vmatpush1.xpose.msra.mxu0 0.0
    %4917 = vmatprep.mubr.f32.mxu0 %v3830
    %4918 = vmatmul.mubr.f32.gmra.mrb[0].mxu0 %v3828
    %v4919 = vpop.f32.mrb[0].mxu0
    %v4920 = vadd.f32 %v4850, %v4919
    %v4921 = vpop.f32.mrb[0].mxu0
    %4922 = vdwg.mxu0
    %v4923 = vmul.f32 %v3705, %v3705
    %v4924 = vmul.f32 %v3707, %v3707
    %v4925 = vmul.f32 %v3746, %v3746
    %v4926 = vmul.f32 %v3748, %v3748
    %v4927 = vmul.f32 %v3787, %v3787
    %v4928 = vmul.f32 %v3789, %v3789
    %v4929 = vmul.f32 %v3828, %v3828
    %v4930 = vmul.f32 %v3830, %v3830
    %vm4931 = vcmask 1043456
    %v4932 = vsel %vm4931, %v4923, 0.0
    %v4933 = vsel %vm4931, %v4924, 0.0
    %v4934 = vadd.f32 %v4932, %v4933
    %v4935 = vsel %vm4931, %v4925, 0.0
    %v4936 = vadd.f32 %v4934, %v4935
    %v4937 = vsel %vm4931, %v4926, 0.0
    %v4938 = vadd.f32 %v4936, %v4937
    %v4939 = vsel %vm4931, %v4927, 0.0
    %v4940 = vadd.f32 %v4938, %v4939
    %v4941 = vsel %vm4931, %v4928, 0.0
    %v4942 = vadd.f32 %v4940, %v4941
    %v4943 = vsel %vm4931, %v4929, 0.0
    %v4944 = vadd.f32 %v4942, %v4943
    %v4945 = vsel %vm4931, %v4930, 0.0
    %v4946 = vadd.f32 %v4944, %v4945
    %4947 = vadd.xlane.f32.xlu0 %v4946
    %v4948 = vpop.xlane.xlu0 %4947
    %4949 = vmatprep.subr.mxu0 %v4924
    %4950 = vmatpush1.xpose.msra.mxu0 %v4923
    %4951 = vmatprep.subr.mxu0 0.0
    %4952 = vmatpush1.xpose.msra.mxu0 0.0
    %4953 = vmatprep.subr.mxu0 0.0
    %4954 = vmatpush1.xpose.msra.mxu0 0.0
    %4955 = vmatprep.subr.mxu0 0.0
    %4956 = vmatpush1.xpose.msra.mxu0 0.0
    %4957 = vmatprep.subr.mxu0 0.0
    %4958 = vmatpush1.xpose.msra.mxu0 0.0
    %4959 = vmatprep.subr.mxu0 0.0
    %4960 = vmatpush1.xpose.msra.mxu0 0.0
    %4961 = vmatprep.subr.mxu0 0.0
    %4962 = vmatpush1.xpose.msra.mxu0 0.0
    %4963 = vmatprep.subr.mxu0 0.0
    %4964 = vmatpush1.xpose.msra.mxu0 0.0
    %4965 = vmatprep.subr.mxu0 0.0
    %4966 = vmatpush1.xpose.msra.mxu0 0.0
    %4967 = vmatprep.subr.mxu0 0.0
    %4968 = vmatpush1.xpose.msra.mxu0 0.0
    %4969 = vmatprep.subr.mxu0 0.0
    %4970 = vmatpush1.xpose.msra.mxu0 0.0
    %4971 = vmatprep.subr.mxu0 0.0
    %4972 = vmatpush1.xpose.msra.mxu0 0.0
    %4973 = vmatprep.subr.mxu0 0.0
    %4974 = vmatpush1.xpose.msra.mxu0 0.0
    %4975 = vmatprep.subr.mxu0 0.0
    %4976 = vmatpush1.xpose.msra.mxu0 0.0
    %4977 = vmatprep.subr.mxu0 0.0
    %4978 = vmatpush1.xpose.msra.mxu0 0.0
    %4979 = vmatprep.subr.mxu0 0.0
    %4980 = vmatpush1.xpose.msra.mxu0 0.0
    %4981 = vmatprep.subr.mxu0 0.0
    %4982 = vmatpush1.xpose.msra.mxu0 0.0
    %4983 = vmatprep.subr.mxu0 0.0
    %4984 = vmatpush1.xpose.msra.mxu0 0.0
    %4985 = vmatprep.subr.mxu0 0.0
    %4986 = vmatpush1.xpose.msra.mxu0 0.0
    %4987 = vmatprep.subr.mxu0 0.0
    %4988 = vmatpush1.xpose.msra.mxu0 0.0
    %4989 = vmatprep.subr.mxu0 0.0
    %4990 = vmatpush1.xpose.msra.mxu0 0.0
    %4991 = vmatprep.subr.mxu0 0.0
    %4992 = vmatpush1.xpose.msra.mxu0 0.0
    %4993 = vmatprep.subr.mxu0 0.0
    %4994 = vmatpush1.xpose.msra.mxu0 0.0
    %4995 = vmatprep.subr.mxu0 0.0
    %4996 = vmatpush1.xpose.msra.mxu0 0.0
    %4997 = vmatprep.subr.mxu0 0.0
    %4998 = vmatpush1.xpose.msra.mxu0 0.0
    %4999 = vmatprep.subr.mxu0 0.0
    %5000 = vmatpush1.xpose.msra.mxu0 0.0
    %5001 = vmatprep.subr.mxu0 0.0
    %5002 = vmatpush1.xpose.msra.mxu0 0.0
    %5003 = vmatprep.subr.mxu0 0.0
    %5004 = vmatpush1.xpose.msra.mxu0 0.0
    %5005 = vmatprep.subr.mxu0 0.0
    %5006 = vmatpush1.xpose.msra.mxu0 0.0
    %5007 = vmatprep.subr.mxu0 0.0
    %5008 = vmatpush1.xpose.msra.mxu0 0.0
    %5009 = vmatprep.subr.mxu0 0.0
    %5010 = vmatpush1.xpose.msra.mxu0 0.0
    %5011 = vmatprep.subr.mxu0 0.0
    %5012 = vmatpush1.xpose.msra.mxu0 0.0
    %5013 = vmatprep.mubr.f32.mxu0 1.0
    %5014 = vmatmul.mubr.f32.gmra.mrb[0].mxu0 1.0
    %v5015 = vpop.f32.mrb[0].mxu0
    %v5016 = vadd.f32 0.0, %v5015
    %v5017 = vpop.f32.mrb[0].mxu0
    %5018 = vdwg.mxu0
    %5019 = vmatprep.subr.mxu0 %v4926
    %5020 = vmatpush1.xpose.msra.mxu0 %v4925
    %5021 = vmatprep.subr.mxu0 0.0
    %5022 = vmatpush1.xpose.msra.mxu0 0.0
    %5023 = vmatprep.subr.mxu0 0.0
    %5024 = vmatpush1.xpose.msra.mxu0 0.0
    %5025 = vmatprep.subr.mxu0 0.0
    %5026 = vmatpush1.xpose.msra.mxu0 0.0
    %5027 = vmatprep.subr.mxu0 0.0
    %5028 = vmatpush1.xpose.msra.mxu0 0.0
    %5029 = vmatprep.subr.mxu0 0.0
    %5030 = vmatpush1.xpose.msra.mxu0 0.0
    %5031 = vmatprep.subr.mxu0 0.0
    %5032 = vmatpush1.xpose.msra.mxu0 0.0
    %5033 = vmatprep.subr.mxu0 0.0
    %5034 = vmatpush1.xpose.msra.mxu0 0.0
    %5035 = vmatprep.subr.mxu0 0.0
    %5036 = vmatpush1.xpose.msra.mxu0 0.0
    %5037 = vmatprep.subr.mxu0 0.0
    %5038 = vmatpush1.xpose.msra.mxu0 0.0
    %5039 = vmatprep.subr.mxu0 0.0
    %5040 = vmatpush1.xpose.msra.mxu0 0.0
    %5041 = vmatprep.subr.mxu0 0.0
    %5042 = vmatpush1.xpose.msra.mxu0 0.0
    %5043 = vmatprep.subr.mxu0 0.0
    %5044 = vmatpush1.xpose.msra.mxu0 0.0
    %5045 = vmatprep.subr.mxu0 0.0
    %5046 = vmatpush1.xpose.msra.mxu0 0.0
    %5047 = vmatprep.subr.mxu0 0.0
    %5048 = vmatpush1.xpose.msra.mxu0 0.0
    %5049 = vmatprep.subr.mxu0 0.0
    %5050 = vmatpush1.xpose.msra.mxu0 0.0
    %5051 = vmatprep.subr.mxu0 0.0
    %5052 = vmatpush1.xpose.msra.mxu0 0.0
    %5053 = vmatprep.subr.mxu0 0.0
    %5054 = vmatpush1.xpose.msra.mxu0 0.0
    %5055 = vmatprep.subr.mxu0 0.0
    %5056 = vmatpush1.xpose.msra.mxu0 0.0
    %5057 = vmatprep.subr.mxu0 0.0
    %5058 = vmatpush1.xpose.msra.mxu0 0.0
    %5059 = vmatprep.subr.mxu0 0.0
    %5060 = vmatpush1.xpose.msra.mxu0 0.0
    %5061 = vmatprep.subr.mxu0 0.0
    %5062 = vmatpush1.xpose.msra.mxu0 0.0
    %5063 = vmatprep.subr.mxu0 0.0
    %5064 = vmatpush1.xpose.msra.mxu0 0.0
    %5065 = vmatprep.subr.mxu0 0.0
    %5066 = vmatpush1.xpose.msra.mxu0 0.0
    %5067 = vmatprep.subr.mxu0 0.0
    %5068 = vmatpush1.xpose.msra.mxu0 0.0
    %5069 = vmatprep.subr.mxu0 0.0
    %5070 = vmatpush1.xpose.msra.mxu0 0.0
    %5071 = vmatprep.subr.mxu0 0.0
    %5072 = vmatpush1.xpose.msra.mxu0 0.0
    %5073 = vmatprep.subr.mxu0 0.0
    %5074 = vmatpush1.xpose.msra.mxu0 0.0
    %5075 = vmatprep.subr.mxu0 0.0
    %5076 = vmatpush1.xpose.msra.mxu0 0.0
    %5077 = vmatprep.subr.mxu0 0.0
    %5078 = vmatpush1.xpose.msra.mxu0 0.0
    %5079 = vmatprep.subr.mxu0 0.0
    %5080 = vmatpush1.xpose.msra.mxu0 0.0
    %5081 = vmatprep.subr.mxu0 0.0
    %5082 = vmatpush1.xpose.msra.mxu0 0.0
    %5083 = vmatprep.mubr.f32.mxu0 1.0
    %5084 = vmatmul.mubr.f32.gmra.mrb[0].mxu0 1.0
    %v5085 = vpop.f32.mrb[0].mxu0
    %v5086 = vadd.f32 %v5016, %v5085
    %v5087 = vpop.f32.mrb[0].mxu0
    %5088 = vdwg.mxu0
    %5089 = vmatprep.subr.mxu0 %v4928
    %5090 = vmatpush1.xpose.msra.mxu0 %v4927
    %5091 = vmatprep.subr.mxu0 0.0
    %5092 = vmatpush1.xpose.msra.mxu0 0.0
    %5093 = vmatprep.subr.mxu0 0.0
    %5094 = vmatpush1.xpose.msra.mxu0 0.0
    %5095 = vmatprep.subr.mxu0 0.0
    %5096 = vmatpush1.xpose.msra.mxu0 0.0
    %5097 = vmatprep.subr.mxu0 0.0
    %5098 = vmatpush1.xpose.msra.mxu0 0.0
    %5099 = vmatprep.subr.mxu0 0.0
    %5100 = vmatpush1.xpose.msra.mxu0 0.0
    %5101 = vmatprep.subr.mxu0 0.0
    %5102 = vmatpush1.xpose.msra.mxu0 0.0
    %5103 = vmatprep.subr.mxu0 0.0
    %5104 = vmatpush1.xpose.msra.mxu0 0.0
    %5105 = vmatprep.subr.mxu0 0.0
    %5106 = vmatpush1.xpose.msra.mxu0 0.0
    %5107 = vmatprep.subr.mxu0 0.0
    %5108 = vmatpush1.xpose.msra.mxu0 0.0
    %5109 = vmatprep.subr.mxu0 0.0
    %5110 = vmatpush1.xpose.msra.mxu0 0.0
    %5111 = vmatprep.subr.mxu0 0.0
    %5112 = vmatpush1.xpose.msra.mxu0 0.0
    %5113 = vmatprep.subr.mxu0 0.0
    %5114 = vmatpush1.xpose.msra.mxu0 0.0
    %5115 = vmatprep.subr.mxu0 0.0
    %5116 = vmatpush1.xpose.msra.mxu0 0.0
    %5117 = vmatprep.subr.mxu0 0.0
    %5118 = vmatpush1.xpose.msra.mxu0 0.0
    %5119 = vmatprep.subr.mxu0 0.0
    %5120 = vmatpush1.xpose.msra.mxu0 0.0
    %5121 = vmatprep.subr.mxu0 0.0
    %5122 = vmatpush1.xpose.msra.mxu0 0.0
    %5123 = vmatprep.subr.mxu0 0.0
    %5124 = vmatpush1.xpose.msra.mxu0 0.0
    %5125 = vmatprep.subr.mxu0 0.0
    %5126 = vmatpush1.xpose.msra.mxu0 0.0
    %5127 = vmatprep.subr.mxu0 0.0
    %5128 = vmatpush1.xpose.msra.mxu0 0.0
    %5129 = vmatprep.subr.mxu0 0.0
    %5130 = vmatpush1.xpose.msra.mxu0 0.0
    %5131 = vmatprep.subr.mxu0 0.0
    %5132 = vmatpush1.xpose.msra.mxu0 0.0
    %5133 = vmatprep.subr.mxu0 0.0
    %5134 = vmatpush1.xpose.msra.mxu0 0.0
    %5135 = vmatprep.subr.mxu0 0.0
    %5136 = vmatpush1.xpose.msra.mxu0 0.0
    %5137 = vmatprep.subr.mxu0 0.0
    %5138 = vmatpush1.xpose.msra.mxu0 0.0
    %5139 = vmatprep.subr.mxu0 0.0
    %5140 = vmatpush1.xpose.msra.mxu0 0.0
    %5141 = vmatprep.subr.mxu0 0.0
    %5142 = vmatpush1.xpose.msra.mxu0 0.0
    %5143 = vmatprep.subr.mxu0 0.0
    %5144 = vmatpush1.xpose.msra.mxu0 0.0
    %5145 = vmatprep.subr.mxu0 0.0
    %5146 = vmatpush1.xpose.msra.mxu0 0.0
    %5147 = vmatprep.subr.mxu0 0.0
    %5148 = vmatpush1.xpose.msra.mxu0 0.0
    %5149 = vmatprep.subr.mxu0 0.0
    %5150 = vmatpush1.xpose.msra.mxu0 0.0
    %5151 = vmatprep.subr.mxu0 0.0
    %5152 = vmatpush1.xpose.msra.mxu0 0.0
    %5153 = vmatprep.mubr.f32.mxu0 1.0
    %5154 = vmatmul.mubr.f32.gmra.mrb[0].mxu0 1.0
    %v5155 = vpop.f32.mrb[0].mxu0
    %v5156 = vadd.f32 %v5086, %v5155
    %v5157 = vpop.f32.mrb[0].mxu0
    %5158 = vdwg.mxu0
    %5159 = vmatprep.subr.mxu0 %v4930
    %5160 = vmatpush1.xpose.msra.mxu0 %v4929
    %5161 = vmatprep.subr.mxu0 0.0
    %5162 = vmatpush1.xpose.msra.mxu0 0.0
    %5163 = vmatprep.subr.mxu0 0.0
    %5164 = vmatpush1.xpose.msra.mxu0 0.0
    %5165 = vmatprep.subr.mxu0 0.0
    %5166 = vmatpush1.xpose.msra.mxu0 0.0
    %5167 = vmatprep.subr.mxu0 0.0
    %5168 = vmatpush1.xpose.msra.mxu0 0.0
    %5169 = vmatprep.subr.mxu0 0.0
    %5170 = vmatpush1.xpose.msra.mxu0 0.0
    %5171 = vmatprep.subr.mxu0 0.0
    %5172 = vmatpush1.xpose.msra.mxu0 0.0
    %5173 = vmatprep.subr.mxu0 0.0
    %5174 = vmatpush1.xpose.msra.mxu0 0.0
    %5175 = vmatprep.subr.mxu0 0.0
    %5176 = vmatpush1.xpose.msra.mxu0 0.0
    %5177 = vmatprep.subr.mxu0 0.0
    %5178 = vmatpush1.xpose.msra.mxu0 0.0
    %5179 = vmatprep.subr.mxu0 0.0
    %5180 = vmatpush1.xpose.msra.mxu0 0.0
    %5181 = vmatprep.subr.mxu0 0.0
    %5182 = vmatpush1.xpose.msra.mxu0 0.0
    %5183 = vmatprep.subr.mxu0 0.0
    %5184 = vmatpush1.xpose.msra.mxu0 0.0
    %5185 = vmatprep.subr.mxu0 0.0
    %5186 = vmatpush1.xpose.msra.mxu0 0.0
    %5187 = vmatprep.subr.mxu0 0.0
    %5188 = vmatpush1.xpose.msra.mxu0 0.0
    %5189 = vmatprep.subr.mxu0 0.0
    %5190 = vmatpush1.xpose.msra.mxu0 0.0
    %5191 = vmatprep.subr.mxu0 0.0
    %5192 = vmatpush1.xpose.msra.mxu0 0.0
    %5193 = vmatprep.subr.mxu0 0.0
    %5194 = vmatpush1.xpose.msra.mxu0 0.0
    %5195 = vmatprep.subr.mxu0 0.0
    %5196 = vmatpush1.xpose.msra.mxu0 0.0
    %5197 = vmatprep.subr.mxu0 0.0
    %5198 = vmatpush1.xpose.msra.mxu0 0.0
    %5199 = vmatprep.subr.mxu0 0.0
    %5200 = vmatpush1.xpose.msra.mxu0 0.0
    %5201 = vmatprep.subr.mxu0 0.0
    %5202 = vmatpush1.xpose.msra.mxu0 0.0
    %5203 = vmatprep.subr.mxu0 0.0
    %5204 = vmatpush1.xpose.msra.mxu0 0.0
    %5205 = vmatprep.subr.mxu0 0.0
    %5206 = vmatpush1.xpose.msra.mxu0 0.0
    %5207 = vmatprep.subr.mxu0 0.0
    %5208 = vmatpush1.xpose.msra.mxu0 0.0
    %5209 = vmatprep.subr.mxu0 0.0
    %5210 = vmatpush1.xpose.msra.mxu0 0.0
    %5211 = vmatprep.subr.mxu0 0.0
    %5212 = vmatpush1.xpose.msra.mxu0 0.0
    %5213 = vmatprep.subr.mxu0 0.0
    %5214 = vmatpush1.xpose.msra.mxu0 0.0
    %5215 = vmatprep.subr.mxu0 0.0
    %5216 = vmatpush1.xpose.msra.mxu0 0.0
    %5217 = vmatprep.subr.mxu0 0.0
    %5218 = vmatpush1.xpose.msra.mxu0 0.0
    %5219 = vmatprep.subr.mxu0 0.0
    %5220 = vmatpush1.xpose.msra.mxu0 0.0
    %5221 = vmatprep.subr.mxu0 0.0
    %5222 = vmatpush1.xpose.msra.mxu0 0.0
    %5223 = vmatprep.mubr.f32.mxu0 1.0
    %5224 = vmatmul.mubr.f32.gmra.mrb[0].mxu0 1.0
    %v5225 = vpop.f32.mrb[0].mxu0
    %v5226 = vadd.f32 %v5156, %v5225
    %v5227 = vpop.f32.mrb[0].mxu0
    %5228 = vdwg.mxu0
    %v5229 = vlaneseq
    %v5230 = vshrl.u32 %v5229, 7
    %v5231 = vsub.s32 0, %v5230
    %v5232 = vrot.slane %v5226, %v5231
    %v5233 = vadd.f32 %v4948, %v5232
    %v5234 = vmul.f32 %v4920, 2.0
    %v5235 = vsub.f32 %v5233, %v5234
    %v5236 = vmax.f32 %v5235, 0.0
    %vm5237 = vcmask 27648
    %v5238 = vsel %vm5237, %v5236, 0.0
    %5239 = vadd.xlane.f32.xlu0 %v5238
    %v5240 = vpop.xlane.xlu0 %5239
    %v5241 = vrot.slane %v5240, 4
    %v5242 = vadd.f32 %v5240, %v5241
    %v5243 = vrot.slane %v5242, 2
    %v5244 = vadd.f32 %v5242, %v5243
    %v5245 = vrot.slane %v5244, 1
    %v5246 = vadd.f32 %v5244, %v5245
    %s5247 = vtos %v5246
    %v5248 = vstv %s5247
    %v5249 = vmul.f32 %v5248, 0.083333336
    %v5250 = vmax.f32 %v5249, 1e-12
    %v5251 = vmul.f32 %v5250, 0.25
    %v5252 = vmul.f32 %v5251, 16.0
    %v5253 = vrcp.pop %v5252
    %v5254 = vsub.f32 0.0, %v5236
    %v5255 = vmul.f32 %v5254, %v5253
    %v5256 = vmul.f32 %v5255, 1.442695
    %v5257 = vpow.pop %v5256
    %v5258 = vmul.f32 %v5257, %v5257
    %v5259 = vadd.f32 %v5257, %v5258
    %v5260 = vmul.f32 %v5258, %v5258
    %v5261 = vadd.f32 %v5259, %v5260
    %v5262 = vmul.f32 %v5260, %v5260
    %v5263 = vadd.f32 %v5261, %v5262
    %v5264 = vmul.f32 %v5262, %v5262
    %v5265 = vadd.f32 %v5263, %v5264
    %v5266 = vmul.f32 %v5265, %v4642
    %v5267 = vsel %vm5237, %v5266, 0.0
    %5268 = vadd.xlane.f32.xlu0 %v5267
    %v5269 = vpop.xlane.xlu0 %5268
    %v5270 = vmul.f32 %v5269, %v4638
    %vm5271 = vcmask 3072
    %v5272 = vsel %vm5271, %v5270, 0.0
    %5273 = vadd.xlane.f32.xlu0 %v5272
    %v5274 = vpop.xlane.xlu0 %5273
    %v5275 = vrot.slane %v5274, 4
    %v5276 = vadd.f32 %v5274, %v5275
    %v5277 = vrot.slane %v5276, 2
    %v5278 = vadd.f32 %v5276, %v5277
    %v5279 = vrot.slane %v5278, 1
    %v5280 = vadd.f32 %v5278, %v5279
    %s5281 = vtos %v5280
    %v5282 = vstv %s5281
    %v5283 = vmul.f32 %v5282, 0.25
    %5284 = vmatprep.subr.mxu0 0.0
    %5285 = vmatpush1.xpose.msra.mxu0 %v4521
    %5286 = vmatprep.subr.mxu0 0.0
    %5287 = vmatpush1.xpose.msra.mxu0 0.0
    %5288 = vmatprep.subr.mxu0 0.0
    %5289 = vmatpush1.xpose.msra.mxu0 0.0
    %5290 = vmatprep.subr.mxu0 0.0
    %5291 = vmatpush1.xpose.msra.mxu0 0.0
    %5292 = vmatprep.subr.mxu0 0.0
    %5293 = vmatpush1.xpose.msra.mxu0 0.0
    %5294 = vmatprep.subr.mxu0 0.0
    %5295 = vmatpush1.xpose.msra.mxu0 0.0
    %5296 = vmatprep.subr.mxu0 0.0
    %5297 = vmatpush1.xpose.msra.mxu0 0.0
    %5298 = vmatprep.subr.mxu0 0.0
    %5299 = vmatpush1.xpose.msra.mxu0 0.0
    %5300 = vmatprep.subr.mxu0 0.0
    %5301 = vmatpush1.xpose.msra.mxu0 0.0
    %5302 = vmatprep.subr.mxu0 0.0
    %5303 = vmatpush1.xpose.msra.mxu0 0.0
    %5304 = vmatprep.subr.mxu0 0.0
    %5305 = vmatpush1.xpose.msra.mxu0 0.0
    %5306 = vmatprep.subr.mxu0 0.0
    %5307 = vmatpush1.xpose.msra.mxu0 0.0
    %5308 = vmatprep.subr.mxu0 0.0
    %5309 = vmatpush1.xpose.msra.mxu0 0.0
    %5310 = vmatprep.subr.mxu0 0.0
    %5311 = vmatpush1.xpose.msra.mxu0 0.0
    %5312 = vmatprep.subr.mxu0 0.0
    %5313 = vmatpush1.xpose.msra.mxu0 0.0
    %5314 = vmatprep.subr.mxu0 0.0
    %5315 = vmatpush1.xpose.msra.mxu0 0.0
    %5316 = vmatprep.subr.mxu0 0.0
    %5317 = vmatpush1.xpose.msra.mxu0 0.0
    %5318 = vmatprep.subr.mxu0 0.0
    %5319 = vmatpush1.xpose.msra.mxu0 0.0
    %5320 = vmatprep.subr.mxu0 0.0
    %5321 = vmatpush1.xpose.msra.mxu0 0.0
    %5322 = vmatprep.subr.mxu0 0.0
    %5323 = vmatpush1.xpose.msra.mxu0 0.0
    %5324 = vmatprep.subr.mxu0 0.0
    %5325 = vmatpush1.xpose.msra.mxu0 0.0
    %5326 = vmatprep.subr.mxu0 0.0
    %5327 = vmatpush1.xpose.msra.mxu0 0.0
    %5328 = vmatprep.subr.mxu0 0.0
    %5329 = vmatpush1.xpose.msra.mxu0 0.0
    %5330 = vmatprep.subr.mxu0 0.0
    %5331 = vmatpush1.xpose.msra.mxu0 0.0
    %5332 = vmatprep.subr.mxu0 0.0
    %5333 = vmatpush1.xpose.msra.mxu0 0.0
    %5334 = vmatprep.subr.mxu0 0.0
    %5335 = vmatpush1.xpose.msra.mxu0 0.0
    %5336 = vmatprep.subr.mxu0 0.0
    %5337 = vmatpush1.xpose.msra.mxu0 0.0
    %5338 = vmatprep.subr.mxu0 0.0
    %5339 = vmatpush1.xpose.msra.mxu0 0.0
    %5340 = vmatprep.subr.mxu0 0.0
    %5341 = vmatpush1.xpose.msra.mxu0 0.0
    %5342 = vmatprep.subr.mxu0 0.0
    %5343 = vmatpush1.xpose.msra.mxu0 0.0
    %5344 = vmatprep.subr.mxu0 0.0
    %5345 = vmatpush1.xpose.msra.mxu0 0.0
    %5346 = vmatprep.subr.mxu0 0.0
    %5347 = vmatpush1.xpose.msra.mxu0 0.0
    %5348 = vmatprep.mubr.f32.mxu0 0.0
    %5349 = vmatmul.mubr.f32.gmra.mrb[0].mxu0 %v4521
    %v5350 = vpop.f32.mrb[0].mxu0
    %v5351 = vadd.f32 0.0, %v5350
    %v5352 = vpop.f32.mrb[0].mxu0
    %5353 = vdwg.mxu0
    %v5354 = vmul.f32 %v4521, %v4521
    %v5355 = vsel %vm4931, %v5354, 0.0
    %5356 = vadd.xlane.f32.xlu0 %v5355
    %v5357 = vpop.xlane.xlu0 %5356
    %5358 = vmatprep.subr.mxu0 0.0
    %5359 = vmatpush1.xpose.msra.mxu0 %v5354
    %5360 = vmatprep.subr.mxu0 0.0
    %5361 = vmatpush1.xpose.msra.mxu0 0.0
    %5362 = vmatprep.subr.mxu0 0.0
    %5363 = vmatpush1.xpose.msra.mxu0 0.0
    %5364 = vmatprep.subr.mxu0 0.0
    %5365 = vmatpush1.xpose.msra.mxu0 0.0
    %5366 = vmatprep.subr.mxu0 0.0
    %5367 = vmatpush1.xpose.msra.mxu0 0.0
    %5368 = vmatprep.subr.mxu0 0.0
    %5369 = vmatpush1.xpose.msra.mxu0 0.0
    %5370 = vmatprep.subr.mxu0 0.0
    %5371 = vmatpush1.xpose.msra.mxu0 0.0
    %5372 = vmatprep.subr.mxu0 0.0
    %5373 = vmatpush1.xpose.msra.mxu0 0.0
    %5374 = vmatprep.subr.mxu0 0.0
    %5375 = vmatpush1.xpose.msra.mxu0 0.0
    %5376 = vmatprep.subr.mxu0 0.0
    %5377 = vmatpush1.xpose.msra.mxu0 0.0
    %5378 = vmatprep.subr.mxu0 0.0
    %5379 = vmatpush1.xpose.msra.mxu0 0.0
    %5380 = vmatprep.subr.mxu0 0.0
    %5381 = vmatpush1.xpose.msra.mxu0 0.0
    %5382 = vmatprep.subr.mxu0 0.0
    %5383 = vmatpush1.xpose.msra.mxu0 0.0
    %5384 = vmatprep.subr.mxu0 0.0
    %5385 = vmatpush1.xpose.msra.mxu0 0.0
    %5386 = vmatprep.subr.mxu0 0.0
    %5387 = vmatpush1.xpose.msra.mxu0 0.0
    %5388 = vmatprep.subr.mxu0 0.0
    %5389 = vmatpush1.xpose.msra.mxu0 0.0
    %5390 = vmatprep.subr.mxu0 0.0
    %5391 = vmatpush1.xpose.msra.mxu0 0.0
    %5392 = vmatprep.subr.mxu0 0.0
    %5393 = vmatpush1.xpose.msra.mxu0 0.0
    %5394 = vmatprep.subr.mxu0 0.0
    %5395 = vmatpush1.xpose.msra.mxu0 0.0
    %5396 = vmatprep.subr.mxu0 0.0
    %5397 = vmatpush1.xpose.msra.mxu0 0.0
    %5398 = vmatprep.subr.mxu0 0.0
    %5399 = vmatpush1.xpose.msra.mxu0 0.0
    %5400 = vmatprep.subr.mxu0 0.0
    %5401 = vmatpush1.xpose.msra.mxu0 0.0
    %5402 = vmatprep.subr.mxu0 0.0
    %5403 = vmatpush1.xpose.msra.mxu0 0.0
    %5404 = vmatprep.subr.mxu0 0.0
    %5405 = vmatpush1.xpose.msra.mxu0 0.0
    %5406 = vmatprep.subr.mxu0 0.0
    %5407 = vmatpush1.xpose.msra.mxu0 0.0
    %5408 = vmatprep.subr.mxu0 0.0
    %5409 = vmatpush1.xpose.msra.mxu0 0.0
    %5410 = vmatprep.subr.mxu0 0.0
    %5411 = vmatpush1.xpose.msra.mxu0 0.0
    %5412 = vmatprep.subr.mxu0 0.0
    %5413 = vmatpush1.xpose.msra.mxu0 0.0
    %5414 = vmatprep.subr.mxu0 0.0
    %5415 = vmatpush1.xpose.msra.mxu0 0.0
    %5416 = vmatprep.subr.mxu0 0.0
    %5417 = vmatpush1.xpose.msra.mxu0 0.0
    %5418 = vmatprep.subr.mxu0 0.0
    %5419 = vmatpush1.xpose.msra.mxu0 0.0
    %5420 = vmatprep.subr.mxu0 0.0
    %5421 = vmatpush1.xpose.msra.mxu0 0.0
    %5422 = vmatprep.mubr.f32.mxu0 0.0
    %5423 = vmatmul.mubr.f32.gmra.mrb[0].mxu0 1.0
    %v5424 = vpop.f32.mrb[0].mxu0
    %v5425 = vadd.f32 0.0, %v5424
    %v5426 = vpop.f32.mrb[0].mxu0
    %5427 = vdwg.mxu0
    %v5428 = vlaneseq
    %v5429 = vshrl.u32 %v5428, 7
    %v5430 = vsub.s32 0, %v5429
    %v5431 = vrot.slane %v5425, %v5430
    %v5432 = vadd.f32 %v5357, %v5431
    %v5433 = vmul.f32 %v5351, 2.0
    %v5434 = vsub.f32 %v5432, %v5433
    %v5435 = vmax.f32 %v5434, 0.0
    %v5436 = vsel %vm5237, %v5435, 0.0
    %5437 = vadd.xlane.f32.xlu0 %v5436
    %v5438 = vpop.xlane.xlu0 %5437
    %v5439 = vrot.slane %v5438, 4
    %v5440 = vadd.f32 %v5438, %v5439
    %v5441 = vrot.slane %v5440, 2
    %v5442 = vadd.f32 %v5440, %v5441
    %v5443 = vrot.slane %v5442, 1
    %v5444 = vadd.f32 %v5442, %v5443
    %s5445 = vtos %v5444
    %v5446 = vstv %s5445
    %v5447 = vmul.f32 %v5446, 0.083333336
    %v5448 = vmax.f32 %v5447, 1e-12
    %v5449 = vmul.f32 %v5448, 0.25
    %v5450 = vmul.f32 %v5449, 16.0
    %v5451 = vrcp.pop %v5450
    %v5452 = vsub.f32 0.0, %v5435
    %v5453 = vmul.f32 %v5452, %v5451
    %v5454 = vmul.f32 %v5453, 1.442695
    %v5455 = vpow.pop %v5454
    %v5456 = vmul.f32 %v5455, %v5455
    %v5457 = vadd.f32 %v5455, %v5456
    %v5458 = vmul.f32 %v5456, %v5456
    %v5459 = vadd.f32 %v5457, %v5458
    %v5460 = vmul.f32 %v5458, %v5458
    %v5461 = vadd.f32 %v5459, %v5460
    %v5462 = vmul.f32 %v5460, %v5460
    %v5463 = vadd.f32 %v5461, %v5462
    %v5464 = vmul.f32 %v5463, %v4642
    %v5465 = vsel %vm5237, %v5464, 0.0
    %5466 = vadd.xlane.f32.xlu0 %v5465
    %v5467 = vpop.xlane.xlu0 %5466
    %v5468 = vmul.f32 %v5467, %v4638
    %v5469 = vsel %vm5271, %v5468, 0.0
    %5470 = vadd.xlane.f32.xlu0 %v5469
    %v5471 = vpop.xlane.xlu0 %5470
    %v5472 = vrot.slane %v5471, 4
    %v5473 = vadd.f32 %v5471, %v5472
    %v5474 = vrot.slane %v5473, 2
    %v5475 = vadd.f32 %v5473, %v5474
    %v5476 = vrot.slane %v5475, 1
    %v5477 = vadd.f32 %v5475, %v5476
    %s5478 = vtos %v5477
    %v5479 = vstv %s5478
    %v5480 = vmul.f32 %v5479, 0.25
    %v5481 = vadd.f32 %v5283, %v5480
    %5482 = vmatprep.subr.mxu0 0.0
    %5483 = vmatpush1.xpose.msra.mxu0 %v4629
    %5484 = vmatprep.subr.mxu0 0.0
    %5485 = vmatpush1.xpose.msra.mxu0 0.0
    %5486 = vmatprep.subr.mxu0 0.0
    %5487 = vmatpush1.xpose.msra.mxu0 0.0
    %5488 = vmatprep.subr.mxu0 0.0
    %5489 = vmatpush1.xpose.msra.mxu0 0.0
    %5490 = vmatprep.subr.mxu0 0.0
    %5491 = vmatpush1.xpose.msra.mxu0 0.0
    %5492 = vmatprep.subr.mxu0 0.0
    %5493 = vmatpush1.xpose.msra.mxu0 0.0
    %5494 = vmatprep.subr.mxu0 0.0
    %5495 = vmatpush1.xpose.msra.mxu0 0.0
    %5496 = vmatprep.subr.mxu0 0.0
    %5497 = vmatpush1.xpose.msra.mxu0 0.0
    %5498 = vmatprep.subr.mxu0 0.0
    %5499 = vmatpush1.xpose.msra.mxu0 0.0
    %5500 = vmatprep.subr.mxu0 0.0
    %5501 = vmatpush1.xpose.msra.mxu0 0.0
    %5502 = vmatprep.subr.mxu0 0.0
    %5503 = vmatpush1.xpose.msra.mxu0 0.0
    %5504 = vmatprep.subr.mxu0 0.0
    %5505 = vmatpush1.xpose.msra.mxu0 0.0
    %5506 = vmatprep.subr.mxu0 0.0
    %5507 = vmatpush1.xpose.msra.mxu0 0.0
    %5508 = vmatprep.subr.mxu0 0.0
    %5509 = vmatpush1.xpose.msra.mxu0 0.0
    %5510 = vmatprep.subr.mxu0 0.0
    %5511 = vmatpush1.xpose.msra.mxu0 0.0
    %5512 = vmatprep.subr.mxu0 0.0
    %5513 = vmatpush1.xpose.msra.mxu0 0.0
    %5514 = vmatprep.subr.mxu0 0.0
    %5515 = vmatpush1.xpose.msra.mxu0 0.0
    %5516 = vmatprep.subr.mxu0 0.0
    %5517 = vmatpush1.xpose.msra.mxu0 0.0
    %5518 = vmatprep.subr.mxu0 0.0
    %5519 = vmatpush1.xpose.msra.mxu0 0.0
    %5520 = vmatprep.subr.mxu0 0.0
    %5521 = vmatpush1.xpose.msra.mxu0 0.0
    %5522 = vmatprep.subr.mxu0 0.0
    %5523 = vmatpush1.xpose.msra.mxu0 0.0
    %5524 = vmatprep.subr.mxu0 0.0
    %5525 = vmatpush1.xpose.msra.mxu0 0.0
    %5526 = vmatprep.subr.mxu0 0.0
    %5527 = vmatpush1.xpose.msra.mxu0 0.0
    %5528 = vmatprep.subr.mxu0 0.0
    %5529 = vmatpush1.xpose.msra.mxu0 0.0
    %5530 = vmatprep.subr.mxu0 0.0
    %5531 = vmatpush1.xpose.msra.mxu0 0.0
    %5532 = vmatprep.subr.mxu0 0.0
    %5533 = vmatpush1.xpose.msra.mxu0 0.0
    %5534 = vmatprep.subr.mxu0 0.0
    %5535 = vmatpush1.xpose.msra.mxu0 0.0
    %5536 = vmatprep.subr.mxu0 0.0
    %5537 = vmatpush1.xpose.msra.mxu0 0.0
    %5538 = vmatprep.subr.mxu0 0.0
    %5539 = vmatpush1.xpose.msra.mxu0 0.0
    %5540 = vmatprep.subr.mxu0 0.0
    %5541 = vmatpush1.xpose.msra.mxu0 0.0
    %5542 = vmatprep.subr.mxu0 0.0
    %5543 = vmatpush1.xpose.msra.mxu0 0.0
    %5544 = vmatprep.subr.mxu0 0.0
    %5545 = vmatpush1.xpose.msra.mxu0 0.0
    %5546 = vmatprep.mubr.f32.mxu0 0.0
    %5547 = vmatmul.mubr.f32.gmra.mrb[0].mxu0 %v4629
    %v5548 = vpop.f32.mrb[0].mxu0
    %v5549 = vadd.f32 0.0, %v5548
    %v5550 = vpop.f32.mrb[0].mxu0
    %5551 = vdwg.mxu0
    %v5552 = vmul.f32 %v4629, %v4629
    %v5553 = vsel %vm4931, %v5552, 0.0
    %5554 = vadd.xlane.f32.xlu0 %v5553
    %v5555 = vpop.xlane.xlu0 %5554
    %5556 = vmatprep.subr.mxu0 0.0
    %5557 = vmatpush1.xpose.msra.mxu0 %v5552
    %5558 = vmatprep.subr.mxu0 0.0
    %5559 = vmatpush1.xpose.msra.mxu0 0.0
    %5560 = vmatprep.subr.mxu0 0.0
    %5561 = vmatpush1.xpose.msra.mxu0 0.0
    %5562 = vmatprep.subr.mxu0 0.0
    %5563 = vmatpush1.xpose.msra.mxu0 0.0
    %5564 = vmatprep.subr.mxu0 0.0
    %5565 = vmatpush1.xpose.msra.mxu0 0.0
    %5566 = vmatprep.subr.mxu0 0.0
    %5567 = vmatpush1.xpose.msra.mxu0 0.0
    %5568 = vmatprep.subr.mxu0 0.0
    %5569 = vmatpush1.xpose.msra.mxu0 0.0
    %5570 = vmatprep.subr.mxu0 0.0
    %5571 = vmatpush1.xpose.msra.mxu0 0.0
    %5572 = vmatprep.subr.mxu0 0.0
    %5573 = vmatpush1.xpose.msra.mxu0 0.0
    %5574 = vmatprep.subr.mxu0 0.0
    %5575 = vmatpush1.xpose.msra.mxu0 0.0
    %5576 = vmatprep.subr.mxu0 0.0
    %5577 = vmatpush1.xpose.msra.mxu0 0.0
    %5578 = vmatprep.subr.mxu0 0.0
    %5579 = vmatpush1.xpose.msra.mxu0 0.0
    %5580 = vmatprep.subr.mxu0 0.0
    %5581 = vmatpush1.xpose.msra.mxu0 0.0
    %5582 = vmatprep.subr.mxu0 0.0
    %5583 = vmatpush1.xpose.msra.mxu0 0.0
    %5584 = vmatprep.subr.mxu0 0.0
    %5585 = vmatpush1.xpose.msra.mxu0 0.0
    %5586 = vmatprep.subr.mxu0 0.0
    %5587 = vmatpush1.xpose.msra.mxu0 0.0
    %5588 = vmatprep.subr.mxu0 0.0
    %5589 = vmatpush1.xpose.msra.mxu0 0.0
    %5590 = vmatprep.subr.mxu0 0.0
    %5591 = vmatpush1.xpose.msra.mxu0 0.0
    %5592 = vmatprep.subr.mxu0 0.0
    %5593 = vmatpush1.xpose.msra.mxu0 0.0
    %5594 = vmatprep.subr.mxu0 0.0
    %5595 = vmatpush1.xpose.msra.mxu0 0.0
    %5596 = vmatprep.subr.mxu0 0.0
    %5597 = vmatpush1.xpose.msra.mxu0 0.0
    %5598 = vmatprep.subr.mxu0 0.0
    %5599 = vmatpush1.xpose.msra.mxu0 0.0
    %5600 = vmatprep.subr.mxu0 0.0
    %5601 = vmatpush1.xpose.msra.mxu0 0.0
    %5602 = vmatprep.subr.mxu0 0.0
    %5603 = vmatpush1.xpose.msra.mxu0 0.0
    %5604 = vmatprep.subr.mxu0 0.0
    %5605 = vmatpush1.xpose.msra.mxu0 0.0
    %5606 = vmatprep.subr.mxu0 0.0
    %5607 = vmatpush1.xpose.msra.mxu0 0.0
    %5608 = vmatprep.subr.mxu0 0.0
    %5609 = vmatpush1.xpose.msra.mxu0 0.0
    %5610 = vmatprep.subr.mxu0 0.0
    %5611 = vmatpush1.xpose.msra.mxu0 0.0
    %5612 = vmatprep.subr.mxu0 0.0
    %5613 = vmatpush1.xpose.msra.mxu0 0.0
    %5614 = vmatprep.subr.mxu0 0.0
    %5615 = vmatpush1.xpose.msra.mxu0 0.0
    %5616 = vmatprep.subr.mxu0 0.0
    %5617 = vmatpush1.xpose.msra.mxu0 0.0
    %5618 = vmatprep.subr.mxu0 0.0
    %5619 = vmatpush1.xpose.msra.mxu0 0.0
    %5620 = vmatprep.mubr.f32.mxu0 0.0
    %5621 = vmatmul.mubr.f32.gmra.mrb[0].mxu0 1.0
    %v5622 = vpop.f32.mrb[0].mxu0
    %v5623 = vadd.f32 0.0, %v5622
    %v5624 = vpop.f32.mrb[0].mxu0
    %5625 = vdwg.mxu0
    %v5626 = vlaneseq
    %v5627 = vshrl.u32 %v5626, 7
    %v5628 = vsub.s32 0, %v5627
    %v5629 = vrot.slane %v5623, %v5628
    %v5630 = vadd.f32 %v5555, %v5629
    %v5631 = vmul.f32 %v5549, 2.0
    %v5632 = vsub.f32 %v5630, %v5631
    %v5633 = vmax.f32 %v5632, 0.0
    %v5634 = vsel %vm5237, %v5633, 0.0
    %5635 = vadd.xlane.f32.xlu0 %v5634
    %v5636 = vpop.xlane.xlu0 %5635
    %v5637 = vrot.slane %v5636, 4
    %v5638 = vadd.f32 %v5636, %v5637
    %v5639 = vrot.slane %v5638, 2
    %v5640 = vadd.f32 %v5638, %v5639
    %v5641 = vrot.slane %v5640, 1
    %v5642 = vadd.f32 %v5640, %v5641
    %s5643 = vtos %v5642
    %v5644 = vstv %s5643
    %v5645 = vmul.f32 %v5644, 0.083333336
    %v5646 = vmax.f32 %v5645, 1e-12
    %v5647 = vmul.f32 %v5646, 0.25
    %v5648 = vmul.f32 %v5647, 16.0
    %v5649 = vrcp.pop %v5648
    %v5650 = vsub.f32 0.0, %v5633
    %v5651 = vmul.f32 %v5650, %v5649
    %v5652 = vmul.f32 %v5651, 1.442695
    %v5653 = vpow.pop %v5652
    %v5654 = vmul.f32 %v5653, %v5653
    %v5655 = vadd.f32 %v5653, %v5654
    %v5656 = vmul.f32 %v5654, %v5654
    %v5657 = vadd.f32 %v5655, %v5656
    %v5658 = vmul.f32 %v5656, %v5656
    %v5659 = vadd.f32 %v5657, %v5658
    %v5660 = vmul.f32 %v5658, %v5658
    %v5661 = vadd.f32 %v5659, %v5660
    %v5662 = vmul.f32 %v5661, %v4642
    %v5663 = vsel %vm5237, %v5662, 0.0
    %5664 = vadd.xlane.f32.xlu0 %v5663
    %v5665 = vpop.xlane.xlu0 %5664
    %v5666 = vmul.f32 %v5665, %v4638
    %v5667 = vsel %vm5271, %v5666, 0.0
    %5668 = vadd.xlane.f32.xlu0 %v5667
    %v5669 = vpop.xlane.xlu0 %5668
    %v5670 = vrot.slane %v5669, 4
    %v5671 = vadd.f32 %v5669, %v5670
    %v5672 = vrot.slane %v5671, 2
    %v5673 = vadd.f32 %v5671, %v5672
    %v5674 = vrot.slane %v5673, 1
    %v5675 = vadd.f32 %v5673, %v5674
    %s5676 = vtos %v5675
    %v5677 = vstv %s5676
    %v5678 = vmul.f32 %v5677, 0.25
    %v5679 = vadd.f32 %v5481, %v5678
    %5680 = vst [vmem:[#allocation2] sm:$0x1] %v5679
    // Predicated region
    $region54: #{dan_forward.1} parent=1 // pred_check
      _
    $region55: #{dan_forward.1} parent=1 // pred_check_branch
      %5682 = sbr.rel (0) target = $region57
    $region56: #{dan_forward.1} parent=1 // pred_region
      _
    $region57: #{dan_forward.1} parent=1 // pred_fallthru
      _
    // Predicated region
    $region58: #{dan_forward.1} parent=1 // pred_check
      _
    $region59: #{dan_forward.1} parent=1 // pred_check_branch
      %5684 = sbr.rel (0) target = $region61
    $region60: #{dan_forward.1} parent=1 // pred_region
      %s5686 = ssub.s32 16, 16
      %5687 = vsyncadd [#allocation3], %s5686
      %s5689 = sshll.u32 [#allocation2], 4
      %s5690 = int_to_ptr.vmem [resolvable:$true] %s5689
      %5692 = dma.vmem_to_hbm [thread:$0]  %s5690, 16, %s14, [#allocation3]
    $region61: #{dan_forward.1} parent=1 // pred_fallthru
      _
    // Predicated region
    $region62: #{dan_forward.1} parent=1 // pred_check
      _
    $region63: #{dan_forward.1} parent=1 // pred_check_branch
      %5694 = sbr.rel (0) target = $region65
    $region64: #{dan_forward.1} parent=1 // pred_region
      _
    $region65: #{dan_forward.1} parent=1 // pred_fallthru
      _
    // Predicated region
    $region66: #{dan_forward.1} parent=1 // pred_check
      _
    $region67: #{dan_forward.1} parent=1 // pred_check_branch
      %5696 = sbr.rel (0) target = $region69
    $region68: #{dan_forward.1} parent=1 // pred_region
      %5697 = dma.done [#allocation3], 16
    $region69: #{dan_forward.1} parent=1 // pred_fallthru
      _
    %5698 = vsyncpa [#allocation3], 1

</llo_original>
